<compile_context>
chip_gen: v6e
topology: v6e:2x2x1
jax: 0.10.0
libtpu: 0.0.40
codegen_flags: <defaults>
</compile_context>

<pallas_src>
import jax
import jax.numpy as jnp
from jax.experimental import pallas as pl
from jax.experimental.pallas import tpu as pltpu

GENDER_OUT = 2
AGE_OUT = 5
HIDDEN = 1000          # module-fixed hidden width
HIDDEN_PAD = 1024      # padded to a multiple of 128 lanes
OUT_PAD = 128          # final logits padded to one full lane tile
LANE = 128
SUBLANE = 8
BN_EPS = 1e-5
K_TILE_MAX = 2048      # cap on the layer-1 K tile so W1 never exceeds VMEM


def _round_up(n, m):
    return ((n + m - 1) // m) * m


def _k_tiling(input_size):
    """Padded feature dim KP and K tile TK (KP % TK == 0)."""
    kp = _round_up(input_size, LANE)
    if kp <= K_TILE_MAX:
        return kp, kp
    return _round_up(kp, K_TILE_MAX), K_TILE_MAX


# ---------------------------------------------------------------------------
# Kernel: grid = (2 heads, K tiles).  Layer 1 accumulates over the K axis in
# an f32 VMEM scratch; layers 2 & 3 run fused on the last K step.  Head axis
# is "parallel" (megacore), K axis "arbitrary".
# ---------------------------------------------------------------------------
def _classify_kernel(x_ref, w1_ref, w2_ref, w3_ref, c_ref, o_ref, acc_ref):
    k = pl.program_id(1)

    @pl.when(k == 0)
    def _():
        acc_ref[...] = jnp.zeros_like(acc_ref)

    # Layer-1 partial product for this K tile.  int8 weights are widened to
    # bf16 (exact) for the bf16 MXU; per-channel dequant scales are folded
    # into the epilogue constants.
    x = x_ref[...].astype(jnp.bfloat16)                 # (Bp, TK)
    w1 = w1_ref[...].astype(jnp.bfloat16)               # (TK, HIDDEN_PAD)
    acc_ref[...] += jnp.dot(x, w1, preferred_element_type=jnp.float32)

    @pl.when(k == pl.num_programs(1) - 1)
    def _():
        c = c_ref[...]                                  # (8, HIDDEN_PAD) f32
        s1, t1 = c[0:1, :], c[1:2, :]                   # BN1*dequant scale, shift(+bias)
        s2, t2 = c[2:3, :], c[3:4, :]                   # BN2*dequant scale, shift(+bias)
        s3, b3 = c[4:5, :OUT_PAD], c[5:6, :OUT_PAD]     # layer-3 dequant scale, f32 bias

        h = jnp.maximum(acc_ref[...] * s1 + t1, 0.0)    # Linear1 + BN1 + ReLU
        h = jnp.dot(h.astype(jnp.bfloat16),
                    w2_ref[...].astype(jnp.bfloat16),
                    preferred_element_type=jnp.float32)
        h = jnp.maximum(h * s2 + t2, 0.0)               # Linear2 + BN2 + ReLU
        o = jnp.dot(h.astype(jnp.bfloat16),
                    w3_ref[...].astype(jnp.bfloat16),
                    preferred_element_type=jnp.float32)
        o_ref[...] = o * s3 + b3                        # f32 dequant + f32 bias


def classify_forward(x, packed):
    """x: (B, input_size) f32; packed: dict of stacked, padded head params."""
    B, F = x.shape
    KP = packed["w1"].shape[1]                          # static padded feature dim
    TK = KP if KP <= K_TILE_MAX else K_TILE_MAX
    assert F <= KP and KP % TK == 0
    Bp = _round_up(B, SUBLANE)
    xp = jnp.pad(x, ((0, Bp - B), (0, KP - F)))         # static pad widths

    flops = 2 * 2 * Bp * (KP * HIDDEN_PAD
                          + HIDDEN_PAD * HIDDEN_PAD
                          + HIDDEN_PAD * OUT_PAD)
    bytes_accessed = (xp.size * 4
                      + packed["w1"].size + packed["w2"].size + packed["w3"].size
                      + packed["consts"].size * 4
                      + 2 * Bp * OUT_PAD * 4)

    out = pl.pallas_call(
        _classify_kernel,
        out_shape=jax.ShapeDtypeStruct((2, Bp, OUT_PAD), jnp.float32),
        grid_spec=pltpu.PrefetchScalarGridSpec(
            num_scalar_prefetch=0,
            grid=(2, KP // TK),                          # (head, K tile)
            in_specs=[
                pl.BlockSpec((Bp, TK), lambda h, k: (0, k)),                          # x
                pl.BlockSpec((None, TK, HIDDEN_PAD), lambda h, k: (h, k, 0)),         # W1 int8
                pl.BlockSpec((None, HIDDEN_PAD, HIDDEN_PAD), lambda h, k: (h, 0, 0)), # W2 int8
                pl.BlockSpec((None, HIDDEN_PAD, OUT_PAD), lambda h, k: (h, 0, 0)),    # W3 int8
                pl.BlockSpec((None, SUBLANE, HIDDEN_PAD), lambda h, k: (h, 0, 0)),    # consts f32
            ],
            out_specs=pl.BlockSpec((None, Bp, OUT_PAD), lambda h, k: (h, 0, 0)),
            scratch_shapes=[pltpu.VMEM((Bp, HIDDEN_PAD), jnp.float32)],
        ),
        compiler_params=pltpu.CompilerParams(
            dimension_semantics=("parallel", "arbitrary"),
            vmem_limit_bytes=32 * 1024 * 1024),
        cost_estimate=pl.CostEstimate(flops=flops, transcendentals=0,
                                      bytes_accessed=bytes_accessed),
    )(xp, packed["w1"], packed["w2"], packed["w3"], packed["consts"])

    return {"gender": out[0, :B, :GENDER_OUT],
            "age": out[1, :B, :AGE_OUT]}


# ---------------------------------------------------------------------------
# Parameter construction (deterministic, PyTorch-like init) and packing
# ---------------------------------------------------------------------------
def _linear_init(kw, kb, fan_in, fan_out):
    bound = 1.0 / float(fan_in) ** 0.5
    w = jax.random.uniform(kw, (fan_in, fan_out), jnp.float32, -bound, bound)
    b = jax.random.uniform(kb, (fan_out,), jnp.float32, -bound, bound)
    return w, b


def _bn_init(kg, kb, km, kv, n):
    gamma = 1.0 + 0.1 * jax.random.normal(kg, (n,), jnp.float32)
    beta = 0.1 * jax.random.normal(kb, (n,), jnp.float32)
    mean = 0.1 * jax.random.normal(km, (n,), jnp.float32)
    var = jnp.abs(jax.random.normal(kv, (n,), jnp.float32)) + 0.5
    return gamma, beta, mean, var


def init_head_params(key, input_size, out_dim):
    ks = jax.random.split(key, 14)
    w1, b1 = _linear_init(ks[0], ks[1], input_size, HIDDEN)
    g1, be1, m1, v1 = _bn_init(ks[2], ks[3], ks[4], ks[5], HIDDEN)
    w2, b2 = _linear_init(ks[6], ks[7], HIDDEN, HIDDEN)
    g2, be2, m2, v2 = _bn_init(ks[8], ks[9], ks[10], ks[11], HIDDEN)
    w3, b3 = _linear_init(ks[12], ks[13], HIDDEN, out_dim)
    return dict(w1=w1, b1=b1, g1=g1, be1=be1, m1=m1, v1=v1,
                w2=w2, b2=b2, g2=g2, be2=be2, m2=m2, v2=v2,
                w3=w3, b3=b3)


def _fold_bn(gamma, beta, mean, var):
    s = gamma / jnp.sqrt(var + BN_EPS)
    return s, beta - mean * s


def _pad2(a, rows, cols):
    return jnp.pad(a, ((0, rows - a.shape[0]), (0, cols - a.shape[1])))


def _quantize_per_col(w):
    """Symmetric per-output-channel int8 weight quantization."""
    amax = jnp.max(jnp.abs(w), axis=0)
    scale = jnp.where(amax > 0.0, amax / 127.0, 1.0)
    q = jnp.clip(jnp.round(w / scale), -127.0, 127.0).astype(jnp.int8)
    return q, scale


def _pack_head(p, kp):
    """Fold BN(+linear bias), quantize weights to int8, fold dequant scales."""
    s1, t1 = _fold_bn(p["g1"], p["be1"], p["m1"], p["v1"])
    s2, t2 = _fold_bn(p["g2"], p["be2"], p["m2"], p["v2"])
    t1 = p["b1"] * s1 + t1                # fold linear bias into BN shift
    t2 = p["b2"] * s2 + t2

    q1, sc1 = _quantize_per_col(p["w1"])
    q2, sc2 = _quantize_per_col(p["w2"])
    q3, sc3 = _quantize_per_col(p["w3"])

    w1 = _pad2(q1, kp, HIDDEN_PAD)
    w2 = _pad2(q2, HIDDEN_PAD, HIDDEN_PAD)
    w3 = _pad2(q3, HIDDEN_PAD, OUT_PAD)

    out_dim = p["w3"].shape[1]
    consts = jnp.zeros((SUBLANE, HIDDEN_PAD), jnp.float32)
    consts = consts.at[0, :HIDDEN].set(s1 * sc1)      # BN1 scale * dequant scale
    consts = consts.at[1, :HIDDEN].set(t1)
    consts = consts.at[2, :HIDDEN].set(s2 * sc2)      # BN2 scale * dequant scale
    consts = consts.at[3, :HIDDEN].set(t2)
    consts = consts.at[4, :out_dim].set(sc3)          # layer-3 dequant scale
    consts = consts.at[5, :out_dim].set(p["b3"])      # layer-3 bias in f32
    return w1, w2, w3, consts


def pack_classify_params(gender_params, age_params, input_size):
    kp, _ = _k_tiling(input_size)
    g = _pack_head(gender_params, kp)
    a = _pack_head(age_params, kp)
    return dict(w1=jnp.stack([g[0], a[0]]),
                w2=jnp.stack([g[1], a[1]]),
                w3=jnp.stack([g[2], a[2]]),
                consts=jnp.stack([g[3], a[3]]))


# ---------------------------------------------------------------------------
# Pure-JAX (f32, eval-mode) reference for validation
# ---------------------------------------------------------------------------
def _ref_head(x, p):
    def bn(y, g, be, m, v):
        return g * (y - m) / jnp.sqrt(v + BN_EPS) + be
    h = jnp.maximum(bn(x @ p["w1"] + p["b1"], p["g1"], p["be1"], p["m1"], p["v1"]), 0.0)
    h = jnp.maximum(bn(h @ p["w2"] + p["b2"], p["g2"], p["be2"], p["m2"], p["v2"]), 0.0)
    return h @ p["w3"] + p["b3"]


if __name__ == "__main__":
    INPUT_SIZE = 256   # module's input_size is configurable; keep the demo small
    BATCH = 8

    root = jax.random.PRNGKey(0)
    k_x, k_g, k_a = jax.random.split(root, 3)
    x = jax.random.normal(k_x, (BATCH, INPUT_SIZE), jnp.float32)

    gender_params = init_head_params(k_g, INPUT_SIZE, GENDER_OUT)
    age_params = init_head_params(k_a, INPUT_SIZE, AGE_OUT)
    packed = pack_classify_params(gender_params, age_params, INPUT_SIZE)

    out = jax.jit(classify_forward)(x, packed)
    out = jax.block_until_ready(out)

    assert out["gender"].shape == (BATCH, GENDER_OUT)
    assert out["age"].shape == (BATCH, AGE_OUT)

    ref = {"gender": _ref_head(x, gender_params),
           "age": _ref_head(x, age_params)}
    # int8 per-channel weight quant + bf16 activations (f32 accumulation, f32
    # epilogue/bias) -> tolerance loosened vs a pure-f32 reference.
    for name in ("gender", "age"):
        assert jnp.allclose(out[name], ref[name], rtol=2e-2, atol=5e-2), name

    print("KERNEL_OK")
</pallas_src>

<mosaic_0001>
module attributes {stable_mosaic.version = 11 : i64} {
  func.func @_classify_kernel(%arg0: i32, %arg1: i32, %arg2: memref<8x256xf32, #tpu.memory_space<vmem>>, %arg3: memref<1x256x1024xi8, #tpu.memory_space<vmem>>, %arg4: memref<1x1024x1024xi8, #tpu.memory_space<vmem>>, %arg5: memref<1x1024x128xi8, #tpu.memory_space<vmem>>, %arg6: memref<1x8x1024xf32, #tpu.memory_space<vmem>>, %arg7: memref<1x8x128xf32, #tpu.memory_space<vmem>>, %arg8: memref<8x1024xf32, #tpu.memory_space<vmem>>) attributes {dimension_semantics = [#tpu.dimension_semantics<parallel>, #tpu.dimension_semantics<arbitrary>], iteration_bounds = array<i64: 2, 1>, scalar_prefetch = 0 : i64, scratch_operands = 1 : i64, tpu.core_type = #tpu.core_type<tc>, window_params = [{transform_indices = @transform_0, window_bounds = array<i64: 8, 256>}, {transform_indices = @transform_1, window_bounds = array<i64: 1, 256, 1024>}, {transform_indices = @transform_2, window_bounds = array<i64: 1, 1024, 1024>}, {transform_indices = @transform_3, window_bounds = array<i64: 1, 1024, 128>}, {transform_indices = @transform_4, window_bounds = array<i64: 1, 8, 1024>}, {transform_indices = @transform_5, window_bounds = array<i64: 1, 8, 128>}]} {
    %c0_i32 = arith.constant 0 : i32
    %0 = arith.cmpi eq, %arg1, %c0_i32 : i32
    %1 = arith.extui %0 : i1 to i32
    %c0_i32_0 = arith.constant 0 : i32
    %2 = arith.cmpi ne, %1, %c0_i32_0 : i32
    scf.if %2 {
      %cst_11 = arith.constant 0.000000e+00 : f32
      %15 = vector.broadcast %cst_11 : f32 to vector<8x1024xf32>
      %c0_12 = arith.constant 0 : index
      %c0_13 = arith.constant 0 : index
      %16 = vector.load %arg8[%c0_12, %c0_13] : memref<8x1024xf32, #tpu.memory_space<vmem>>, vector<8x1024xf32>
      tpu.vector_store %arg8[%c0_12, %c0_13], %15 {strides = array<i32>} : memref<8x1024xf32, #tpu.memory_space<vmem>>, vector<8x1024xf32>,
    } else {
    }
    %c0 = arith.constant 0 : index
    %c0_1 = arith.constant 0 : index
    %3 = vector.load %arg2[%c0, %c0_1] : memref<8x256xf32, #tpu.memory_space<vmem>>, vector<8x256xf32>
    %4 = arith.truncf %3 : vector<8x256xf32> to vector<8x256xbf16>
    %c0_2 = arith.constant 0 : index
    %c0_3 = arith.constant 0 : index
    %c0_4 = arith.constant 0 : index
    %5 = vector.load %arg3[%c0_2, %c0_3, %c0_4] : memref<1x256x1024xi8, #tpu.memory_space<vmem>>, vector<1x256x1024xi8>
    %6 = vector.shape_cast %5 : vector<1x256x1024xi8> to vector<256x1024xi8>
    %7 = arith.sitofp %6 : vector<256x1024xi8> to vector<256x1024xbf16>
    %c0_5 = arith.constant 0 : index
    %c0_6 = arith.constant 0 : index
    %8 = vector.load %arg8[%c0_5, %c0_6] : memref<8x1024xf32, #tpu.memory_space<vmem>>, vector<8x1024xf32>
    %cst = arith.constant dense<0.000000e+00> : vector<8x1024xf32>
    %9 = tpu.matmul %4, %7, %cst {dimension_numbers = #tpu.dot_dimension_numbers<[1], [0], [0], [1], [0, 0, 1, 1], [], []>} : vector<8x256xbf16>, vector<256x1024xbf16>, vector<8x1024xf32> -> vector<8x1024xf32>
    %10 = arith.addf %8, %9 : vector<8x1024xf32>
    %c0_7 = arith.constant 0 : index
    %c0_8 = arith.constant 0 : index
    %11 = vector.load %arg8[%c0_7, %c0_8] : memref<8x1024xf32, #tpu.memory_space<vmem>>, vector<8x1024xf32>
    tpu.vector_store %arg8[%c0_7, %c0_8], %10 {strides = array<i32>} : memref<8x1024xf32, #tpu.memory_space<vmem>>, vector<8x1024xf32>,
    %c0_i32_9 = arith.constant 0 : i32
    %12 = arith.cmpi eq, %arg1, %c0_i32_9 : i32
    %13 = arith.extui %12 : i1 to i32
    %c0_i32_10 = arith.constant 0 : i32
    %14 = arith.cmpi ne, %13, %c0_i32_10 : i32
    scf.if %14 {
      %c0_11 = arith.constant 0 : index
      %c0_12 = arith.constant 0 : index
      %c0_13 = arith.constant 0 : index
      %15 = vector.load %arg6[%c0_11, %c0_12, %c0_13] : memref<1x8x1024xf32, #tpu.memory_space<vmem>>, vector<1x8x1024xf32>
      %16 = vector.shape_cast %15 : vector<1x8x1024xf32> to vector<8x1024xf32>
      %17 = vector.extract_strided_slice %16 {offsets = [0, 0], sizes = [1, 1024], strides = [1, 1]} : vector<8x1024xf32> to vector<1x1024xf32>
      %18 = vector.extract_strided_slice %16 {offsets = [1, 0], sizes = [1, 1024], strides = [1, 1]} : vector<8x1024xf32> to vector<1x1024xf32>
      %19 = vector.extract_strided_slice %16 {offsets = [2, 0], sizes = [1, 1024], strides = [1, 1]} : vector<8x1024xf32> to vector<1x1024xf32>
      %20 = vector.extract_strided_slice %16 {offsets = [3, 0], sizes = [1, 1024], strides = [1, 1]} : vector<8x1024xf32> to vector<1x1024xf32>
      %21 = vector.extract_strided_slice %16 {offsets = [4, 0], sizes = [1, 128], strides = [1, 1]} : vector<8x1024xf32> to vector<1x128xf32>
      %22 = vector.extract_strided_slice %16 {offsets = [5, 0], sizes = [1, 128], strides = [1, 1]} : vector<8x1024xf32> to vector<1x128xf32>
      %c0_14 = arith.constant 0 : index
      %c0_15 = arith.constant 0 : index
      %23 = vector.load %arg8[%c0_14, %c0_15] : memref<8x1024xf32, #tpu.memory_space<vmem>>, vector<8x1024xf32>
      %24 = vector.broadcast %17 : vector<1x1024xf32> to vector<8x1024xf32>
      %25 = arith.mulf %23, %24 : vector<8x1024xf32>
      %26 = vector.broadcast %18 : vector<1x1024xf32> to vector<8x1024xf32>
      %27 = arith.addf %25, %26 : vector<8x1024xf32>
      %cst_16 = arith.constant 0.000000e+00 : f32
      %28 = vector.broadcast %cst_16 : f32 to vector<8x1024xf32>
      %29 = arith.maximumf %27, %28 : vector<8x1024xf32>
      %30 = arith.truncf %29 : vector<8x1024xf32> to vector<8x1024xbf16>
      %c0_17 = arith.constant 0 : index
      %c0_18 = arith.constant 0 : index
      %c0_19 = arith.constant 0 : index
      %31 = vector.load %arg4[%c0_17, %c0_18, %c0_19] : memref<1x1024x1024xi8, #tpu.memory_space<vmem>>, vector<1x1024x1024xi8>
      %32 = vector.shape_cast %31 : vector<1x1024x1024xi8> to vector<1024x1024xi8>
      %33 = arith.sitofp %32 : vector<1024x1024xi8> to vector<1024x1024xbf16>
      %cst_20 = arith.constant dense<0.000000e+00> : vector<8x1024xf32>
      %34 = tpu.matmul %30, %33, %cst_20 {dimension_numbers = #tpu.dot_dimension_numbers<[1], [0], [0], [1], [0, 0, 1, 1], [], []>} : vector<8x1024xbf16>, vector<1024x1024xbf16>, vector<8x1024xf32> -> vector<8x1024xf32>
      %35 = vector.broadcast %19 : vector<1x1024xf32> to vector<8x1024xf32>
      %36 = arith.mulf %34, %35 : vector<8x1024xf32>
      %37 = vector.broadcast %20 : vector<1x1024xf32> to vector<8x1024xf32>
      %38 = arith.addf %36, %37 : vector<8x1024xf32>
      %cst_21 = arith.constant 0.000000e+00 : f32
      %39 = vector.broadcast %cst_21 : f32 to vector<8x1024xf32>
      %40 = arith.maximumf %38, %39 : vector<8x1024xf32>
      %41 = arith.truncf %40 : vector<8x1024xf32> to vector<8x1024xbf16>
      %c0_22 = arith.constant 0 : index
      %c0_23 = arith.constant 0 : index
      %c0_24 = arith.constant 0 : index
      %42 = vector.load %arg5[%c0_22, %c0_23, %c0_24] : memref<1x1024x128xi8, #tpu.memory_space<vmem>>, vector<1x1024x128xi8>
      %43 = vector.shape_cast %42 : vector<1x1024x128xi8> to vector<1024x128xi8>
      %44 = arith.sitofp %43 : vector<1024x128xi8> to vector<1024x128xbf16>
      %cst_25 = arith.constant dense<0.000000e+00> : vector<8x128xf32>
      %45 = tpu.matmul %41, %44, %cst_25 {dimension_numbers = #tpu.dot_dimension_numbers<[1], [0], [0], [1], [0, 0, 1, 1], [], []>} : vector<8x1024xbf16>, vector<1024x128xbf16>, vector<8x128xf32> -> vector<8x128xf32>
      %46 = vector.broadcast %21 : vector<1x128xf32> to vector<8x128xf32>
      %47 = arith.mulf %45, %46 : vector<8x128xf32>
      %48 = vector.broadcast %22 : vector<1x128xf32> to vector<8x128xf32>
      %49 = arith.addf %47, %48 : vector<8x128xf32>
      %c0_26 = arith.constant 0 : index
      %c0_27 = arith.constant 0 : index
      %c0_28 = arith.constant 0 : index
      %50 = vector.load %arg7[%c0_26, %c0_27, %c0_28] : memref<1x8x128xf32, #tpu.memory_space<vmem>>, vector<1x8x128xf32>
      %51 = vector.shape_cast %50 : vector<1x8x128xf32> to vector<8x128xf32>
      %52 = vector.shape_cast %49 : vector<8x128xf32> to vector<1x8x128xf32>
      tpu.vector_store %arg7[%c0_26, %c0_27, %c0_28], %52 {strides = array<i32>} : memref<1x8x128xf32, #tpu.memory_space<vmem>>, vector<1x8x128xf32>,
    } else {
    }
    return
  }
  func.func @transform_0(%arg0: i32, %arg1: i32) -> (i32, i32) {
    %c0_i32 = arith.constant 0 : i32
    %c0_i32_0 = arith.constant 0 : i32
    return %c0_i32, %arg1 : i32, i32
  }
  func.func @transform_1(%arg0: i32, %arg1: i32) -> (i32, i32, i32) {
    %c0_i32 = arith.constant 0 : i32
    %c0_i32_0 = arith.constant 0 : i32
    return %arg0, %arg1, %c0_i32 : i32, i32, i32
  }
  func.func @transform_2(%arg0: i32, %arg1: i32) -> (i32, i32, i32) {
    %c0_i32 = arith.constant 0 : i32
    %c0_i32_0 = arith.constant 0 : i32
    %c0_i32_1 = arith.constant 0 : i32
    return %arg0, %c0_i32, %c0_i32_0 : i32, i32, i32
  }
  func.func @transform_3(%arg0: i32, %arg1: i32) -> (i32, i32, i32) {
    %c0_i32 = arith.constant 0 : i32
    %c0_i32_0 = arith.constant 0 : i32
    %c0_i32_1 = arith.constant 0 : i32
    return %arg0, %c0_i32, %c0_i32_0 : i32, i32, i32
  }
  func.func @transform_4(%arg0: i32, %arg1: i32) -> (i32, i32, i32) {
    %c0_i32 = arith.constant 0 : i32
    %c0_i32_0 = arith.constant 0 : i32
    %c0_i32_1 = arith.constant 0 : i32
    return %arg0, %c0_i32, %c0_i32_0 : i32, i32, i32
  }
  func.func @transform_5(%arg0: i32, %arg1: i32) -> (i32, i32, i32) {
    %c0_i32 = arith.constant 0 : i32
    %c0_i32_0 = arith.constant 0 : i32
    %c0_i32_1 = arith.constant 0 : i32
    return %arg0, %c0_i32, %c0_i32_0 : i32, i32, i32
  }
}

</mosaic_0001>

<llo_original>
// kernel: classify_forward.1
$region0: #{classify_forward.1}
  #allocation0 [shape = 'u32[]', space=smem, size = 0x4, offset = 0x4, fixed_abs, tag = 'smem constant byte address 0x4 - core index']
  #allocation1 [shape = 'u32[144,128]{1,0:T(1,128)}', space=vmem, size = 0x12000, scoped, tag = 'internal scratch']
  #allocation2 [shape = 'f32[8,1024]{1,0:T(8,128)}', space=vmem, size = 0x8000, scoped, tag = 'scratch operand']
  %s0 = inlined_call_operand.hbm [shape: f32[8,256], index: 0, kind: input, shape index: {}]
  %s1 = inlined_call_operand.hbm [shape: s8[2,256,1024], index: 1, kind: input, shape index: {}]
  %s2 = inlined_call_operand.hbm [shape: s8[2,1024,1024], index: 2, kind: input, shape index: {}]
  %s3 = inlined_call_operand.hbm [shape: s8[2,1024,128], index: 3, kind: input, shape index: {}]
  %s4 = inlined_call_operand.hbm [shape: f32[2,8,1024], index: 4, kind: input, shape index: {}]
  %s5 = inlined_call_operand.vmem [shape: f32[2,8,128], index: 5, kind: output, shape index: {}]
  %s6 = sld [smem:[#allocation0]]
  $region81: #{classify_forward.1} parent=0
    _
  %s8 = ssub.s32 1, %s6
  %s9 = scalar_select 0, %s8, %s6
  $region1: #{classify_forward.1} parent=0
    #allocation3 [shape = 'u8[8192]{0}', space=vmem, size = 0x2000, scoped, tag = 'input window, operand 0, single buffered']
    #allocation4 [shape = 's32[2]{0}', space=sflag, size = 0x8, scoped, tag = 'scoped memory for classify_forward.1']
    #allocation5 [shape = 'u8[524288]{0}', space=vmem, size = 0x80000, scoped, tag = 'input window, operand 1']
    #allocation6 [shape = 's32[2]{0}', space=sflag, size = 0x8, scoped, tag = 'scoped memory for classify_forward.1']
    #allocation7 [shape = 'u8[2097152]{0}', space=vmem, size = 0x200000, scoped, tag = 'input window, operand 2']
    #allocation8 [shape = 'u8[262144]{0}', space=vmem, size = 0x40000, scoped, tag = 'input window, operand 3']
    #allocation9 [shape = 's32[2]{0}', space=sflag, size = 0x8, scoped, tag = 'scoped memory for classify_forward.1']
    #allocation10 [shape = 'u8[65536]{0}', space=vmem, size = 0x10000, scoped, tag = 'input window, operand 4']
    %10 = vsyncpa [#allocation4], 0
    %11 = vsyncpa [#allocation6], 0
    %s12 = scalar_lea.sflag [#allocation6], 1
    %13 = vsyncpa %s12, 0
    %14 = vsyncpa [#allocation9], 0
    %s15 = scalar_lea.sflag [#allocation9], 1
    %16 = vsyncpa %s15, 0
    loop: start=0, step=1, limit=4
    $region2: #{classify_forward.1} parent=1 // loop_pre_header
      _
    $region3: #{classify_forward.1} parent=1 // loop_header
      %s18 = sphi 0, %s22
      %p19 = scmp.ge.s32.totalorder %s18, 4
      %s25 = sphi 0, %s37
      %s26 = sphi 0, %s33
      %s27 = sphi 0, %s25
      %s28 = sphi 0, %s26
      %s29 = sphi 0, %s27
      %s30 = sphi 0, %s28
      %s40 = sphi 0, %s42
      %s43 = sphi 0, %s40
      %s44 = sphi 0, %s43
      %s60 = sphi 0, %s44
      %s68 = sphi 0, %s70
      %s71 = sphi 0, %s68
      %s72 = sphi 0, %s71
      %s88 = sphi 0, %s72
      %s94 = sphi 0, %s96
      %s97 = sphi 0, %s94
      %s98 = sphi 0, %s97
      %s114 = sphi 0, %s98
      %s120 = sphi 0, %s122
      %s123 = sphi 0, %s120
      %s124 = sphi 0, %s123
      %s140 = sphi 0, %s124
      %s146 = sphi 0, %s148
      %s149 = sphi 0, %s146
      %s150 = sphi 0, %s149
      %s166 = sphi 0, %s150
      %s172 = sphi 0, %s174
      %s175 = sphi 0, %s172
      %s176 = sphi 0, %s175
      %s192 = sphi 0, %s176
    $region4: #{classify_forward.1} parent=1 // loop_header_branch
      %21 = sbr.rel (%p19) target = $region8
    $region5: #{classify_forward.1} parent=1 // loop_body
      %s23 = ssub.s32 %s18, 1
      %s24 = ssub.s32 %s18, 2
      %s31 = sadd.s32 1, %s26
      %p32 = scmp.ge.s32.totalorder %s31, 1
      %s33 = scalar_select %p32, 0, %s31
      %s34 = sadd.s32 1, %s25
      %s35 = scalar_select %p32, %s34, %s25
      %p36 = scmp.ge.s32.totalorder %s35, 2
      %s37 = scalar_select %p36, 0, %s35
      %s38 = ssub.s32 %s26, %s33
      %p39 = scmp.eq.s32.totalorder %s38, 0
      %s41 = sadd.s32 %s40, 1
      %s42 = scalar_select %p39, %s40, %s41
      %p45 = pneg %p39
      %p46 = scmp.eq.s32.totalorder %s18, 1
      %p47 = por %p45, %p46
      %p48 = scmp.ne.s32.totalorder %s40, %s43
      %p49 = scmp.eq.s32.totalorder %s18, 0
      %p50 = por %p48, %p49
      %p51 = scmp.ne.s32.totalorder %s40, %s43
      %p52 = scmp.eq.s32.totalorder %s23, 1
      %p53 = por %p51, %p52
      %p54 = scmp.ne.s32.totalorder %s43, %s44
      %p55 = scmp.eq.s32.totalorder %s23, 0
      %p56 = por %p54, %p55
      %p57 = scmp.ne.s32.totalorder %s43, %s44
      %p58 = scmp.eq.s32.totalorder %s24, 1
      %p59 = por %p57, %p58
      %p61 = scmp.ne.s32.totalorder %s44, %s60
      %p62 = scmp.eq.s32.totalorder %s24, 0
      %p63 = por %p61, %p62
      %s64 = ssub.s32 %s25, %s37
      %s65 = ssub.s32 %s26, %s33
      %s66 = sor.u32 %s64, %s65
      %p67 = scmp.eq.s32.totalorder %s66, 0
      %s69 = sadd.s32 %s68, 1
      %s70 = scalar_select %p67, %s68, %s69
      %p73 = pneg %p67
      %p74 = scmp.eq.s32.totalorder %s18, 1
      %p75 = por %p73, %p74
      %p76 = scmp.ne.s32.totalorder %s68, %s71
      %p77 = scmp.eq.s32.totalorder %s18, 0
      %p78 = por %p76, %p77
      %p79 = scmp.ne.s32.totalorder %s68, %s71
      %p80 = scmp.eq.s32.totalorder %s23, 1
      %p81 = por %p79, %p80
      %p82 = scmp.ne.s32.totalorder %s71, %s72
      %p83 = scmp.eq.s32.totalorder %s23, 0
      %p84 = por %p82, %p83
      %p85 = scmp.ne.s32.totalorder %s71, %s72
      %p86 = scmp.eq.s32.totalorder %s24, 1
      %p87 = por %p85, %p86
      %p89 = scmp.ne.s32.totalorder %s72, %s88
      %p90 = scmp.eq.s32.totalorder %s24, 0
      %p91 = por %p89, %p90
      %s92 = ssub.s32 %s25, %s37
      %p93 = scmp.eq.s32.totalorder %s92, 0
      %s95 = sadd.s32 %s94, 1
      %s96 = scalar_select %p93, %s94, %s95
      %p99 = pneg %p93
      %p100 = scmp.eq.s32.totalorder %s18, 1
      %p101 = por %p99, %p100
      %p102 = scmp.ne.s32.totalorder %s94, %s97
      %p103 = scmp.eq.s32.totalorder %s18, 0
      %p104 = por %p102, %p103
      %p105 = scmp.ne.s32.totalorder %s94, %s97
      %p106 = scmp.eq.s32.totalorder %s23, 1
      %p107 = por %p105, %p106
      %p108 = scmp.ne.s32.totalorder %s97, %s98
      %p109 = scmp.eq.s32.totalorder %s23, 0
      %p110 = por %p108, %p109
      %p111 = scmp.ne.s32.totalorder %s97, %s98
      %p112 = scmp.eq.s32.totalorder %s24, 1
      %p113 = por %p111, %p112
      %p115 = scmp.ne.s32.totalorder %s98, %s114
      %p116 = scmp.eq.s32.totalorder %s24, 0
      %p117 = por %p115, %p116
      %s118 = ssub.s32 %s25, %s37
      %p119 = scmp.eq.s32.totalorder %s118, 0
      %s121 = sadd.s32 %s120, 1
      %s122 = scalar_select %p119, %s120, %s121
      %p125 = pneg %p119
      %p126 = scmp.eq.s32.totalorder %s18, 1
      %p127 = por %p125, %p126
      %p128 = scmp.ne.s32.totalorder %s120, %s123
      %p129 = scmp.eq.s32.totalorder %s18, 0
      %p130 = por %p128, %p129
      %p131 = scmp.ne.s32.totalorder %s120, %s123
      %p132 = scmp.eq.s32.totalorder %s23, 1
      %p133 = por %p131, %p132
      %p134 = scmp.ne.s32.totalorder %s123, %s124
      %p135 = scmp.eq.s32.totalorder %s23, 0
      %p136 = por %p134, %p135
      %p137 = scmp.ne.s32.totalorder %s123, %s124
      %p138 = scmp.eq.s32.totalorder %s24, 1
      %p139 = por %p137, %p138
      %p141 = scmp.ne.s32.totalorder %s124, %s140
      %p142 = scmp.eq.s32.totalorder %s24, 0
      %p143 = por %p141, %p142
      %s144 = ssub.s32 %s25, %s37
      %p145 = scmp.eq.s32.totalorder %s144, 0
      %s147 = sadd.s32 %s146, 1
      %s148 = scalar_select %p145, %s146, %s147
      %p151 = pneg %p145
      %p152 = scmp.eq.s32.totalorder %s18, 1
      %p153 = por %p151, %p152
      %p154 = scmp.ne.s32.totalorder %s146, %s149
      %p155 = scmp.eq.s32.totalorder %s18, 0
      %p156 = por %p154, %p155
      %p157 = scmp.ne.s32.totalorder %s146, %s149
      %p158 = scmp.eq.s32.totalorder %s23, 1
      %p159 = por %p157, %p158
      %p160 = scmp.ne.s32.totalorder %s149, %s150
      %p161 = scmp.eq.s32.totalorder %s23, 0
      %p162 = por %p160, %p161
      %p163 = scmp.ne.s32.totalorder %s149, %s150
      %p164 = scmp.eq.s32.totalorder %s24, 1
      %p165 = por %p163, %p164
      %p167 = scmp.ne.s32.totalorder %s150, %s166
      %p168 = scmp.eq.s32.totalorder %s24, 0
      %p169 = por %p167, %p168
      %s170 = ssub.s32 %s25, %s37
      %p171 = scmp.eq.s32.totalorder %s170, 0
      %s173 = sadd.s32 %s172, 1
      %s174 = scalar_select %p171, %s172, %s173
      %p177 = pneg %p171
      %p178 = scmp.eq.s32.totalorder %s18, 1
      %p179 = por %p177, %p178
      %p180 = scmp.ne.s32.totalorder %s172, %s175
      %p181 = scmp.eq.s32.totalorder %s18, 0
      %p182 = por %p180, %p181
      %p183 = scmp.ne.s32.totalorder %s172, %s175
      %p184 = scmp.eq.s32.totalorder %s23, 1
      %p185 = por %p183, %p184
      %p186 = scmp.ne.s32.totalorder %s175, %s176
      %p187 = scmp.eq.s32.totalorder %s23, 0
      %p188 = por %p186, %p187
      %p189 = scmp.ne.s32.totalorder %s175, %s176
      %p190 = scmp.eq.s32.totalorder %s24, 1
      %p191 = por %p189, %p190
      %p193 = scmp.ne.s32.totalorder %s176, %s192
      %p194 = scmp.eq.s32.totalorder %s24, 0
      %p195 = por %p193, %p194
      %p196 = scmp.le.s32.totalorder 1, %s18
      %p197 = scmp.lt.s32.totalorder %s18, 3
      %p198 = pnand %p196, %p197
      %p199 = pneg %p198
      // Predicated region
      $region9: #{classify_forward.1} parent=5 // pred_check
        _
      $region10: #{classify_forward.1} parent=5 // pred_check_branch
        %201 = sbr.rel (%p198) target = $region12
      $region11: #{classify_forward.1} parent=5 // pred_region
        %s202 = ssub.s32 %s18, 1
        // Predicated region
        $region13: #{classify_forward.1} parent=11 // pred_check
          %p203 = pneg %p56
        $region14: #{classify_forward.1} parent=11 // pred_check_branch
          %205 = sbr.rel (%p203) target = $region16
        $region15: #{classify_forward.1} parent=11 // pred_region
          %s206 = smul.u32 2, %s28
          %s208 = ssub.s32 256, 256
          %209 = vsyncadd [#allocation4], %s208
          %s210 = smul.addr %s206, 128
          %s211 = scalar_lea.hbm %s0, %s210
          %s213 = sshll.u32 [#allocation3], 4
          %s214 = int_to_ptr.vmem [resolvable:$true] %s213
          %216 = dma.hbm_to_vmem [thread:$0]  %s211, 256, %s214, [#allocation4]
        $region16: #{classify_forward.1} parent=11 // pred_fallthru
          _
      $region12: #{classify_forward.1} parent=5 // pred_fallthru
        _
      %p217 = scmp.lt.s32.totalorder %s18, 2
      // Predicated region
      $region17: #{classify_forward.1} parent=5 // pred_check
        %p218 = pneg %p217
      $region18: #{classify_forward.1} parent=5 // pred_check_branch
        %220 = sbr.rel (%p218) target = $region20
      $region19: #{classify_forward.1} parent=5 // pred_region
        // Predicated region
        $region21: #{classify_forward.1} parent=19 // pred_check
          %p221 = pneg %p78
        $region22: #{classify_forward.1} parent=19 // pred_check_branch
          %223 = sbr.rel (%p221) target = $region24
        $region23: #{classify_forward.1} parent=19 // pred_region
          %s224 = sand.u32 %s18, 1
          %s225 = scalar_lea.sflag [#allocation6], %s224
          %s226 = sand.u32 %s68, 1
          %s227 = smul.addr %s226, 512
          %s228 = scalar_lea.vmem [#allocation5], %s227
          %s229 = smul.u32 8, %s26
          %s231 = ssub.s32 8192, 8192
          %232 = vsyncadd %s225, %s231
          %s233 = smul.addr %s229, 8
          %s234 = smul.addr %s25, 64
          %s235 = sadd.s32 %s233, %s234
          %s236 = smul.addr %s235, 128
          %s237 = scalar_lea.hbm %s1, %s236
          %s238 = sshll.u32 %s228, 4
          %s239 = int_to_ptr.vmem [resolvable:$true] %s238
          %244 = dma.hbm_to_vmem [thread:$0]  %s237, 8192, %s239, %s225, 1024, 1024, 64
        $region24: #{classify_forward.1} parent=19 // pred_fallthru
          _
        // Predicated region
        $region25: #{classify_forward.1} parent=19 // pred_check
          %p245 = pneg %p104
        $region26: #{classify_forward.1} parent=19 // pred_check_branch
          %247 = sbr.rel (%p245) target = $region28
        $region27: #{classify_forward.1} parent=19 // pred_region
          %s248 = sand.u32 %s18, 1
          %s249 = scalar_lea.sflag [#allocation6], %s248
          %s250 = sand.u32 %s94, 1
          %s251 = smul.addr %s250, 2048
          %s252 = scalar_lea.vmem [#allocation7], %s251
          %s254 = ssub.s32 32768, 32768
          %255 = vsyncadd %s249, %s254
          %s256 = smul.addr %s25, 256
          %s257 = smul.addr %s256, 128
          %s258 = scalar_lea.hbm %s2, %s257
          %s259 = sshll.u32 %s252, 4
          %s260 = int_to_ptr.vmem [resolvable:$true] %s259
          %265 = dma.hbm_to_vmem [thread:$0]  %s258, 32768, %s260, %s249, 1024, 1024, 64
        $region28: #{classify_forward.1} parent=19 // pred_fallthru
          _
        // Predicated region
        $region29: #{classify_forward.1} parent=19 // pred_check
          %p266 = pneg %p130
        $region30: #{classify_forward.1} parent=19 // pred_check_branch
          %268 = sbr.rel (%p266) target = $region32
        $region31: #{classify_forward.1} parent=19 // pred_region
          %s269 = sand.u32 %s18, 1
          %s270 = scalar_lea.sflag [#allocation9], %s269
          %s271 = sand.u32 %s120, 1
          %s272 = smul.addr %s271, 256
          %s273 = scalar_lea.vmem [#allocation8], %s272
          %s275 = ssub.s32 4096, 4096
          %276 = vsyncadd %s270, %s275
          %s277 = smul.addr %s25, 32
          %s278 = smul.addr %s277, 128
          %s279 = scalar_lea.hbm %s3, %s278
          %s280 = sshll.u32 %s273, 4
          %s281 = int_to_ptr.vmem [resolvable:$true] %s280
          %286 = dma.hbm_to_vmem [thread:$0]  %s279, 4096, %s281, %s270, 128, 128, 8
        $region32: #{classify_forward.1} parent=19 // pred_fallthru
          _
        // Predicated region
        $region33: #{classify_forward.1} parent=19 // pred_check
          %p287 = pneg %p156
        $region34: #{classify_forward.1} parent=19 // pred_check_branch
          %289 = sbr.rel (%p287) target = $region36
        $region35: #{classify_forward.1} parent=19 // pred_region
          %s290 = sand.u32 %s18, 1
          %s291 = scalar_lea.sflag [#allocation9], %s290
          %s292 = sand.u32 %s146, 1
          %s293 = smul.addr %s292, 64
          %s294 = scalar_lea.vmem [#allocation10], %s293
          %s296 = ssub.s32 1024, 1024
          %297 = vsyncadd %s291, %s296
          %s298 = smul.addr %s25, 8
          %s299 = smul.addr %s298, 128
          %s300 = scalar_lea.hbm %s4, %s299
          %s302 = sshll.u32 %s294, 4
          %s303 = int_to_ptr.vmem [resolvable:$true] %s302
          %305 = dma.hbm_to_vmem [thread:$0]  %s300, 1024, %s303, %s291
        $region36: #{classify_forward.1} parent=19 // pred_fallthru
          _
      $region20: #{classify_forward.1} parent=5 // pred_fallthru
        _
      %p306 = scmp.le.s32.totalorder 1, %s18
      %p307 = scmp.lt.s32.totalorder %s18, 3
      %p308 = pnand %p306, %p307
      %p309 = pneg %p308
      // Predicated region
      $region37: #{classify_forward.1} parent=5 // pred_check
        _
      $region38: #{classify_forward.1} parent=5 // pred_check_branch
        %311 = sbr.rel (%p308) target = $region40
      $region39: #{classify_forward.1} parent=5 // pred_region
        %s312 = ssub.s32 %s18, 1
        // Predicated region
        $region41: #{classify_forward.1} parent=39 // pred_check
          %p313 = pneg %p56
        $region42: #{classify_forward.1} parent=39 // pred_check_branch
          %315 = sbr.rel (%p313) target = $region44
        $region43: #{classify_forward.1} parent=39 // pred_region
          %316 = dma.done [#allocation4], 256
        $region44: #{classify_forward.1} parent=39 // pred_fallthru
          _
        %s317 = sand.u32 %s23, 1
        %s318 = scalar_lea.sflag [#allocation6], %s317
        %s319 = sand.u32 %s71, 1
        %s320 = smul.addr %s319, 512
        %s321 = scalar_lea.vmem [#allocation5], %s320
        // Predicated region
        $region45: #{classify_forward.1} parent=39 // pred_check
          %p322 = pneg %p84
        $region46: #{classify_forward.1} parent=39 // pred_check_branch
          %324 = sbr.rel (%p322) target = $region48
        $region47: #{classify_forward.1} parent=39 // pred_region
          %325 = dma.done %s318, 8192
        $region48: #{classify_forward.1} parent=39 // pred_fallthru
          _
        %s326 = sand.u32 %s23, 1
        %s327 = scalar_lea.sflag [#allocation6], %s326
        %s328 = sand.u32 %s97, 1
        %s329 = smul.addr %s328, 2048
        %s330 = scalar_lea.vmem [#allocation7], %s329
        // Predicated region
        $region49: #{classify_forward.1} parent=39 // pred_check
          %p331 = pneg %p110
        $region50: #{classify_forward.1} parent=39 // pred_check_branch
          %333 = sbr.rel (%p331) target = $region52
        $region51: #{classify_forward.1} parent=39 // pred_region
          %334 = dma.done %s327, 32768
        $region52: #{classify_forward.1} parent=39 // pred_fallthru
          _
        %s335 = sand.u32 %s23, 1
        %s336 = scalar_lea.sflag [#allocation9], %s335
        %s337 = sand.u32 %s123, 1
        %s338 = smul.addr %s337, 256
        %s339 = scalar_lea.vmem [#allocation8], %s338
        // Predicated region
        $region53: #{classify_forward.1} parent=39 // pred_check
          %p340 = pneg %p136
        $region54: #{classify_forward.1} parent=39 // pred_check_branch
          %342 = sbr.rel (%p340) target = $region56
        $region55: #{classify_forward.1} parent=39 // pred_region
          %343 = dma.done %s336, 4096
        $region56: #{classify_forward.1} parent=39 // pred_fallthru
          _
        %s344 = sand.u32 %s23, 1
        %s345 = scalar_lea.sflag [#allocation9], %s344
        %s346 = sand.u32 %s149, 1
        %s347 = smul.addr %s346, 64
        %s348 = scalar_lea.vmem [#allocation10], %s347
        // Predicated region
        $region57: #{classify_forward.1} parent=39 // pred_check
          %p349 = pneg %p162
        $region58: #{classify_forward.1} parent=39 // pred_check_branch
          %351 = sbr.rel (%p349) target = $region60
        $region59: #{classify_forward.1} parent=39 // pred_region
          %352 = dma.done %s345, 1024
        $region60: #{classify_forward.1} parent=39 // pred_fallthru
          _
        %p353 = pneg %p56
        %p354 = pneg %p53
        %s355 = sand.u32 %s23, 1
        %s356 = scalar_lea.sflag [#allocation6], %s355
        %s357 = sand.u32 %s71, 1
        %s358 = smul.addr %s357, 512
        %s359 = scalar_lea.vmem [#allocation5], %s358
        %p360 = pneg %p84
        %p361 = pneg %p81
        %s362 = sand.u32 %s23, 1
        %s363 = scalar_lea.sflag [#allocation6], %s362
        %s364 = sand.u32 %s97, 1
        %s365 = smul.addr %s364, 2048
        %s366 = scalar_lea.vmem [#allocation7], %s365
        %p367 = pneg %p110
        %p368 = pneg %p107
        %s369 = sand.u32 %s23, 1
        %s370 = scalar_lea.sflag [#allocation9], %s369
        %s371 = sand.u32 %s123, 1
        %s372 = smul.addr %s371, 256
        %s373 = scalar_lea.vmem [#allocation8], %s372
        %p374 = pneg %p136
        %p375 = pneg %p133
        %s376 = sand.u32 %s23, 1
        %s377 = scalar_lea.sflag [#allocation9], %s376
        %s378 = sand.u32 %s149, 1
        %s379 = smul.addr %s378, 64
        %s380 = scalar_lea.vmem [#allocation10], %s379
        %p381 = pneg %p162
        %p382 = pneg %p159
        %p383 = pneg %p188
        %p384 = pneg %p185
        %p385 = scmp.lt.s32.totalorder %s27, 1
        %s386 = scalar_select %p385, %s27, 1
        %s387 = smul.addr %s386, 8
        %s388 = scalar_lea.vmem %s5, %s387
        %s389 = smul.u32 2, %s28
        %s390 = smul.u32 8, %s28
        %p391 = scmp.lt.s32.totalorder %s27, 1
        %s392 = scalar_select %p391, %s27, 1
        %s393 = smul.addr %s392, 8
        %s394 = scalar_lea.vmem %s5, %s393
        %p396 = scmp.eq.s32.totalorder %s28, 0
        // Predicated region
        $region61: #{classify_forward.1} parent=39 // pred_check
          %p397 = pneg %p396
        $region62: #{classify_forward.1} parent=39 // pred_check_branch
          %399 = sbr.rel (%p397) target = $region64
        $region63: #{classify_forward.1} parent=39 // pred_region
          %400 = vst [vmem:[#allocation2] sm:$0xff] 0.0
          %401 = vst [vmem:[#allocation2 + $0x8] sm:$0xff] 0.0
          %402 = vst [vmem:[#allocation2 + $0x10] sm:$0xff] 0.0
          %403 = vst [vmem:[#allocation2 + $0x18] sm:$0xff] 0.0
          %404 = vst [vmem:[#allocation2 + $0x20] sm:$0xff] 0.0
          %405 = vst [vmem:[#allocation2 + $0x28] sm:$0xff] 0.0
          %406 = vst [vmem:[#allocation2 + $0x30] sm:$0xff] 0.0
          %407 = vst [vmem:[#allocation2 + $0x38] sm:$0xff] 0.0
        $region64: #{classify_forward.1} parent=39 // pred_fallthru
          _
        %v408 = vld [vmem:[#allocation3] sm:$0xff]
        %v409 = vld [vmem:[#allocation3 + $0x8] sm:$0xff]
        %v410 = vpack.c.bf16 %v408, %v408
        %v411 = vpack.c.bf16 %v409, %v409
        %v412 = vld [vmem:[%s321] sm:$0xff]
        %v413 = vld [vmem:[%s321 + $0x8] sm:$0xff]
        %v414 = vld [vmem:[%s321 + $0x10] sm:$0xff]
        %v415 = vld [vmem:[%s321 + $0x18] sm:$0xff]
        %v416 = vld [vmem:[%s321 + $0x20] sm:$0xff]
        %v417 = vld [vmem:[%s321 + $0x28] sm:$0xff]
        %v418 = vld [vmem:[%s321 + $0x30] sm:$0xff]
        %v419 = vld [vmem:[%s321 + $0x38] sm:$0xff]
        %v420 = vld [vmem:[%s321 + $0x40] sm:$0xff]
        %v421 = vld [vmem:[%s321 + $0x48] sm:$0xff]
        %v422 = vld [vmem:[%s321 + $0x50] sm:$0xff]
        %v423 = vld [vmem:[%s321 + $0x58] sm:$0xff]
        %v424 = vld [vmem:[%s321 + $0x60] sm:$0xff]
        %v425 = vld [vmem:[%s321 + $0x68] sm:$0xff]
        %v426 = vld [vmem:[%s321 + $0x70] sm:$0xff]
        %v427 = vld [vmem:[%s321 + $0x78] sm:$0xff]
        %v428 = vld [vmem:[%s321 + $0x80] sm:$0xff]
        %v429 = vld [vmem:[%s321 + $0x88] sm:$0xff]
        %v430 = vld [vmem:[%s321 + $0x90] sm:$0xff]
        %v431 = vld [vmem:[%s321 + $0x98] sm:$0xff]
        %v432 = vld [vmem:[%s321 + $0xa0] sm:$0xff]
        %v433 = vld [vmem:[%s321 + $0xa8] sm:$0xff]
        %v434 = vld [vmem:[%s321 + $0xb0] sm:$0xff]
        %v435 = vld [vmem:[%s321 + $0xb8] sm:$0xff]
        %v436 = vld [vmem:[%s321 + $0xc0] sm:$0xff]
        %v437 = vld [vmem:[%s321 + $0xc8] sm:$0xff]
        %v438 = vld [vmem:[%s321 + $0xd0] sm:$0xff]
        %v439 = vld [vmem:[%s321 + $0xd8] sm:$0xff]
        %v440 = vld [vmem:[%s321 + $0xe0] sm:$0xff]
        %v441 = vld [vmem:[%s321 + $0xe8] sm:$0xff]
        %v442 = vld [vmem:[%s321 + $0xf0] sm:$0xff]
        %v443 = vld [vmem:[%s321 + $0xf8] sm:$0xff]
        %v444 = vld [vmem:[%s321 + $0x100] sm:$0xff]
        %v445 = vld [vmem:[%s321 + $0x108] sm:$0xff]
        %v446 = vld [vmem:[%s321 + $0x110] sm:$0xff]
        %v447 = vld [vmem:[%s321 + $0x118] sm:$0xff]
        %v448 = vld [vmem:[%s321 + $0x120] sm:$0xff]
        %v449 = vld [vmem:[%s321 + $0x128] sm:$0xff]
        %v450 = vld [vmem:[%s321 + $0x130] sm:$0xff]
        %v451 = vld [vmem:[%s321 + $0x138] sm:$0xff]
        %v452 = vld [vmem:[%s321 + $0x140] sm:$0xff]
        %v453 = vld [vmem:[%s321 + $0x148] sm:$0xff]
        %v454 = vld [vmem:[%s321 + $0x150] sm:$0xff]
        %v455 = vld [vmem:[%s321 + $0x158] sm:$0xff]
        %v456 = vld [vmem:[%s321 + $0x160] sm:$0xff]
        %v457 = vld [vmem:[%s321 + $0x168] sm:$0xff]
        %v458 = vld [vmem:[%s321 + $0x170] sm:$0xff]
        %v459 = vld [vmem:[%s321 + $0x178] sm:$0xff]
        %v460 = vld [vmem:[%s321 + $0x180] sm:$0xff]
        %v461 = vld [vmem:[%s321 + $0x188] sm:$0xff]
        %v462 = vld [vmem:[%s321 + $0x190] sm:$0xff]
        %v463 = vld [vmem:[%s321 + $0x198] sm:$0xff]
        %v464 = vld [vmem:[%s321 + $0x1a0] sm:$0xff]
        %v465 = vld [vmem:[%s321 + $0x1a8] sm:$0xff]
        %v466 = vld [vmem:[%s321 + $0x1b0] sm:$0xff]
        %v467 = vld [vmem:[%s321 + $0x1b8] sm:$0xff]
        %v468 = vld [vmem:[%s321 + $0x1c0] sm:$0xff]
        %v469 = vld [vmem:[%s321 + $0x1c8] sm:$0xff]
        %v470 = vld [vmem:[%s321 + $0x1d0] sm:$0xff]
        %v471 = vld [vmem:[%s321 + $0x1d8] sm:$0xff]
        %v472 = vld [vmem:[%s321 + $0x1e0] sm:$0xff]
        %v473 = vld [vmem:[%s321 + $0x1e8] sm:$0xff]
        %v474 = vld [vmem:[%s321 + $0x1f0] sm:$0xff]
        %v475 = vld [vmem:[%s321 + $0x1f8] sm:$0xff]
        %v476 = vunpack.c.l.s8.bf16 %v412
        %v477 = vunpack.c.l.s8.bf16 %v413
        %v478 = vunpack.c.l.s8.bf16 %v414
        %v479 = vunpack.c.l.s8.bf16 %v415
        %v480 = vunpack.c.l.s8.bf16 %v416
        %v481 = vunpack.c.l.s8.bf16 %v417
        %v482 = vunpack.c.l.s8.bf16 %v418
        %v483 = vunpack.c.l.s8.bf16 %v419
        %v484 = vunpack.c.h.s8.bf16 %v412
        %v485 = vunpack.c.h.s8.bf16 %v413
        %v486 = vunpack.c.h.s8.bf16 %v414
        %v487 = vunpack.c.h.s8.bf16 %v415
        %v488 = vunpack.c.h.s8.bf16 %v416
        %v489 = vunpack.c.h.s8.bf16 %v417
        %v490 = vunpack.c.h.s8.bf16 %v418
        %v491 = vunpack.c.h.s8.bf16 %v419
        %v492 = vunpack.c.l.s8.bf16 %v420
        %v493 = vunpack.c.l.s8.bf16 %v421
        %v494 = vunpack.c.l.s8.bf16 %v422
        %v495 = vunpack.c.l.s8.bf16 %v423
        %v496 = vunpack.c.l.s8.bf16 %v424
        %v497 = vunpack.c.l.s8.bf16 %v425
        %v498 = vunpack.c.l.s8.bf16 %v426
        %v499 = vunpack.c.l.s8.bf16 %v427
        %v500 = vunpack.c.h.s8.bf16 %v420
        %v501 = vunpack.c.h.s8.bf16 %v421
        %v502 = vunpack.c.h.s8.bf16 %v422
        %v503 = vunpack.c.h.s8.bf16 %v423
        %v504 = vunpack.c.h.s8.bf16 %v424
        %v505 = vunpack.c.h.s8.bf16 %v425
        %v506 = vunpack.c.h.s8.bf16 %v426
        %v507 = vunpack.c.h.s8.bf16 %v427
        %v508 = vunpack.c.l.s8.bf16 %v428
        %v509 = vunpack.c.l.s8.bf16 %v429
        %v510 = vunpack.c.l.s8.bf16 %v430
        %v511 = vunpack.c.l.s8.bf16 %v431
        %v512 = vunpack.c.l.s8.bf16 %v432
        %v513 = vunpack.c.l.s8.bf16 %v433
        %v514 = vunpack.c.l.s8.bf16 %v434
        %v515 = vunpack.c.l.s8.bf16 %v435
        %v516 = vunpack.c.h.s8.bf16 %v428
        %v517 = vunpack.c.h.s8.bf16 %v429
        %v518 = vunpack.c.h.s8.bf16 %v430
        %v519 = vunpack.c.h.s8.bf16 %v431
        %v520 = vunpack.c.h.s8.bf16 %v432
        %v521 = vunpack.c.h.s8.bf16 %v433
        %v522 = vunpack.c.h.s8.bf16 %v434
        %v523 = vunpack.c.h.s8.bf16 %v435
        %v524 = vunpack.c.l.s8.bf16 %v436
        %v525 = vunpack.c.l.s8.bf16 %v437
        %v526 = vunpack.c.l.s8.bf16 %v438
        %v527 = vunpack.c.l.s8.bf16 %v439
        %v528 = vunpack.c.l.s8.bf16 %v440
        %v529 = vunpack.c.l.s8.bf16 %v441
        %v530 = vunpack.c.l.s8.bf16 %v442
        %v531 = vunpack.c.l.s8.bf16 %v443
        %v532 = vunpack.c.h.s8.bf16 %v436
        %v533 = vunpack.c.h.s8.bf16 %v437
        %v534 = vunpack.c.h.s8.bf16 %v438
        %v535 = vunpack.c.h.s8.bf16 %v439
        %v536 = vunpack.c.h.s8.bf16 %v440
        %v537 = vunpack.c.h.s8.bf16 %v441
        %v538 = vunpack.c.h.s8.bf16 %v442
        %v539 = vunpack.c.h.s8.bf16 %v443
        %v540 = vunpack.c.l.s8.bf16 %v444
        %v541 = vunpack.c.l.s8.bf16 %v445
        %v542 = vunpack.c.l.s8.bf16 %v446
        %v543 = vunpack.c.l.s8.bf16 %v447
        %v544 = vunpack.c.l.s8.bf16 %v448
        %v545 = vunpack.c.l.s8.bf16 %v449
        %v546 = vunpack.c.l.s8.bf16 %v450
        %v547 = vunpack.c.l.s8.bf16 %v451
        %v548 = vunpack.c.h.s8.bf16 %v444
        %v549 = vunpack.c.h.s8.bf16 %v445
        %v550 = vunpack.c.h.s8.bf16 %v446
        %v551 = vunpack.c.h.s8.bf16 %v447
        %v552 = vunpack.c.h.s8.bf16 %v448
        %v553 = vunpack.c.h.s8.bf16 %v449
        %v554 = vunpack.c.h.s8.bf16 %v450
        %v555 = vunpack.c.h.s8.bf16 %v451
        %v556 = vunpack.c.l.s8.bf16 %v452
        %v557 = vunpack.c.l.s8.bf16 %v453
        %v558 = vunpack.c.l.s8.bf16 %v454
        %v559 = vunpack.c.l.s8.bf16 %v455
        %v560 = vunpack.c.l.s8.bf16 %v456
        %v561 = vunpack.c.l.s8.bf16 %v457
        %v562 = vunpack.c.l.s8.bf16 %v458
        %v563 = vunpack.c.l.s8.bf16 %v459
        %v564 = vunpack.c.h.s8.bf16 %v452
        %v565 = vunpack.c.h.s8.bf16 %v453
        %v566 = vunpack.c.h.s8.bf16 %v454
        %v567 = vunpack.c.h.s8.bf16 %v455
        %v568 = vunpack.c.h.s8.bf16 %v456
        %v569 = vunpack.c.h.s8.bf16 %v457
        %v570 = vunpack.c.h.s8.bf16 %v458
        %v571 = vunpack.c.h.s8.bf16 %v459
        %v572 = vunpack.c.l.s8.bf16 %v460
        %v573 = vunpack.c.l.s8.bf16 %v461
        %v574 = vunpack.c.l.s8.bf16 %v462
        %v575 = vunpack.c.l.s8.bf16 %v463
        %v576 = vunpack.c.l.s8.bf16 %v464
        %v577 = vunpack.c.l.s8.bf16 %v465
        %v578 = vunpack.c.l.s8.bf16 %v466
        %v579 = vunpack.c.l.s8.bf16 %v467
        %v580 = vunpack.c.h.s8.bf16 %v460
        %v581 = vunpack.c.h.s8.bf16 %v461
        %v582 = vunpack.c.h.s8.bf16 %v462
        %v583 = vunpack.c.h.s8.bf16 %v463
        %v584 = vunpack.c.h.s8.bf16 %v464
        %v585 = vunpack.c.h.s8.bf16 %v465
        %v586 = vunpack.c.h.s8.bf16 %v466
        %v587 = vunpack.c.h.s8.bf16 %v467
        %v588 = vunpack.c.l.s8.bf16 %v468
        %v589 = vunpack.c.l.s8.bf16 %v469
        %v590 = vunpack.c.l.s8.bf16 %v470
        %v591 = vunpack.c.l.s8.bf16 %v471
        %v592 = vunpack.c.l.s8.bf16 %v472
        %v593 = vunpack.c.l.s8.bf16 %v473
        %v594 = vunpack.c.l.s8.bf16 %v474
        %v595 = vunpack.c.l.s8.bf16 %v475
        %v596 = vunpack.c.h.s8.bf16 %v468
        %v597 = vunpack.c.h.s8.bf16 %v469
        %v598 = vunpack.c.h.s8.bf16 %v470
        %v599 = vunpack.c.h.s8.bf16 %v471
        %v600 = vunpack.c.h.s8.bf16 %v472
        %v601 = vunpack.c.h.s8.bf16 %v473
        %v602 = vunpack.c.h.s8.bf16 %v474
        %v603 = vunpack.c.h.s8.bf16 %v475
        %v604 = vld [vmem:[#allocation2] sm:$0xff]
        %v605 = vld [vmem:[#allocation2 + $0x8] sm:$0xff]
        %v606 = vld [vmem:[#allocation2 + $0x10] sm:$0xff]
        %v607 = vld [vmem:[#allocation2 + $0x18] sm:$0xff]
        %v608 = vld [vmem:[#allocation2 + $0x20] sm:$0xff]
        %v609 = vld [vmem:[#allocation2 + $0x28] sm:$0xff]
        %v610 = vld [vmem:[#allocation2 + $0x30] sm:$0xff]
        %v611 = vld [vmem:[#allocation2 + $0x38] sm:$0xff]
        %612 = vmatprep.subr.bf16.mxu0 %v533
        %613 = vmatpush1.bf16.msra.mxu0 %v532
        %614 = vmatprep.subr.bf16.mxu0 %v525
        %615 = vmatpush1.bf16.msra.mxu0 %v524
        %616 = vmatprep.subr.bf16.mxu0 %v517
        %617 = vmatpush1.bf16.msra.mxu0 %v516
        %618 = vmatprep.subr.bf16.mxu0 %v509
        %619 = vmatpush1.bf16.msra.mxu0 %v508
        %620 = vmatprep.subr.bf16.mxu0 %v501
        %621 = vmatpush1.bf16.msra.mxu0 %v500
        %622 = vmatprep.subr.bf16.mxu0 %v493
        %623 = vmatpush1.bf16.msra.mxu0 %v492
        %624 = vmatprep.subr.bf16.mxu0 %v485
        %625 = vmatpush1.bf16.msra.mxu0 %v484
        %626 = vmatprep.subr.bf16.mxu0 %v477
        %627 = vmatpush1.bf16.msra.mxu0 %v476
        %628 = vmatprep.subr.bf16.mxu0 %v597
        %629 = vmatpush2.bf16.msra.mxu0 %v596
        %630 = vmatprep.subr.bf16.mxu0 %v589
        %631 = vmatpush2.bf16.msra.mxu0 %v588
        %632 = vmatprep.subr.bf16.mxu0 %v581
        %633 = vmatpush2.bf16.msra.mxu0 %v580
        %634 = vmatprep.subr.bf16.mxu0 %v573
        %635 = vmatpush2.bf16.msra.mxu0 %v572
        %636 = vmatprep.subr.bf16.mxu0 %v565
        %637 = vmatpush2.bf16.msra.mxu0 %v564
        %638 = vmatprep.subr.bf16.mxu0 %v557
        %639 = vmatpush2.bf16.msra.mxu0 %v556
        %640 = vmatprep.subr.bf16.mxu0 %v549
        %641 = vmatpush2.bf16.msra.mxu0 %v548
        %642 = vmatprep.subr.bf16.mxu0 %v541
        %643 = vmatpush2.bf16.msra.mxu0 %v540
        %644 = vmatprep.mubr.bf16.mxu0 %v411
        %645 = vmatmul.mubr.bf16.gmra.mxu0 %v410
        %v646 = vpop.f32.mrf.mxu0
        %v647 = vadd.f32 0.0, %v646
        %v648 = vpop.f32.mrf.mxu0
        %v649 = vadd.f32 0.0, %v648
        %v650 = vpop.f32.mrf.mxu0
        %v651 = vpop.f32.mrf.mxu0
        %652 = vdwg.mxu0
        %653 = vmatprep.subr.bf16.mxu0 %v535
        %654 = vmatpush1.bf16.msra.mxu0 %v534
        %655 = vmatprep.subr.bf16.mxu0 %v527
        %656 = vmatpush1.bf16.msra.mxu0 %v526
        %657 = vmatprep.subr.bf16.mxu0 %v519
        %658 = vmatpush1.bf16.msra.mxu0 %v518
        %659 = vmatprep.subr.bf16.mxu0 %v511
        %660 = vmatpush1.bf16.msra.mxu0 %v510
        %661 = vmatprep.subr.bf16.mxu0 %v503
        %662 = vmatpush1.bf16.msra.mxu0 %v502
        %663 = vmatprep.subr.bf16.mxu0 %v495
        %664 = vmatpush1.bf16.msra.mxu0 %v494
        %665 = vmatprep.subr.bf16.mxu0 %v487
        %666 = vmatpush1.bf16.msra.mxu0 %v486
        %667 = vmatprep.subr.bf16.mxu0 %v479
        %668 = vmatpush1.bf16.msra.mxu0 %v478
        %669 = vmatprep.subr.bf16.mxu0 %v599
        %670 = vmatpush2.bf16.msra.mxu0 %v598
        %671 = vmatprep.subr.bf16.mxu0 %v591
        %672 = vmatpush2.bf16.msra.mxu0 %v590
        %673 = vmatprep.subr.bf16.mxu0 %v583
        %674 = vmatpush2.bf16.msra.mxu0 %v582
        %675 = vmatprep.subr.bf16.mxu0 %v575
        %676 = vmatpush2.bf16.msra.mxu0 %v574
        %677 = vmatprep.subr.bf16.mxu0 %v567
        %678 = vmatpush2.bf16.msra.mxu0 %v566
        %679 = vmatprep.subr.bf16.mxu0 %v559
        %680 = vmatpush2.bf16.msra.mxu0 %v558
        %681 = vmatprep.subr.bf16.mxu0 %v551
        %682 = vmatpush2.bf16.msra.mxu0 %v550
        %683 = vmatprep.subr.bf16.mxu0 %v543
        %684 = vmatpush2.bf16.msra.mxu0 %v542
        %685 = vmatprep.mubr.bf16.mxu0 %v411
        %686 = vmatmul.mubr.bf16.gmra.mxu0 %v410
        %v687 = vpop.f32.mrf.mxu0
        %v688 = vadd.f32 0.0, %v687
        %v689 = vpop.f32.mrf.mxu0
        %v690 = vadd.f32 0.0, %v689
        %v691 = vpop.f32.mrf.mxu0
        %v692 = vpop.f32.mrf.mxu0
        %693 = vdwg.mxu0
        %694 = vmatprep.subr.bf16.mxu0 %v537
        %695 = vmatpush1.bf16.msra.mxu0 %v536
        %696 = vmatprep.subr.bf16.mxu0 %v529
        %697 = vmatpush1.bf16.msra.mxu0 %v528
        %698 = vmatprep.subr.bf16.mxu0 %v521
        %699 = vmatpush1.bf16.msra.mxu0 %v520
        %700 = vmatprep.subr.bf16.mxu0 %v513
        %701 = vmatpush1.bf16.msra.mxu0 %v512
        %702 = vmatprep.subr.bf16.mxu0 %v505
        %703 = vmatpush1.bf16.msra.mxu0 %v504
        %704 = vmatprep.subr.bf16.mxu0 %v497
        %705 = vmatpush1.bf16.msra.mxu0 %v496
        %706 = vmatprep.subr.bf16.mxu0 %v489
        %707 = vmatpush1.bf16.msra.mxu0 %v488
        %708 = vmatprep.subr.bf16.mxu0 %v481
        %709 = vmatpush1.bf16.msra.mxu0 %v480
        %710 = vmatprep.subr.bf16.mxu0 %v601
        %711 = vmatpush2.bf16.msra.mxu0 %v600
        %712 = vmatprep.subr.bf16.mxu0 %v593
        %713 = vmatpush2.bf16.msra.mxu0 %v592
        %714 = vmatprep.subr.bf16.mxu0 %v585
        %715 = vmatpush2.bf16.msra.mxu0 %v584
        %716 = vmatprep.subr.bf16.mxu0 %v577
        %717 = vmatpush2.bf16.msra.mxu0 %v576
        %718 = vmatprep.subr.bf16.mxu0 %v569
        %719 = vmatpush2.bf16.msra.mxu0 %v568
        %720 = vmatprep.subr.bf16.mxu0 %v561
        %721 = vmatpush2.bf16.msra.mxu0 %v560
        %722 = vmatprep.subr.bf16.mxu0 %v553
        %723 = vmatpush2.bf16.msra.mxu0 %v552
        %724 = vmatprep.subr.bf16.mxu0 %v545
        %725 = vmatpush2.bf16.msra.mxu0 %v544
        %726 = vmatprep.mubr.bf16.mxu0 %v411
        %727 = vmatmul.mubr.bf16.gmra.mxu0 %v410
        %v728 = vpop.f32.mrf.mxu0
        %v729 = vadd.f32 0.0, %v728
        %v730 = vpop.f32.mrf.mxu0
        %v731 = vadd.f32 0.0, %v730
        %v732 = vpop.f32.mrf.mxu0
        %v733 = vpop.f32.mrf.mxu0
        %734 = vdwg.mxu0
        %735 = vmatprep.subr.bf16.mxu0 %v539
        %736 = vmatpush1.bf16.msra.mxu0 %v538
        %737 = vmatprep.subr.bf16.mxu0 %v531
        %738 = vmatpush1.bf16.msra.mxu0 %v530
        %739 = vmatprep.subr.bf16.mxu0 %v523
        %740 = vmatpush1.bf16.msra.mxu0 %v522
        %741 = vmatprep.subr.bf16.mxu0 %v515
        %742 = vmatpush1.bf16.msra.mxu0 %v514
        %743 = vmatprep.subr.bf16.mxu0 %v507
        %744 = vmatpush1.bf16.msra.mxu0 %v506
        %745 = vmatprep.subr.bf16.mxu0 %v499
        %746 = vmatpush1.bf16.msra.mxu0 %v498
        %747 = vmatprep.subr.bf16.mxu0 %v491
        %748 = vmatpush1.bf16.msra.mxu0 %v490
        %749 = vmatprep.subr.bf16.mxu0 %v483
        %750 = vmatpush1.bf16.msra.mxu0 %v482
        %751 = vmatprep.subr.bf16.mxu0 %v603
        %752 = vmatpush2.bf16.msra.mxu0 %v602
        %753 = vmatprep.subr.bf16.mxu0 %v595
        %754 = vmatpush2.bf16.msra.mxu0 %v594
        %755 = vmatprep.subr.bf16.mxu0 %v587
        %756 = vmatpush2.bf16.msra.mxu0 %v586
        %757 = vmatprep.subr.bf16.mxu0 %v579
        %758 = vmatpush2.bf16.msra.mxu0 %v578
        %759 = vmatprep.subr.bf16.mxu0 %v571
        %760 = vmatpush2.bf16.msra.mxu0 %v570
        %761 = vmatprep.subr.bf16.mxu0 %v563
        %762 = vmatpush2.bf16.msra.mxu0 %v562
        %763 = vmatprep.subr.bf16.mxu0 %v555
        %764 = vmatpush2.bf16.msra.mxu0 %v554
        %765 = vmatprep.subr.bf16.mxu0 %v547
        %766 = vmatpush2.bf16.msra.mxu0 %v546
        %767 = vmatprep.mubr.bf16.mxu0 %v411
        %768 = vmatmul.mubr.bf16.gmra.mxu0 %v410
        %v769 = vpop.f32.mrf.mxu0
        %v770 = vadd.f32 0.0, %v769
        %v771 = vpop.f32.mrf.mxu0
        %v772 = vadd.f32 0.0, %v771
        %v773 = vpop.f32.mrf.mxu0
        %v774 = vpop.f32.mrf.mxu0
        %775 = vdwg.mxu0
        %v776 = vadd.f32 %v604, %v647
        %v777 = vadd.f32 %v605, %v649
        %v778 = vadd.f32 %v606, %v688
        %v779 = vadd.f32 %v607, %v690
        %v780 = vadd.f32 %v608, %v729
        %v781 = vadd.f32 %v609, %v731
        %v782 = vadd.f32 %v610, %v770
        %v783 = vadd.f32 %v611, %v772
        %784 = vst [vmem:[#allocation2] sm:$0xff] %v776
        %785 = vst [vmem:[#allocation2 + $0x8] sm:$0xff] %v777
        %786 = vst [vmem:[#allocation2 + $0x10] sm:$0xff] %v778
        %787 = vst [vmem:[#allocation2 + $0x18] sm:$0xff] %v779
        %788 = vst [vmem:[#allocation2 + $0x20] sm:$0xff] %v780
        %789 = vst [vmem:[#allocation2 + $0x28] sm:$0xff] %v781
        %790 = vst [vmem:[#allocation2 + $0x30] sm:$0xff] %v782
        %791 = vst [vmem:[#allocation2 + $0x38] sm:$0xff] %v783
        // Predicated region
        $region65: #{classify_forward.1} parent=39 // pred_check
          %p792 = pneg %p396
        $region66: #{classify_forward.1} parent=39 // pred_check_branch
          %794 = sbr.rel (%p792) target = $region68
        $region67: #{classify_forward.1} parent=39 // pred_region
          %v795 = vld [vmem:[%s348] sm:$0xff]
          %v796 = vld [vmem:[%s348 + $0x8] sm:$0xff]
          %v797 = vld [vmem:[%s348 + $0x10] sm:$0xff]
          %v798 = vld [vmem:[%s348 + $0x18] sm:$0xff]
          %v799 = vld [vmem:[%s348 + $0x20] sm:$0xff]
          %v800 = vld [vmem:[%s348 + $0x28] sm:$0xff]
          %v801 = vld [vmem:[%s348 + $0x30] sm:$0xff]
          %v802 = vld [vmem:[%s348 + $0x38] sm:$0xff]
          %v803 = vld [vmem:[#allocation2] sm:$0xff]
          %v804 = vld [vmem:[#allocation2 + $0x8] sm:$0xff]
          %v805 = vld [vmem:[#allocation2 + $0x10] sm:$0xff]
          %v806 = vld [vmem:[#allocation2 + $0x18] sm:$0xff]
          %v807 = vld [vmem:[#allocation2 + $0x20] sm:$0xff]
          %v808 = vld [vmem:[#allocation2 + $0x28] sm:$0xff]
          %v809 = vld [vmem:[#allocation2 + $0x30] sm:$0xff]
          %v810 = vld [vmem:[#allocation2 + $0x38] sm:$0xff]
          %v811 = vlaneseq
          %v812 = vshrl.u32 %v811, 7
          %v813 = vsub.s32 0, %v812
          %v814 = vrot.slane %v795, %v813
          %v815 = vlaneseq
          %v816 = vshrl.u32 %v815, 7
          %v817 = vsub.s32 0, %v816
          %v818 = vrot.slane %v796, %v817
          %v819 = vlaneseq
          %v820 = vshrl.u32 %v819, 7
          %v821 = vsub.s32 0, %v820
          %v822 = vrot.slane %v797, %v821
          %v823 = vlaneseq
          %v824 = vshrl.u32 %v823, 7
          %v825 = vsub.s32 0, %v824
          %v826 = vrot.slane %v798, %v825
          %v827 = vlaneseq
          %v828 = vshrl.u32 %v827, 7
          %v829 = vsub.s32 0, %v828
          %v830 = vrot.slane %v799, %v829
          %v831 = vlaneseq
          %v832 = vshrl.u32 %v831, 7
          %v833 = vsub.s32 0, %v832
          %v834 = vrot.slane %v800, %v833
          %v835 = vlaneseq
          %v836 = vshrl.u32 %v835, 7
          %v837 = vsub.s32 0, %v836
          %v838 = vrot.slane %v801, %v837
          %v839 = vlaneseq
          %v840 = vshrl.u32 %v839, 7
          %v841 = vsub.s32 0, %v840
          %v842 = vrot.slane %v802, %v841
          %v843 = vmul.f32 %v803, %v814
          %v844 = vmul.f32 %v804, %v818
          %v845 = vmul.f32 %v805, %v822
          %v846 = vmul.f32 %v806, %v826
          %v847 = vmul.f32 %v807, %v830
          %v848 = vmul.f32 %v808, %v834
          %v849 = vmul.f32 %v809, %v838
          %v850 = vmul.f32 %v810, %v842
          %v851 = vlaneseq
          %v852 = vshrl.u32 %v851, 7
          %v853 = vsub.s32 1, %v852
          %v854 = vrot.slane %v795, %v853
          %v855 = vlaneseq
          %v856 = vshrl.u32 %v855, 7
          %v857 = vsub.s32 1, %v856
          %v858 = vrot.slane %v796, %v857
          %v859 = vlaneseq
          %v860 = vshrl.u32 %v859, 7
          %v861 = vsub.s32 1, %v860
          %v862 = vrot.slane %v797, %v861
          %v863 = vlaneseq
          %v864 = vshrl.u32 %v863, 7
          %v865 = vsub.s32 1, %v864
          %v866 = vrot.slane %v798, %v865
          %v867 = vlaneseq
          %v868 = vshrl.u32 %v867, 7
          %v869 = vsub.s32 1, %v868
          %v870 = vrot.slane %v799, %v869
          %v871 = vlaneseq
          %v872 = vshrl.u32 %v871, 7
          %v873 = vsub.s32 1, %v872
          %v874 = vrot.slane %v800, %v873
          %v875 = vlaneseq
          %v876 = vshrl.u32 %v875, 7
          %v877 = vsub.s32 1, %v876
          %v878 = vrot.slane %v801, %v877
          %v879 = vlaneseq
          %v880 = vshrl.u32 %v879, 7
          %v881 = vsub.s32 1, %v880
          %v882 = vrot.slane %v802, %v881
          %v883 = vadd.f32 %v843, %v854
          %v884 = vadd.f32 %v844, %v858
          %v885 = vadd.f32 %v845, %v862
          %v886 = vadd.f32 %v846, %v866
          %v887 = vadd.f32 %v847, %v870
          %v888 = vadd.f32 %v848, %v874
          %v889 = vadd.f32 %v849, %v878
          %v890 = vadd.f32 %v850, %v882
          %v891 = vmax.f32 %v883, 0.0
          %v892 = vmax.f32 %v884, 0.0
          %v893 = vmax.f32 %v885, 0.0
          %v894 = vmax.f32 %v886, 0.0
          %v895 = vmax.f32 %v887, 0.0
          %v896 = vmax.f32 %v888, 0.0
          %v897 = vmax.f32 %v889, 0.0
          %v898 = vmax.f32 %v890, 0.0
          %v899 = vpack.c.bf16 %v891, %v891
          %v900 = vpack.c.bf16 %v892, %v892
          %v901 = vpack.c.bf16 %v893, %v893
          %v902 = vpack.c.bf16 %v894, %v894
          %v903 = vpack.c.bf16 %v895, %v895
          %v904 = vpack.c.bf16 %v896, %v896
          %v905 = vpack.c.bf16 %v897, %v897
          %v906 = vpack.c.bf16 %v898, %v898
          %v907 = vld [vmem:[%s330] sm:$0xff]
          %v908 = vld [vmem:[%s330 + $0x8] sm:$0xff]
          %v909 = vld [vmem:[%s330 + $0x10] sm:$0xff]
          %v910 = vld [vmem:[%s330 + $0x18] sm:$0xff]
          %v911 = vld [vmem:[%s330 + $0x20] sm:$0xff]
          %v912 = vld [vmem:[%s330 + $0x28] sm:$0xff]
          %v913 = vld [vmem:[%s330 + $0x30] sm:$0xff]
          %v914 = vld [vmem:[%s330 + $0x38] sm:$0xff]
          %v915 = vld [vmem:[%s330 + $0x40] sm:$0xff]
          %v916 = vld [vmem:[%s330 + $0x48] sm:$0xff]
          %v917 = vld [vmem:[%s330 + $0x50] sm:$0xff]
          %v918 = vld [vmem:[%s330 + $0x58] sm:$0xff]
          %v919 = vld [vmem:[%s330 + $0x60] sm:$0xff]
          %v920 = vld [vmem:[%s330 + $0x68] sm:$0xff]
          %v921 = vld [vmem:[%s330 + $0x70] sm:$0xff]
          %v922 = vld [vmem:[%s330 + $0x78] sm:$0xff]
          %v923 = vld [vmem:[%s330 + $0x80] sm:$0xff]
          %v924 = vld [vmem:[%s330 + $0x88] sm:$0xff]
          %v925 = vld [vmem:[%s330 + $0x90] sm:$0xff]
          %v926 = vld [vmem:[%s330 + $0x98] sm:$0xff]
          %v927 = vld [vmem:[%s330 + $0xa0] sm:$0xff]
          %v928 = vld [vmem:[%s330 + $0xa8] sm:$0xff]
          %v929 = vld [vmem:[%s330 + $0xb0] sm:$0xff]
          %v930 = vld [vmem:[%s330 + $0xb8] sm:$0xff]
          %v931 = vld [vmem:[%s330 + $0xc0] sm:$0xff]
          %v932 = vld [vmem:[%s330 + $0xc8] sm:$0xff]
          %v933 = vld [vmem:[%s330 + $0xd0] sm:$0xff]
          %v934 = vld [vmem:[%s330 + $0xd8] sm:$0xff]
          %v935 = vld [vmem:[%s330 + $0xe0] sm:$0xff]
          %v936 = vld [vmem:[%s330 + $0xe8] sm:$0xff]
          %v937 = vld [vmem:[%s330 + $0xf0] sm:$0xff]
          %v938 = vld [vmem:[%s330 + $0xf8] sm:$0xff]
          %v939 = vld [vmem:[%s330 + $0x100] sm:$0xff]
          %v940 = vld [vmem:[%s330 + $0x108] sm:$0xff]
          %v941 = vld [vmem:[%s330 + $0x110] sm:$0xff]
          %v942 = vld [vmem:[%s330 + $0x118] sm:$0xff]
          %v943 = vld [vmem:[%s330 + $0x120] sm:$0xff]
          %v944 = vld [vmem:[%s330 + $0x128] sm:$0xff]
          %v945 = vld [vmem:[%s330 + $0x130] sm:$0xff]
          %v946 = vld [vmem:[%s330 + $0x138] sm:$0xff]
          %v947 = vld [vmem:[%s330 + $0x140] sm:$0xff]
          %v948 = vld [vmem:[%s330 + $0x148] sm:$0xff]
          %v949 = vld [vmem:[%s330 + $0x150] sm:$0xff]
          %v950 = vld [vmem:[%s330 + $0x158] sm:$0xff]
          %v951 = vld [vmem:[%s330 + $0x160] sm:$0xff]
          %v952 = vld [vmem:[%s330 + $0x168] sm:$0xff]
          %v953 = vld [vmem:[%s330 + $0x170] sm:$0xff]
          %v954 = vld [vmem:[%s330 + $0x178] sm:$0xff]
          %v955 = vld [vmem:[%s330 + $0x180] sm:$0xff]
          %v956 = vld [vmem:[%s330 + $0x188] sm:$0xff]
          %v957 = vld [vmem:[%s330 + $0x190] sm:$0xff]
          %v958 = vld [vmem:[%s330 + $0x198] sm:$0xff]
          %v959 = vld [vmem:[%s330 + $0x1a0] sm:$0xff]
          %v960 = vld [vmem:[%s330 + $0x1a8] sm:$0xff]
          %v961 = vld [vmem:[%s330 + $0x1b0] sm:$0xff]
          %v962 = vld [vmem:[%s330 + $0x1b8] sm:$0xff]
          %v963 = vld [vmem:[%s330 + $0x1c0] sm:$0xff]
          %v964 = vld [vmem:[%s330 + $0x1c8] sm:$0xff]
          %v965 = vld [vmem:[%s330 + $0x1d0] sm:$0xff]
          %v966 = vld [vmem:[%s330 + $0x1d8] sm:$0xff]
          %v967 = vld [vmem:[%s330 + $0x1e0] sm:$0xff]
          %v968 = vld [vmem:[%s330 + $0x1e8] sm:$0xff]
          %v969 = vld [vmem:[%s330 + $0x1f0] sm:$0xff]
          %v970 = vld [vmem:[%s330 + $0x1f8] sm:$0xff]
          %v971 = vld [vmem:[%s330 + $0x200] sm:$0xff]
          %v972 = vld [vmem:[%s330 + $0x208] sm:$0xff]
          %v973 = vld [vmem:[%s330 + $0x210] sm:$0xff]
          %v974 = vld [vmem:[%s330 + $0x218] sm:$0xff]
          %v975 = vld [vmem:[%s330 + $0x220] sm:$0xff]
          %v976 = vld [vmem:[%s330 + $0x228] sm:$0xff]
          %v977 = vld [vmem:[%s330 + $0x230] sm:$0xff]
          %v978 = vld [vmem:[%s330 + $0x238] sm:$0xff]
          %v979 = vld [vmem:[%s330 + $0x240] sm:$0xff]
          %v980 = vld [vmem:[%s330 + $0x248] sm:$0xff]
          %v981 = vld [vmem:[%s330 + $0x250] sm:$0xff]
          %v982 = vld [vmem:[%s330 + $0x258] sm:$0xff]
          %v983 = vld [vmem:[%s330 + $0x260] sm:$0xff]
          %v984 = vld [vmem:[%s330 + $0x268] sm:$0xff]
          %v985 = vld [vmem:[%s330 + $0x270] sm:$0xff]
          %v986 = vld [vmem:[%s330 + $0x278] sm:$0xff]
          %v987 = vld [vmem:[%s330 + $0x280] sm:$0xff]
          %v988 = vld [vmem:[%s330 + $0x288] sm:$0xff]
          %v989 = vld [vmem:[%s330 + $0x290] sm:$0xff]
          %v990 = vld [vmem:[%s330 + $0x298] sm:$0xff]
          %v991 = vld [vmem:[%s330 + $0x2a0] sm:$0xff]
          %v992 = vld [vmem:[%s330 + $0x2a8] sm:$0xff]
          %v993 = vld [vmem:[%s330 + $0x2b0] sm:$0xff]
          %v994 = vld [vmem:[%s330 + $0x2b8] sm:$0xff]
          %v995 = vld [vmem:[%s330 + $0x2c0] sm:$0xff]
          %v996 = vld [vmem:[%s330 + $0x2c8] sm:$0xff]
          %v997 = vld [vmem:[%s330 + $0x2d0] sm:$0xff]
          %v998 = vld [vmem:[%s330 + $0x2d8] sm:$0xff]
          %v999 = vld [vmem:[%s330 + $0x2e0] sm:$0xff]
          %v1000 = vld [vmem:[%s330 + $0x2e8] sm:$0xff]
          %v1001 = vld [vmem:[%s330 + $0x2f0] sm:$0xff]
          %v1002 = vld [vmem:[%s330 + $0x2f8] sm:$0xff]
          %v1003 = vld [vmem:[%s330 + $0x300] sm:$0xff]
          %v1004 = vld [vmem:[%s330 + $0x308] sm:$0xff]
          %v1005 = vld [vmem:[%s330 + $0x310] sm:$0xff]
          %v1006 = vld [vmem:[%s330 + $0x318] sm:$0xff]
          %v1007 = vld [vmem:[%s330 + $0x320] sm:$0xff]
          %v1008 = vld [vmem:[%s330 + $0x328] sm:$0xff]
          %v1009 = vld [vmem:[%s330 + $0x330] sm:$0xff]
          %v1010 = vld [vmem:[%s330 + $0x338] sm:$0xff]
          %v1011 = vld [vmem:[%s330 + $0x340] sm:$0xff]
          %v1012 = vld [vmem:[%s330 + $0x348] sm:$0xff]
          %v1013 = vld [vmem:[%s330 + $0x350] sm:$0xff]
          %v1014 = vld [vmem:[%s330 + $0x358] sm:$0xff]
          %v1015 = vld [vmem:[%s330 + $0x360] sm:$0xff]
          %v1016 = vld [vmem:[%s330 + $0x368] sm:$0xff]
          %v1017 = vld [vmem:[%s330 + $0x370] sm:$0xff]
          %v1018 = vld [vmem:[%s330 + $0x378] sm:$0xff]
          %v1019 = vld [vmem:[%s330 + $0x380] sm:$0xff]
          %v1020 = vld [vmem:[%s330 + $0x388] sm:$0xff]
          %v1021 = vld [vmem:[%s330 + $0x390] sm:$0xff]
          %v1022 = vld [vmem:[%s330 + $0x398] sm:$0xff]
          %v1023 = vld [vmem:[%s330 + $0x3a0] sm:$0xff]
          %v1024 = vld [vmem:[%s330 + $0x3a8] sm:$0xff]
          %v1025 = vld [vmem:[%s330 + $0x3b0] sm:$0xff]
          %v1026 = vld [vmem:[%s330 + $0x3b8] sm:$0xff]
          %v1027 = vld [vmem:[%s330 + $0x3c0] sm:$0xff]
          %v1028 = vld [vmem:[%s330 + $0x3c8] sm:$0xff]
          %v1029 = vld [vmem:[%s330 + $0x3d0] sm:$0xff]
          %v1030 = vld [vmem:[%s330 + $0x3d8] sm:$0xff]
          %v1031 = vld [vmem:[%s330 + $0x3e0] sm:$0xff]
          %v1032 = vld [vmem:[%s330 + $0x3e8] sm:$0xff]
          %v1033 = vld [vmem:[%s330 + $0x3f0] sm:$0xff]
          %v1034 = vld [vmem:[%s330 + $0x3f8] sm:$0xff]
          %v1035 = vld [vmem:[%s330 + $0x400] sm:$0xff]
          %v1036 = vld [vmem:[%s330 + $0x408] sm:$0xff]
          %v1037 = vld [vmem:[%s330 + $0x410] sm:$0xff]
          %v1038 = vld [vmem:[%s330 + $0x418] sm:$0xff]
          %v1039 = vld [vmem:[%s330 + $0x420] sm:$0xff]
          %v1040 = vld [vmem:[%s330 + $0x428] sm:$0xff]
          %v1041 = vld [vmem:[%s330 + $0x430] sm:$0xff]
          %v1042 = vld [vmem:[%s330 + $0x438] sm:$0xff]
          %v1043 = vld [vmem:[%s330 + $0x440] sm:$0xff]
          %v1044 = vld [vmem:[%s330 + $0x448] sm:$0xff]
          %v1045 = vld [vmem:[%s330 + $0x450] sm:$0xff]
          %v1046 = vld [vmem:[%s330 + $0x458] sm:$0xff]
          %v1047 = vld [vmem:[%s330 + $0x460] sm:$0xff]
          %v1048 = vld [vmem:[%s330 + $0x468] sm:$0xff]
          %v1049 = vld [vmem:[%s330 + $0x470] sm:$0xff]
          %v1050 = vld [vmem:[%s330 + $0x478] sm:$0xff]
          %v1051 = vld [vmem:[%s330 + $0x480] sm:$0xff]
          %v1052 = vld [vmem:[%s330 + $0x488] sm:$0xff]
          %v1053 = vld [vmem:[%s330 + $0x490] sm:$0xff]
          %v1054 = vld [vmem:[%s330 + $0x498] sm:$0xff]
          %v1055 = vld [vmem:[%s330 + $0x4a0] sm:$0xff]
          %v1056 = vld [vmem:[%s330 + $0x4a8] sm:$0xff]
          %v1057 = vld [vmem:[%s330 + $0x4b0] sm:$0xff]
          %v1058 = vld [vmem:[%s330 + $0x4b8] sm:$0xff]
          %v1059 = vld [vmem:[%s330 + $0x4c0] sm:$0xff]
          %v1060 = vld [vmem:[%s330 + $0x4c8] sm:$0xff]
          %v1061 = vld [vmem:[%s330 + $0x4d0] sm:$0xff]
          %v1062 = vld [vmem:[%s330 + $0x4d8] sm:$0xff]
          %v1063 = vld [vmem:[%s330 + $0x4e0] sm:$0xff]
          %v1064 = vld [vmem:[%s330 + $0x4e8] sm:$0xff]
          %v1065 = vld [vmem:[%s330 + $0x4f0] sm:$0xff]
          %v1066 = vld [vmem:[%s330 + $0x4f8] sm:$0xff]
          %v1067 = vld [vmem:[%s330 + $0x500] sm:$0xff]
          %v1068 = vld [vmem:[%s330 + $0x508] sm:$0xff]
          %v1069 = vld [vmem:[%s330 + $0x510] sm:$0xff]
          %v1070 = vld [vmem:[%s330 + $0x518] sm:$0xff]
          %v1071 = vld [vmem:[%s330 + $0x520] sm:$0xff]
          %v1072 = vld [vmem:[%s330 + $0x528] sm:$0xff]
          %v1073 = vld [vmem:[%s330 + $0x530] sm:$0xff]
          %v1074 = vld [vmem:[%s330 + $0x538] sm:$0xff]
          %v1075 = vld [vmem:[%s330 + $0x540] sm:$0xff]
          %v1076 = vld [vmem:[%s330 + $0x548] sm:$0xff]
          %v1077 = vld [vmem:[%s330 + $0x550] sm:$0xff]
          %v1078 = vld [vmem:[%s330 + $0x558] sm:$0xff]
          %v1079 = vld [vmem:[%s330 + $0x560] sm:$0xff]
          %v1080 = vld [vmem:[%s330 + $0x568] sm:$0xff]
          %v1081 = vld [vmem:[%s330 + $0x570] sm:$0xff]
          %v1082 = vld [vmem:[%s330 + $0x578] sm:$0xff]
          %v1083 = vld [vmem:[%s330 + $0x580] sm:$0xff]
          %v1084 = vld [vmem:[%s330 + $0x588] sm:$0xff]
          %v1085 = vld [vmem:[%s330 + $0x590] sm:$0xff]
          %v1086 = vld [vmem:[%s330 + $0x598] sm:$0xff]
          %v1087 = vld [vmem:[%s330 + $0x5a0] sm:$0xff]
          %v1088 = vld [vmem:[%s330 + $0x5a8] sm:$0xff]
          %v1089 = vld [vmem:[%s330 + $0x5b0] sm:$0xff]
          %v1090 = vld [vmem:[%s330 + $0x5b8] sm:$0xff]
          %v1091 = vld [vmem:[%s330 + $0x5c0] sm:$0xff]
          %v1092 = vld [vmem:[%s330 + $0x5c8] sm:$0xff]
          %v1093 = vld [vmem:[%s330 + $0x5d0] sm:$0xff]
          %v1094 = vld [vmem:[%s330 + $0x5d8] sm:$0xff]
          %v1095 = vld [vmem:[%s330 + $0x5e0] sm:$0xff]
          %v1096 = vld [vmem:[%s330 + $0x5e8] sm:$0xff]
          %v1097 = vld [vmem:[%s330 + $0x5f0] sm:$0xff]
          %v1098 = vld [vmem:[%s330 + $0x5f8] sm:$0xff]
          %v1099 = vld [vmem:[%s330 + $0x600] sm:$0xff]
          %v1100 = vld [vmem:[%s330 + $0x608] sm:$0xff]
          %v1101 = vld [vmem:[%s330 + $0x610] sm:$0xff]
          %v1102 = vld [vmem:[%s330 + $0x618] sm:$0xff]
          %v1103 = vld [vmem:[%s330 + $0x620] sm:$0xff]
          %v1104 = vld [vmem:[%s330 + $0x628] sm:$0xff]
          %v1105 = vld [vmem:[%s330 + $0x630] sm:$0xff]
          %v1106 = vld [vmem:[%s330 + $0x638] sm:$0xff]
          %v1107 = vld [vmem:[%s330 + $0x640] sm:$0xff]
          %v1108 = vld [vmem:[%s330 + $0x648] sm:$0xff]
          %v1109 = vld [vmem:[%s330 + $0x650] sm:$0xff]
          %v1110 = vld [vmem:[%s330 + $0x658] sm:$0xff]
          %v1111 = vld [vmem:[%s330 + $0x660] sm:$0xff]
          %v1112 = vld [vmem:[%s330 + $0x668] sm:$0xff]
          %v1113 = vld [vmem:[%s330 + $0x670] sm:$0xff]
          %v1114 = vld [vmem:[%s330 + $0x678] sm:$0xff]
          %v1115 = vld [vmem:[%s330 + $0x680] sm:$0xff]
          %v1116 = vld [vmem:[%s330 + $0x688] sm:$0xff]
          %v1117 = vld [vmem:[%s330 + $0x690] sm:$0xff]
          %v1118 = vld [vmem:[%s330 + $0x698] sm:$0xff]
          %v1119 = vld [vmem:[%s330 + $0x6a0] sm:$0xff]
          %v1120 = vld [vmem:[%s330 + $0x6a8] sm:$0xff]
          %v1121 = vld [vmem:[%s330 + $0x6b0] sm:$0xff]
          %v1122 = vld [vmem:[%s330 + $0x6b8] sm:$0xff]
          %v1123 = vld [vmem:[%s330 + $0x6c0] sm:$0xff]
          %v1124 = vld [vmem:[%s330 + $0x6c8] sm:$0xff]
          %v1125 = vld [vmem:[%s330 + $0x6d0] sm:$0xff]
          %v1126 = vld [vmem:[%s330 + $0x6d8] sm:$0xff]
          %v1127 = vld [vmem:[%s330 + $0x6e0] sm:$0xff]
          %v1128 = vld [vmem:[%s330 + $0x6e8] sm:$0xff]
          %v1129 = vld [vmem:[%s330 + $0x6f0] sm:$0xff]
          %v1130 = vld [vmem:[%s330 + $0x6f8] sm:$0xff]
          %v1131 = vld [vmem:[%s330 + $0x700] sm:$0xff]
          %v1132 = vld [vmem:[%s330 + $0x708] sm:$0xff]
          %v1133 = vld [vmem:[%s330 + $0x710] sm:$0xff]
          %v1134 = vld [vmem:[%s330 + $0x718] sm:$0xff]
          %v1135 = vld [vmem:[%s330 + $0x720] sm:$0xff]
          %v1136 = vld [vmem:[%s330 + $0x728] sm:$0xff]
          %v1137 = vld [vmem:[%s330 + $0x730] sm:$0xff]
          %v1138 = vld [vmem:[%s330 + $0x738] sm:$0xff]
          %v1139 = vld [vmem:[%s330 + $0x740] sm:$0xff]
          %v1140 = vld [vmem:[%s330 + $0x748] sm:$0xff]
          %v1141 = vld [vmem:[%s330 + $0x750] sm:$0xff]
          %v1142 = vld [vmem:[%s330 + $0x758] sm:$0xff]
          %v1143 = vld [vmem:[%s330 + $0x760] sm:$0xff]
          %v1144 = vld [vmem:[%s330 + $0x768] sm:$0xff]
          %v1145 = vld [vmem:[%s330 + $0x770] sm:$0xff]
          %v1146 = vld [vmem:[%s330 + $0x778] sm:$0xff]
          %v1147 = vld [vmem:[%s330 + $0x780] sm:$0xff]
          %v1148 = vld [vmem:[%s330 + $0x788] sm:$0xff]
          %v1149 = vld [vmem:[%s330 + $0x790] sm:$0xff]
          %v1150 = vld [vmem:[%s330 + $0x798] sm:$0xff]
          %v1151 = vld [vmem:[%s330 + $0x7a0] sm:$0xff]
          %v1152 = vld [vmem:[%s330 + $0x7a8] sm:$0xff]
          %v1153 = vld [vmem:[%s330 + $0x7b0] sm:$0xff]
          %v1154 = vld [vmem:[%s330 + $0x7b8] sm:$0xff]
          %v1155 = vld [vmem:[%s330 + $0x7c0] sm:$0xff]
          %v1156 = vld [vmem:[%s330 + $0x7c8] sm:$0xff]
          %v1157 = vld [vmem:[%s330 + $0x7d0] sm:$0xff]
          %v1158 = vld [vmem:[%s330 + $0x7d8] sm:$0xff]
          %v1159 = vld [vmem:[%s330 + $0x7e0] sm:$0xff]
          %v1160 = vld [vmem:[%s330 + $0x7e8] sm:$0xff]
          %v1161 = vld [vmem:[%s330 + $0x7f0] sm:$0xff]
          %v1162 = vld [vmem:[%s330 + $0x7f8] sm:$0xff]
          %v1163 = vunpack.c.l.s8.bf16 %v907
          %v1164 = vunpack.c.l.s8.bf16 %v908
          %v1165 = vunpack.c.l.s8.bf16 %v909
          %v1166 = vunpack.c.l.s8.bf16 %v910
          %v1167 = vunpack.c.l.s8.bf16 %v911
          %v1168 = vunpack.c.l.s8.bf16 %v912
          %v1169 = vunpack.c.l.s8.bf16 %v913
          %v1170 = vunpack.c.l.s8.bf16 %v914
          %v1171 = vunpack.c.h.s8.bf16 %v907
          %v1172 = vunpack.c.h.s8.bf16 %v908
          %v1173 = vunpack.c.h.s8.bf16 %v909
          %v1174 = vunpack.c.h.s8.bf16 %v910
          %v1175 = vunpack.c.h.s8.bf16 %v911
          %v1176 = vunpack.c.h.s8.bf16 %v912
          %v1177 = vunpack.c.h.s8.bf16 %v913
          %v1178 = vunpack.c.h.s8.bf16 %v914
          %v1179 = vunpack.c.l.s8.bf16 %v915
          %v1180 = vunpack.c.l.s8.bf16 %v916
          %v1181 = vunpack.c.l.s8.bf16 %v917
          %v1182 = vunpack.c.l.s8.bf16 %v918
          %v1183 = vunpack.c.l.s8.bf16 %v919
          %v1184 = vunpack.c.l.s8.bf16 %v920
          %v1185 = vunpack.c.l.s8.bf16 %v921
          %v1186 = vunpack.c.l.s8.bf16 %v922
          %v1187 = vunpack.c.h.s8.bf16 %v915
          %v1188 = vunpack.c.h.s8.bf16 %v916
          %v1189 = vunpack.c.h.s8.bf16 %v917
          %v1190 = vunpack.c.h.s8.bf16 %v918
          %v1191 = vunpack.c.h.s8.bf16 %v919
          %v1192 = vunpack.c.h.s8.bf16 %v920
          %v1193 = vunpack.c.h.s8.bf16 %v921
          %v1194 = vunpack.c.h.s8.bf16 %v922
          %v1195 = vunpack.c.l.s8.bf16 %v923
          %v1196 = vunpack.c.l.s8.bf16 %v924
          %v1197 = vunpack.c.l.s8.bf16 %v925
          %v1198 = vunpack.c.l.s8.bf16 %v926
          %v1199 = vunpack.c.l.s8.bf16 %v927
          %v1200 = vunpack.c.l.s8.bf16 %v928
          %v1201 = vunpack.c.l.s8.bf16 %v929
          %v1202 = vunpack.c.l.s8.bf16 %v930
          %v1203 = vunpack.c.h.s8.bf16 %v923
          %v1204 = vunpack.c.h.s8.bf16 %v924
          %v1205 = vunpack.c.h.s8.bf16 %v925
          %v1206 = vunpack.c.h.s8.bf16 %v926
          %v1207 = vunpack.c.h.s8.bf16 %v927
          %v1208 = vunpack.c.h.s8.bf16 %v928
          %v1209 = vunpack.c.h.s8.bf16 %v929
          %v1210 = vunpack.c.h.s8.bf16 %v930
          %v1211 = vunpack.c.l.s8.bf16 %v931
          %v1212 = vunpack.c.l.s8.bf16 %v932
          %v1213 = vunpack.c.l.s8.bf16 %v933
          %v1214 = vunpack.c.l.s8.bf16 %v934
          %v1215 = vunpack.c.l.s8.bf16 %v935
          %v1216 = vunpack.c.l.s8.bf16 %v936
          %v1217 = vunpack.c.l.s8.bf16 %v937
          %v1218 = vunpack.c.l.s8.bf16 %v938
          %v1219 = vunpack.c.h.s8.bf16 %v931
          %v1220 = vunpack.c.h.s8.bf16 %v932
          %v1221 = vunpack.c.h.s8.bf16 %v933
          %v1222 = vunpack.c.h.s8.bf16 %v934
          %v1223 = vunpack.c.h.s8.bf16 %v935
          %v1224 = vunpack.c.h.s8.bf16 %v936
          %v1225 = vunpack.c.h.s8.bf16 %v937
          %v1226 = vunpack.c.h.s8.bf16 %v938
          %v1227 = vunpack.c.l.s8.bf16 %v939
          %v1228 = vunpack.c.l.s8.bf16 %v940
          %v1229 = vunpack.c.l.s8.bf16 %v941
          %v1230 = vunpack.c.l.s8.bf16 %v942
          %v1231 = vunpack.c.l.s8.bf16 %v943
          %v1232 = vunpack.c.l.s8.bf16 %v944
          %v1233 = vunpack.c.l.s8.bf16 %v945
          %v1234 = vunpack.c.l.s8.bf16 %v946
          %v1235 = vunpack.c.h.s8.bf16 %v939
          %v1236 = vunpack.c.h.s8.bf16 %v940
          %v1237 = vunpack.c.h.s8.bf16 %v941
          %v1238 = vunpack.c.h.s8.bf16 %v942
          %v1239 = vunpack.c.h.s8.bf16 %v943
          %v1240 = vunpack.c.h.s8.bf16 %v944
          %v1241 = vunpack.c.h.s8.bf16 %v945
          %v1242 = vunpack.c.h.s8.bf16 %v946
          %v1243 = vunpack.c.l.s8.bf16 %v947
          %v1244 = vunpack.c.l.s8.bf16 %v948
          %v1245 = vunpack.c.l.s8.bf16 %v949
          %v1246 = vunpack.c.l.s8.bf16 %v950
          %v1247 = vunpack.c.l.s8.bf16 %v951
          %v1248 = vunpack.c.l.s8.bf16 %v952
          %v1249 = vunpack.c.l.s8.bf16 %v953
          %v1250 = vunpack.c.l.s8.bf16 %v954
          %v1251 = vunpack.c.h.s8.bf16 %v947
          %v1252 = vunpack.c.h.s8.bf16 %v948
          %v1253 = vunpack.c.h.s8.bf16 %v949
          %v1254 = vunpack.c.h.s8.bf16 %v950
          %v1255 = vunpack.c.h.s8.bf16 %v951
          %v1256 = vunpack.c.h.s8.bf16 %v952
          %v1257 = vunpack.c.h.s8.bf16 %v953
          %v1258 = vunpack.c.h.s8.bf16 %v954
          %v1259 = vunpack.c.l.s8.bf16 %v955
          %v1260 = vunpack.c.l.s8.bf16 %v956
          %v1261 = vunpack.c.l.s8.bf16 %v957
          %v1262 = vunpack.c.l.s8.bf16 %v958
          %v1263 = vunpack.c.l.s8.bf16 %v959
          %v1264 = vunpack.c.l.s8.bf16 %v960
          %v1265 = vunpack.c.l.s8.bf16 %v961
          %v1266 = vunpack.c.l.s8.bf16 %v962
          %v1267 = vunpack.c.h.s8.bf16 %v955
          %v1268 = vunpack.c.h.s8.bf16 %v956
          %v1269 = vunpack.c.h.s8.bf16 %v957
          %v1270 = vunpack.c.h.s8.bf16 %v958
          %v1271 = vunpack.c.h.s8.bf16 %v959
          %v1272 = vunpack.c.h.s8.bf16 %v960
          %v1273 = vunpack.c.h.s8.bf16 %v961
          %v1274 = vunpack.c.h.s8.bf16 %v962
          %v1275 = vunpack.c.l.s8.bf16 %v963
          %v1276 = vunpack.c.l.s8.bf16 %v964
          %v1277 = vunpack.c.l.s8.bf16 %v965
          %v1278 = vunpack.c.l.s8.bf16 %v966
          %v1279 = vunpack.c.l.s8.bf16 %v967
          %v1280 = vunpack.c.l.s8.bf16 %v968
          %v1281 = vunpack.c.l.s8.bf16 %v969
          %v1282 = vunpack.c.l.s8.bf16 %v970
          %v1283 = vunpack.c.h.s8.bf16 %v963
          %v1284 = vunpack.c.h.s8.bf16 %v964
          %v1285 = vunpack.c.h.s8.bf16 %v965
          %v1286 = vunpack.c.h.s8.bf16 %v966
          %v1287 = vunpack.c.h.s8.bf16 %v967
          %v1288 = vunpack.c.h.s8.bf16 %v968
          %v1289 = vunpack.c.h.s8.bf16 %v969
          %v1290 = vunpack.c.h.s8.bf16 %v970
          %v1291 = vunpack.c.l.s8.bf16 %v971
          %v1292 = vunpack.c.l.s8.bf16 %v972
          %v1293 = vunpack.c.l.s8.bf16 %v973
          %v1294 = vunpack.c.l.s8.bf16 %v974
          %v1295 = vunpack.c.l.s8.bf16 %v975
          %v1296 = vunpack.c.l.s8.bf16 %v976
          %v1297 = vunpack.c.l.s8.bf16 %v977
          %v1298 = vunpack.c.l.s8.bf16 %v978
          %v1299 = vunpack.c.h.s8.bf16 %v971
          %v1300 = vunpack.c.h.s8.bf16 %v972
          %v1301 = vunpack.c.h.s8.bf16 %v973
          %v1302 = vunpack.c.h.s8.bf16 %v974
          %v1303 = vunpack.c.h.s8.bf16 %v975
          %v1304 = vunpack.c.h.s8.bf16 %v976
          %v1305 = vunpack.c.h.s8.bf16 %v977
          %v1306 = vunpack.c.h.s8.bf16 %v978
          %v1307 = vunpack.c.l.s8.bf16 %v979
          %v1308 = vunpack.c.l.s8.bf16 %v980
          %v1309 = vunpack.c.l.s8.bf16 %v981
          %v1310 = vunpack.c.l.s8.bf16 %v982
          %v1311 = vunpack.c.l.s8.bf16 %v983
          %v1312 = vunpack.c.l.s8.bf16 %v984
          %v1313 = vunpack.c.l.s8.bf16 %v985
          %v1314 = vunpack.c.l.s8.bf16 %v986
          %v1315 = vunpack.c.h.s8.bf16 %v979
          %v1316 = vunpack.c.h.s8.bf16 %v980
          %v1317 = vunpack.c.h.s8.bf16 %v981
          %v1318 = vunpack.c.h.s8.bf16 %v982
          %v1319 = vunpack.c.h.s8.bf16 %v983
          %v1320 = vunpack.c.h.s8.bf16 %v984
          %v1321 = vunpack.c.h.s8.bf16 %v985
          %v1322 = vunpack.c.h.s8.bf16 %v986
          %v1323 = vunpack.c.l.s8.bf16 %v987
          %v1324 = vunpack.c.l.s8.bf16 %v988
          %v1325 = vunpack.c.l.s8.bf16 %v989
          %v1326 = vunpack.c.l.s8.bf16 %v990
          %v1327 = vunpack.c.l.s8.bf16 %v991
          %v1328 = vunpack.c.l.s8.bf16 %v992
          %v1329 = vunpack.c.l.s8.bf16 %v993
          %v1330 = vunpack.c.l.s8.bf16 %v994
          %v1331 = vunpack.c.h.s8.bf16 %v987
          %v1332 = vunpack.c.h.s8.bf16 %v988
          %v1333 = vunpack.c.h.s8.bf16 %v989
          %v1334 = vunpack.c.h.s8.bf16 %v990
          %v1335 = vunpack.c.h.s8.bf16 %v991
          %v1336 = vunpack.c.h.s8.bf16 %v992
          %v1337 = vunpack.c.h.s8.bf16 %v993
          %v1338 = vunpack.c.h.s8.bf16 %v994
          %v1339 = vunpack.c.l.s8.bf16 %v995
          %v1340 = vunpack.c.l.s8.bf16 %v996
          %v1341 = vunpack.c.l.s8.bf16 %v997
          %v1342 = vunpack.c.l.s8.bf16 %v998
          %v1343 = vunpack.c.l.s8.bf16 %v999
          %v1344 = vunpack.c.l.s8.bf16 %v1000
          %v1345 = vunpack.c.l.s8.bf16 %v1001
          %v1346 = vunpack.c.l.s8.bf16 %v1002
          %v1347 = vunpack.c.h.s8.bf16 %v995
          %v1348 = vunpack.c.h.s8.bf16 %v996
          %v1349 = vunpack.c.h.s8.bf16 %v997
          %v1350 = vunpack.c.h.s8.bf16 %v998
          %v1351 = vunpack.c.h.s8.bf16 %v999
          %v1352 = vunpack.c.h.s8.bf16 %v1000
          %v1353 = vunpack.c.h.s8.bf16 %v1001
          %v1354 = vunpack.c.h.s8.bf16 %v1002
          %v1355 = vunpack.c.l.s8.bf16 %v1003
          %v1356 = vunpack.c.l.s8.bf16 %v1004
          %v1357 = vunpack.c.l.s8.bf16 %v1005
          %v1358 = vunpack.c.l.s8.bf16 %v1006
          %v1359 = vunpack.c.l.s8.bf16 %v1007
          %v1360 = vunpack.c.l.s8.bf16 %v1008
          %v1361 = vunpack.c.l.s8.bf16 %v1009
          %v1362 = vunpack.c.l.s8.bf16 %v1010
          %v1363 = vunpack.c.h.s8.bf16 %v1003
          %v1364 = vunpack.c.h.s8.bf16 %v1004
          %v1365 = vunpack.c.h.s8.bf16 %v1005
          %v1366 = vunpack.c.h.s8.bf16 %v1006
          %v1367 = vunpack.c.h.s8.bf16 %v1007
          %v1368 = vunpack.c.h.s8.bf16 %v1008
          %v1369 = vunpack.c.h.s8.bf16 %v1009
          %v1370 = vunpack.c.h.s8.bf16 %v1010
          %v1371 = vunpack.c.l.s8.bf16 %v1011
          %v1372 = vunpack.c.l.s8.bf16 %v1012
          %v1373 = vunpack.c.l.s8.bf16 %v1013
          %v1374 = vunpack.c.l.s8.bf16 %v1014
          %v1375 = vunpack.c.l.s8.bf16 %v1015
          %v1376 = vunpack.c.l.s8.bf16 %v1016
          %v1377 = vunpack.c.l.s8.bf16 %v1017
          %v1378 = vunpack.c.l.s8.bf16 %v1018
          %v1379 = vunpack.c.h.s8.bf16 %v1011
          %v1380 = vunpack.c.h.s8.bf16 %v1012
          %v1381 = vunpack.c.h.s8.bf16 %v1013
          %v1382 = vunpack.c.h.s8.bf16 %v1014
          %v1383 = vunpack.c.h.s8.bf16 %v1015
          %v1384 = vunpack.c.h.s8.bf16 %v1016
          %v1385 = vunpack.c.h.s8.bf16 %v1017
          %v1386 = vunpack.c.h.s8.bf16 %v1018
          %v1387 = vunpack.c.l.s8.bf16 %v1019
          %v1388 = vunpack.c.l.s8.bf16 %v1020
          %v1389 = vunpack.c.l.s8.bf16 %v1021
          %v1390 = vunpack.c.l.s8.bf16 %v1022
          %v1391 = vunpack.c.l.s8.bf16 %v1023
          %v1392 = vunpack.c.l.s8.bf16 %v1024
          %v1393 = vunpack.c.l.s8.bf16 %v1025
          %v1394 = vunpack.c.l.s8.bf16 %v1026
          %v1395 = vunpack.c.h.s8.bf16 %v1019
          %v1396 = vunpack.c.h.s8.bf16 %v1020
          %v1397 = vunpack.c.h.s8.bf16 %v1021
          %v1398 = vunpack.c.h.s8.bf16 %v1022
          %v1399 = vunpack.c.h.s8.bf16 %v1023
          %v1400 = vunpack.c.h.s8.bf16 %v1024
          %v1401 = vunpack.c.h.s8.bf16 %v1025
          %v1402 = vunpack.c.h.s8.bf16 %v1026
          %v1403 = vunpack.c.l.s8.bf16 %v1027
          %v1404 = vunpack.c.l.s8.bf16 %v1028
          %v1405 = vunpack.c.l.s8.bf16 %v1029
          %v1406 = vunpack.c.l.s8.bf16 %v1030
          %v1407 = vunpack.c.l.s8.bf16 %v1031
          %v1408 = vunpack.c.l.s8.bf16 %v1032
          %v1409 = vunpack.c.l.s8.bf16 %v1033
          %v1410 = vunpack.c.l.s8.bf16 %v1034
          %v1411 = vunpack.c.h.s8.bf16 %v1027
          %v1412 = vunpack.c.h.s8.bf16 %v1028
          %v1413 = vunpack.c.h.s8.bf16 %v1029
          %v1414 = vunpack.c.h.s8.bf16 %v1030
          %v1415 = vunpack.c.h.s8.bf16 %v1031
          %v1416 = vunpack.c.h.s8.bf16 %v1032
          %v1417 = vunpack.c.h.s8.bf16 %v1033
          %v1418 = vunpack.c.h.s8.bf16 %v1034
          %v1419 = vunpack.c.l.s8.bf16 %v1035
          %v1420 = vunpack.c.l.s8.bf16 %v1036
          %v1421 = vunpack.c.l.s8.bf16 %v1037
          %v1422 = vunpack.c.l.s8.bf16 %v1038
          %v1423 = vunpack.c.l.s8.bf16 %v1039
          %v1424 = vunpack.c.l.s8.bf16 %v1040
          %v1425 = vunpack.c.l.s8.bf16 %v1041
          %v1426 = vunpack.c.l.s8.bf16 %v1042
          %v1427 = vunpack.c.h.s8.bf16 %v1035
          %v1428 = vunpack.c.h.s8.bf16 %v1036
          %v1429 = vunpack.c.h.s8.bf16 %v1037
          %v1430 = vunpack.c.h.s8.bf16 %v1038
          %v1431 = vunpack.c.h.s8.bf16 %v1039
          %v1432 = vunpack.c.h.s8.bf16 %v1040
          %v1433 = vunpack.c.h.s8.bf16 %v1041
          %v1434 = vunpack.c.h.s8.bf16 %v1042
          %v1435 = vunpack.c.l.s8.bf16 %v1043
          %v1436 = vunpack.c.l.s8.bf16 %v1044
          %v1437 = vunpack.c.l.s8.bf16 %v1045
          %v1438 = vunpack.c.l.s8.bf16 %v1046
          %v1439 = vunpack.c.l.s8.bf16 %v1047
          %v1440 = vunpack.c.l.s8.bf16 %v1048
          %v1441 = vunpack.c.l.s8.bf16 %v1049
          %v1442 = vunpack.c.l.s8.bf16 %v1050
          %v1443 = vunpack.c.h.s8.bf16 %v1043
          %v1444 = vunpack.c.h.s8.bf16 %v1044
          %v1445 = vunpack.c.h.s8.bf16 %v1045
          %v1446 = vunpack.c.h.s8.bf16 %v1046
          %v1447 = vunpack.c.h.s8.bf16 %v1047
          %v1448 = vunpack.c.h.s8.bf16 %v1048
          %v1449 = vunpack.c.h.s8.bf16 %v1049
          %v1450 = vunpack.c.h.s8.bf16 %v1050
          %v1451 = vunpack.c.l.s8.bf16 %v1051
          %v1452 = vunpack.c.l.s8.bf16 %v1052
          %v1453 = vunpack.c.l.s8.bf16 %v1053
          %v1454 = vunpack.c.l.s8.bf16 %v1054
          %v1455 = vunpack.c.l.s8.bf16 %v1055
          %v1456 = vunpack.c.l.s8.bf16 %v1056
          %v1457 = vunpack.c.l.s8.bf16 %v1057
          %v1458 = vunpack.c.l.s8.bf16 %v1058
          %v1459 = vunpack.c.h.s8.bf16 %v1051
          %v1460 = vunpack.c.h.s8.bf16 %v1052
          %v1461 = vunpack.c.h.s8.bf16 %v1053
          %v1462 = vunpack.c.h.s8.bf16 %v1054
          %v1463 = vunpack.c.h.s8.bf16 %v1055
          %v1464 = vunpack.c.h.s8.bf16 %v1056
          %v1465 = vunpack.c.h.s8.bf16 %v1057
          %v1466 = vunpack.c.h.s8.bf16 %v1058
          %v1467 = vunpack.c.l.s8.bf16 %v1059
          %v1468 = vunpack.c.l.s8.bf16 %v1060
          %v1469 = vunpack.c.l.s8.bf16 %v1061
          %v1470 = vunpack.c.l.s8.bf16 %v1062
          %v1471 = vunpack.c.l.s8.bf16 %v1063
          %v1472 = vunpack.c.l.s8.bf16 %v1064
          %v1473 = vunpack.c.l.s8.bf16 %v1065
          %v1474 = vunpack.c.l.s8.bf16 %v1066
          %v1475 = vunpack.c.h.s8.bf16 %v1059
          %v1476 = vunpack.c.h.s8.bf16 %v1060
          %v1477 = vunpack.c.h.s8.bf16 %v1061
          %v1478 = vunpack.c.h.s8.bf16 %v1062
          %v1479 = vunpack.c.h.s8.bf16 %v1063
          %v1480 = vunpack.c.h.s8.bf16 %v1064
          %v1481 = vunpack.c.h.s8.bf16 %v1065
          %v1482 = vunpack.c.h.s8.bf16 %v1066
          %v1483 = vunpack.c.l.s8.bf16 %v1067
          %v1484 = vunpack.c.l.s8.bf16 %v1068
          %v1485 = vunpack.c.l.s8.bf16 %v1069
          %v1486 = vunpack.c.l.s8.bf16 %v1070
          %v1487 = vunpack.c.l.s8.bf16 %v1071
          %v1488 = vunpack.c.l.s8.bf16 %v1072
          %v1489 = vunpack.c.l.s8.bf16 %v1073
          %v1490 = vunpack.c.l.s8.bf16 %v1074
          %v1491 = vunpack.c.h.s8.bf16 %v1067
          %v1492 = vunpack.c.h.s8.bf16 %v1068
          %v1493 = vunpack.c.h.s8.bf16 %v1069
          %v1494 = vunpack.c.h.s8.bf16 %v1070
          %v1495 = vunpack.c.h.s8.bf16 %v1071
          %v1496 = vunpack.c.h.s8.bf16 %v1072
          %v1497 = vunpack.c.h.s8.bf16 %v1073
          %v1498 = vunpack.c.h.s8.bf16 %v1074
          %v1499 = vunpack.c.l.s8.bf16 %v1075
          %v1500 = vunpack.c.l.s8.bf16 %v1076
          %v1501 = vunpack.c.l.s8.bf16 %v1077
          %v1502 = vunpack.c.l.s8.bf16 %v1078
          %v1503 = vunpack.c.l.s8.bf16 %v1079
          %v1504 = vunpack.c.l.s8.bf16 %v1080
          %v1505 = vunpack.c.l.s8.bf16 %v1081
          %v1506 = vunpack.c.l.s8.bf16 %v1082
          %v1507 = vunpack.c.h.s8.bf16 %v1075
          %v1508 = vunpack.c.h.s8.bf16 %v1076
          %v1509 = vunpack.c.h.s8.bf16 %v1077
          %v1510 = vunpack.c.h.s8.bf16 %v1078
          %v1511 = vunpack.c.h.s8.bf16 %v1079
          %v1512 = vunpack.c.h.s8.bf16 %v1080
          %v1513 = vunpack.c.h.s8.bf16 %v1081
          %v1514 = vunpack.c.h.s8.bf16 %v1082
          %v1515 = vunpack.c.l.s8.bf16 %v1083
          %v1516 = vunpack.c.l.s8.bf16 %v1084
          %v1517 = vunpack.c.l.s8.bf16 %v1085
          %v1518 = vunpack.c.l.s8.bf16 %v1086
          %v1519 = vunpack.c.l.s8.bf16 %v1087
          %v1520 = vunpack.c.l.s8.bf16 %v1088
          %v1521 = vunpack.c.l.s8.bf16 %v1089
          %v1522 = vunpack.c.l.s8.bf16 %v1090
          %v1523 = vunpack.c.h.s8.bf16 %v1083
          %v1524 = vunpack.c.h.s8.bf16 %v1084
          %v1525 = vunpack.c.h.s8.bf16 %v1085
          %v1526 = vunpack.c.h.s8.bf16 %v1086
          %v1527 = vunpack.c.h.s8.bf16 %v1087
          %v1528 = vunpack.c.h.s8.bf16 %v1088
          %v1529 = vunpack.c.h.s8.bf16 %v1089
          %v1530 = vunpack.c.h.s8.bf16 %v1090
          %v1531 = vunpack.c.l.s8.bf16 %v1091
          %v1532 = vunpack.c.l.s8.bf16 %v1092
          %v1533 = vunpack.c.l.s8.bf16 %v1093
          %v1534 = vunpack.c.l.s8.bf16 %v1094
          %v1535 = vunpack.c.l.s8.bf16 %v1095
          %v1536 = vunpack.c.l.s8.bf16 %v1096
          %v1537 = vunpack.c.l.s8.bf16 %v1097
          %v1538 = vunpack.c.l.s8.bf16 %v1098
          %v1539 = vunpack.c.h.s8.bf16 %v1091
          %v1540 = vunpack.c.h.s8.bf16 %v1092
          %v1541 = vunpack.c.h.s8.bf16 %v1093
          %v1542 = vunpack.c.h.s8.bf16 %v1094
          %v1543 = vunpack.c.h.s8.bf16 %v1095
          %v1544 = vunpack.c.h.s8.bf16 %v1096
          %v1545 = vunpack.c.h.s8.bf16 %v1097
          %v1546 = vunpack.c.h.s8.bf16 %v1098
          %v1547 = vunpack.c.l.s8.bf16 %v1099
          %v1548 = vunpack.c.l.s8.bf16 %v1100
          %v1549 = vunpack.c.l.s8.bf16 %v1101
          %v1550 = vunpack.c.l.s8.bf16 %v1102
          %v1551 = vunpack.c.l.s8.bf16 %v1103
          %v1552 = vunpack.c.l.s8.bf16 %v1104
          %v1553 = vunpack.c.l.s8.bf16 %v1105
          %v1554 = vunpack.c.l.s8.bf16 %v1106
          %v1555 = vunpack.c.h.s8.bf16 %v1099
          %v1556 = vunpack.c.h.s8.bf16 %v1100
          %v1557 = vunpack.c.h.s8.bf16 %v1101
          %v1558 = vunpack.c.h.s8.bf16 %v1102
          %v1559 = vunpack.c.h.s8.bf16 %v1103
          %v1560 = vunpack.c.h.s8.bf16 %v1104
          %v1561 = vunpack.c.h.s8.bf16 %v1105
          %v1562 = vunpack.c.h.s8.bf16 %v1106
          %v1563 = vunpack.c.l.s8.bf16 %v1107
          %v1564 = vunpack.c.l.s8.bf16 %v1108
          %v1565 = vunpack.c.l.s8.bf16 %v1109
          %v1566 = vunpack.c.l.s8.bf16 %v1110
          %v1567 = vunpack.c.l.s8.bf16 %v1111
          %v1568 = vunpack.c.l.s8.bf16 %v1112
          %v1569 = vunpack.c.l.s8.bf16 %v1113
          %v1570 = vunpack.c.l.s8.bf16 %v1114
          %v1571 = vunpack.c.h.s8.bf16 %v1107
          %v1572 = vunpack.c.h.s8.bf16 %v1108
          %v1573 = vunpack.c.h.s8.bf16 %v1109
          %v1574 = vunpack.c.h.s8.bf16 %v1110
          %v1575 = vunpack.c.h.s8.bf16 %v1111
          %v1576 = vunpack.c.h.s8.bf16 %v1112
          %v1577 = vunpack.c.h.s8.bf16 %v1113
          %v1578 = vunpack.c.h.s8.bf16 %v1114
          %v1579 = vunpack.c.l.s8.bf16 %v1115
          %v1580 = vunpack.c.l.s8.bf16 %v1116
          %v1581 = vunpack.c.l.s8.bf16 %v1117
          %v1582 = vunpack.c.l.s8.bf16 %v1118
          %v1583 = vunpack.c.l.s8.bf16 %v1119
          %v1584 = vunpack.c.l.s8.bf16 %v1120
          %v1585 = vunpack.c.l.s8.bf16 %v1121
          %v1586 = vunpack.c.l.s8.bf16 %v1122
          %v1587 = vunpack.c.h.s8.bf16 %v1115
          %v1588 = vunpack.c.h.s8.bf16 %v1116
          %v1589 = vunpack.c.h.s8.bf16 %v1117
          %v1590 = vunpack.c.h.s8.bf16 %v1118
          %v1591 = vunpack.c.h.s8.bf16 %v1119
          %v1592 = vunpack.c.h.s8.bf16 %v1120
          %v1593 = vunpack.c.h.s8.bf16 %v1121
          %v1594 = vunpack.c.h.s8.bf16 %v1122
          %v1595 = vunpack.c.l.s8.bf16 %v1123
          %v1596 = vunpack.c.l.s8.bf16 %v1124
          %v1597 = vunpack.c.l.s8.bf16 %v1125
          %v1598 = vunpack.c.l.s8.bf16 %v1126
          %v1599 = vunpack.c.l.s8.bf16 %v1127
          %v1600 = vunpack.c.l.s8.bf16 %v1128
          %v1601 = vunpack.c.l.s8.bf16 %v1129
          %v1602 = vunpack.c.l.s8.bf16 %v1130
          %v1603 = vunpack.c.h.s8.bf16 %v1123
          %v1604 = vunpack.c.h.s8.bf16 %v1124
          %v1605 = vunpack.c.h.s8.bf16 %v1125
          %v1606 = vunpack.c.h.s8.bf16 %v1126
          %v1607 = vunpack.c.h.s8.bf16 %v1127
          %v1608 = vunpack.c.h.s8.bf16 %v1128
          %v1609 = vunpack.c.h.s8.bf16 %v1129
          %v1610 = vunpack.c.h.s8.bf16 %v1130
          %v1611 = vunpack.c.l.s8.bf16 %v1131
          %v1612 = vunpack.c.l.s8.bf16 %v1132
          %v1613 = vunpack.c.l.s8.bf16 %v1133
          %v1614 = vunpack.c.l.s8.bf16 %v1134
          %v1615 = vunpack.c.l.s8.bf16 %v1135
          %v1616 = vunpack.c.l.s8.bf16 %v1136
          %v1617 = vunpack.c.l.s8.bf16 %v1137
          %v1618 = vunpack.c.l.s8.bf16 %v1138
          %v1619 = vunpack.c.h.s8.bf16 %v1131
          %v1620 = vunpack.c.h.s8.bf16 %v1132
          %v1621 = vunpack.c.h.s8.bf16 %v1133
          %v1622 = vunpack.c.h.s8.bf16 %v1134
          %v1623 = vunpack.c.h.s8.bf16 %v1135
          %v1624 = vunpack.c.h.s8.bf16 %v1136
          %v1625 = vunpack.c.h.s8.bf16 %v1137
          %v1626 = vunpack.c.h.s8.bf16 %v1138
          %v1627 = vunpack.c.l.s8.bf16 %v1139
          %v1628 = vunpack.c.l.s8.bf16 %v1140
          %v1629 = vunpack.c.l.s8.bf16 %v1141
          %v1630 = vunpack.c.l.s8.bf16 %v1142
          %v1631 = vunpack.c.l.s8.bf16 %v1143
          %v1632 = vunpack.c.l.s8.bf16 %v1144
          %v1633 = vunpack.c.l.s8.bf16 %v1145
          %v1634 = vunpack.c.l.s8.bf16 %v1146
          %v1635 = vunpack.c.h.s8.bf16 %v1139
          %v1636 = vunpack.c.h.s8.bf16 %v1140
          %v1637 = vunpack.c.h.s8.bf16 %v1141
          %v1638 = vunpack.c.h.s8.bf16 %v1142
          %v1639 = vunpack.c.h.s8.bf16 %v1143
          %v1640 = vunpack.c.h.s8.bf16 %v1144
          %v1641 = vunpack.c.h.s8.bf16 %v1145
          %v1642 = vunpack.c.h.s8.bf16 %v1146
          %v1643 = vunpack.c.l.s8.bf16 %v1147
          %v1644 = vunpack.c.l.s8.bf16 %v1148
          %v1645 = vunpack.c.l.s8.bf16 %v1149
          %v1646 = vunpack.c.l.s8.bf16 %v1150
          %v1647 = vunpack.c.l.s8.bf16 %v1151
          %v1648 = vunpack.c.l.s8.bf16 %v1152
          %v1649 = vunpack.c.l.s8.bf16 %v1153
          %v1650 = vunpack.c.l.s8.bf16 %v1154
          %v1651 = vunpack.c.h.s8.bf16 %v1147
          %v1652 = vunpack.c.h.s8.bf16 %v1148
          %v1653 = vunpack.c.h.s8.bf16 %v1149
          %v1654 = vunpack.c.h.s8.bf16 %v1150
          %v1655 = vunpack.c.h.s8.bf16 %v1151
          %v1656 = vunpack.c.h.s8.bf16 %v1152
          %v1657 = vunpack.c.h.s8.bf16 %v1153
          %v1658 = vunpack.c.h.s8.bf16 %v1154
          %v1659 = vunpack.c.l.s8.bf16 %v1155
          %v1660 = vunpack.c.l.s8.bf16 %v1156
          %v1661 = vunpack.c.l.s8.bf16 %v1157
          %v1662 = vunpack.c.l.s8.bf16 %v1158
          %v1663 = vunpack.c.l.s8.bf16 %v1159
          %v1664 = vunpack.c.l.s8.bf16 %v1160
          %v1665 = vunpack.c.l.s8.bf16 %v1161
          %v1666 = vunpack.c.l.s8.bf16 %v1162
          %v1667 = vunpack.c.h.s8.bf16 %v1155
          %v1668 = vunpack.c.h.s8.bf16 %v1156
          %v1669 = vunpack.c.h.s8.bf16 %v1157
          %v1670 = vunpack.c.h.s8.bf16 %v1158
          %v1671 = vunpack.c.h.s8.bf16 %v1159
          %v1672 = vunpack.c.h.s8.bf16 %v1160
          %v1673 = vunpack.c.h.s8.bf16 %v1161
          %v1674 = vunpack.c.h.s8.bf16 %v1162
          %1675 = vmatprep.subr.bf16.mxu0 %v1220
          %1676 = vmatpush1.bf16.msra.mxu0 %v1219
          %1677 = vmatprep.subr.bf16.mxu0 %v1212
          %1678 = vmatpush1.bf16.msra.mxu0 %v1211
          %1679 = vmatprep.subr.bf16.mxu0 %v1204
          %1680 = vmatpush1.bf16.msra.mxu0 %v1203
          %1681 = vmatprep.subr.bf16.mxu0 %v1196
          %1682 = vmatpush1.bf16.msra.mxu0 %v1195
          %1683 = vmatprep.subr.bf16.mxu0 %v1188
          %1684 = vmatpush1.bf16.msra.mxu0 %v1187
          %1685 = vmatprep.subr.bf16.mxu0 %v1180
          %1686 = vmatpush1.bf16.msra.mxu0 %v1179
          %1687 = vmatprep.subr.bf16.mxu0 %v1172
          %1688 = vmatpush1.bf16.msra.mxu0 %v1171
          %1689 = vmatprep.subr.bf16.mxu0 %v1164
          %1690 = vmatpush1.bf16.msra.mxu0 %v1163
          %1691 = vmatprep.subr.bf16.mxu0 %v1284
          %1692 = vmatpush2.bf16.msra.mxu0 %v1283
          %1693 = vmatprep.subr.bf16.mxu0 %v1276
          %1694 = vmatpush2.bf16.msra.mxu0 %v1275
          %1695 = vmatprep.subr.bf16.mxu0 %v1268
          %1696 = vmatpush2.bf16.msra.mxu0 %v1267
          %1697 = vmatprep.subr.bf16.mxu0 %v1260
          %1698 = vmatpush2.bf16.msra.mxu0 %v1259
          %1699 = vmatprep.subr.bf16.mxu0 %v1252
          %1700 = vmatpush2.bf16.msra.mxu0 %v1251
          %1701 = vmatprep.subr.bf16.mxu0 %v1244
          %1702 = vmatpush2.bf16.msra.mxu0 %v1243
          %1703 = vmatprep.subr.bf16.mxu0 %v1236
          %1704 = vmatpush2.bf16.msra.mxu0 %v1235
          %1705 = vmatprep.subr.bf16.mxu0 %v1228
          %1706 = vmatpush2.bf16.msra.mxu0 %v1227
          %1707 = vmatprep.mubr.bf16.mxu0 %v900
          %1708 = vmatmul.mubr.bf16.gmra.mxu0 %v899
          %v1709 = vpop.f32.mrf.mxu0
          %v1710 = vadd.f32 0.0, %v1709
          %v1711 = vpop.f32.mrf.mxu0
          %v1712 = vadd.f32 0.0, %v1711
          %v1713 = vpop.f32.mrf.mxu0
          %v1714 = vpop.f32.mrf.mxu0
          %1715 = vdwg.mxu0
          %1716 = vmatprep.subr.bf16.mxu0 %v1348
          %1717 = vmatpush1.bf16.msra.mxu0 %v1347
          %1718 = vmatprep.subr.bf16.mxu0 %v1340
          %1719 = vmatpush1.bf16.msra.mxu0 %v1339
          %1720 = vmatprep.subr.bf16.mxu0 %v1332
          %1721 = vmatpush1.bf16.msra.mxu0 %v1331
          %1722 = vmatprep.subr.bf16.mxu0 %v1324
          %1723 = vmatpush1.bf16.msra.mxu0 %v1323
          %1724 = vmatprep.subr.bf16.mxu0 %v1316
          %1725 = vmatpush1.bf16.msra.mxu0 %v1315
          %1726 = vmatprep.subr.bf16.mxu0 %v1308
          %1727 = vmatpush1.bf16.msra.mxu0 %v1307
          %1728 = vmatprep.subr.bf16.mxu0 %v1300
          %1729 = vmatpush1.bf16.msra.mxu0 %v1299
          %1730 = vmatprep.subr.bf16.mxu0 %v1292
          %1731 = vmatpush1.bf16.msra.mxu0 %v1291
          %1732 = vmatprep.subr.bf16.mxu0 %v1412
          %1733 = vmatpush2.bf16.msra.mxu0 %v1411
          %1734 = vmatprep.subr.bf16.mxu0 %v1404
          %1735 = vmatpush2.bf16.msra.mxu0 %v1403
          %1736 = vmatprep.subr.bf16.mxu0 %v1396
          %1737 = vmatpush2.bf16.msra.mxu0 %v1395
          %1738 = vmatprep.subr.bf16.mxu0 %v1388
          %1739 = vmatpush2.bf16.msra.mxu0 %v1387
          %1740 = vmatprep.subr.bf16.mxu0 %v1380
          %1741 = vmatpush2.bf16.msra.mxu0 %v1379
          %1742 = vmatprep.subr.bf16.mxu0 %v1372
          %1743 = vmatpush2.bf16.msra.mxu0 %v1371
          %1744 = vmatprep.subr.bf16.mxu0 %v1364
          %1745 = vmatpush2.bf16.msra.mxu0 %v1363
          %1746 = vmatprep.subr.bf16.mxu0 %v1356
          %1747 = vmatpush2.bf16.msra.mxu0 %v1355
          %1748 = vmatprep.mubr.bf16.mxu0 %v902
          %1749 = vmatmul.mubr.bf16.gmra.mxu0 %v901
          %v1750 = vpop.f32.mrf.mxu0
          %v1751 = vadd.f32 %v1710, %v1750
          %v1752 = vpop.f32.mrf.mxu0
          %v1753 = vadd.f32 %v1712, %v1752
          %v1754 = vpop.f32.mrf.mxu0
          %v1755 = vpop.f32.mrf.mxu0
          %1756 = vdwg.mxu0
          %1757 = vmatprep.subr.bf16.mxu0 %v1476
          %1758 = vmatpush1.bf16.msra.mxu0 %v1475
          %1759 = vmatprep.subr.bf16.mxu0 %v1468
          %1760 = vmatpush1.bf16.msra.mxu0 %v1467
          %1761 = vmatprep.subr.bf16.mxu0 %v1460
          %1762 = vmatpush1.bf16.msra.mxu0 %v1459
          %1763 = vmatprep.subr.bf16.mxu0 %v1452
          %1764 = vmatpush1.bf16.msra.mxu0 %v1451
          %1765 = vmatprep.subr.bf16.mxu0 %v1444
          %1766 = vmatpush1.bf16.msra.mxu0 %v1443
          %1767 = vmatprep.subr.bf16.mxu0 %v1436
          %1768 = vmatpush1.bf16.msra.mxu0 %v1435
          %1769 = vmatprep.subr.bf16.mxu0 %v1428
          %1770 = vmatpush1.bf16.msra.mxu0 %v1427
          %1771 = vmatprep.subr.bf16.mxu0 %v1420
          %1772 = vmatpush1.bf16.msra.mxu0 %v1419
          %1773 = vmatprep.subr.bf16.mxu0 %v1540
          %1774 = vmatpush2.bf16.msra.mxu0 %v1539
          %1775 = vmatprep.subr.bf16.mxu0 %v1532
          %1776 = vmatpush2.bf16.msra.mxu0 %v1531
          %1777 = vmatprep.subr.bf16.mxu0 %v1524
          %1778 = vmatpush2.bf16.msra.mxu0 %v1523
          %1779 = vmatprep.subr.bf16.mxu0 %v1516
          %1780 = vmatpush2.bf16.msra.mxu0 %v1515
          %1781 = vmatprep.subr.bf16.mxu0 %v1508
          %1782 = vmatpush2.bf16.msra.mxu0 %v1507
          %1783 = vmatprep.subr.bf16.mxu0 %v1500
          %1784 = vmatpush2.bf16.msra.mxu0 %v1499
          %1785 = vmatprep.subr.bf16.mxu0 %v1492
          %1786 = vmatpush2.bf16.msra.mxu0 %v1491
          %1787 = vmatprep.subr.bf16.mxu0 %v1484
          %1788 = vmatpush2.bf16.msra.mxu0 %v1483
          %1789 = vmatprep.mubr.bf16.mxu0 %v904
          %1790 = vmatmul.mubr.bf16.gmra.mxu0 %v903
          %v1791 = vpop.f32.mrf.mxu0
          %v1792 = vadd.f32 %v1751, %v1791
          %v1793 = vpop.f32.mrf.mxu0
          %v1794 = vadd.f32 %v1753, %v1793
          %v1795 = vpop.f32.mrf.mxu0
          %v1796 = vpop.f32.mrf.mxu0
          %1797 = vdwg.mxu0
          %1798 = vmatprep.subr.bf16.mxu0 %v1604
          %1799 = vmatpush1.bf16.msra.mxu0 %v1603
          %1800 = vmatprep.subr.bf16.mxu0 %v1596
          %1801 = vmatpush1.bf16.msra.mxu0 %v1595
          %1802 = vmatprep.subr.bf16.mxu0 %v1588
          %1803 = vmatpush1.bf16.msra.mxu0 %v1587
          %1804 = vmatprep.subr.bf16.mxu0 %v1580
          %1805 = vmatpush1.bf16.msra.mxu0 %v1579
          %1806 = vmatprep.subr.bf16.mxu0 %v1572
          %1807 = vmatpush1.bf16.msra.mxu0 %v1571
          %1808 = vmatprep.subr.bf16.mxu0 %v1564
          %1809 = vmatpush1.bf16.msra.mxu0 %v1563
          %1810 = vmatprep.subr.bf16.mxu0 %v1556
          %1811 = vmatpush1.bf16.msra.mxu0 %v1555
          %1812 = vmatprep.subr.bf16.mxu0 %v1548
          %1813 = vmatpush1.bf16.msra.mxu0 %v1547
          %1814 = vmatprep.subr.bf16.mxu0 %v1668
          %1815 = vmatpush2.bf16.msra.mxu0 %v1667
          %1816 = vmatprep.subr.bf16.mxu0 %v1660
          %1817 = vmatpush2.bf16.msra.mxu0 %v1659
          %1818 = vmatprep.subr.bf16.mxu0 %v1652
          %1819 = vmatpush2.bf16.msra.mxu0 %v1651
          %1820 = vmatprep.subr.bf16.mxu0 %v1644
          %1821 = vmatpush2.bf16.msra.mxu0 %v1643
          %1822 = vmatprep.subr.bf16.mxu0 %v1636
          %1823 = vmatpush2.bf16.msra.mxu0 %v1635
          %1824 = vmatprep.subr.bf16.mxu0 %v1628
          %1825 = vmatpush2.bf16.msra.mxu0 %v1627
          %1826 = vmatprep.subr.bf16.mxu0 %v1620
          %1827 = vmatpush2.bf16.msra.mxu0 %v1619
          %1828 = vmatprep.subr.bf16.mxu0 %v1612
          %1829 = vmatpush2.bf16.msra.mxu0 %v1611
          %1830 = vmatprep.mubr.bf16.mxu0 %v906
          %1831 = vmatmul.mubr.bf16.gmra.mxu0 %v905
          %v1832 = vpop.f32.mrf.mxu0
          %v1833 = vadd.f32 %v1792, %v1832
          %v1834 = vpop.f32.mrf.mxu0
          %v1835 = vadd.f32 %v1794, %v1834
          %v1836 = vpop.f32.mrf.mxu0
          %v1837 = vpop.f32.mrf.mxu0
          %1838 = vdwg.mxu0
          %1839 = vmatprep.subr.bf16.mxu0 %v1222
          %1840 = vmatpush1.bf16.msra.mxu0 %v1221
          %1841 = vmatprep.subr.bf16.mxu0 %v1214
          %1842 = vmatpush1.bf16.msra.mxu0 %v1213
          %1843 = vmatprep.subr.bf16.mxu0 %v1206
          %1844 = vmatpush1.bf16.msra.mxu0 %v1205
          %1845 = vmatprep.subr.bf16.mxu0 %v1198
          %1846 = vmatpush1.bf16.msra.mxu0 %v1197
          %1847 = vmatprep.subr.bf16.mxu0 %v1190
          %1848 = vmatpush1.bf16.msra.mxu0 %v1189
          %1849 = vmatprep.subr.bf16.mxu0 %v1182
          %1850 = vmatpush1.bf16.msra.mxu0 %v1181
          %1851 = vmatprep.subr.bf16.mxu0 %v1174
          %1852 = vmatpush1.bf16.msra.mxu0 %v1173
          %1853 = vmatprep.subr.bf16.mxu0 %v1166
          %1854 = vmatpush1.bf16.msra.mxu0 %v1165
          %1855 = vmatprep.subr.bf16.mxu0 %v1286
          %1856 = vmatpush2.bf16.msra.mxu0 %v1285
          %1857 = vmatprep.subr.bf16.mxu0 %v1278
          %1858 = vmatpush2.bf16.msra.mxu0 %v1277
          %1859 = vmatprep.subr.bf16.mxu0 %v1270
          %1860 = vmatpush2.bf16.msra.mxu0 %v1269
          %1861 = vmatprep.subr.bf16.mxu0 %v1262
          %1862 = vmatpush2.bf16.msra.mxu0 %v1261
          %1863 = vmatprep.subr.bf16.mxu0 %v1254
          %1864 = vmatpush2.bf16.msra.mxu0 %v1253
          %1865 = vmatprep.subr.bf16.mxu0 %v1246
          %1866 = vmatpush2.bf16.msra.mxu0 %v1245
          %1867 = vmatprep.subr.bf16.mxu0 %v1238
          %1868 = vmatpush2.bf16.msra.mxu0 %v1237
          %1869 = vmatprep.subr.bf16.mxu0 %v1230
          %1870 = vmatpush2.bf16.msra.mxu0 %v1229
          %1871 = vmatprep.mubr.bf16.mxu0 %v900
          %1872 = vmatmul.mubr.bf16.gmra.mxu0 %v899
          %v1873 = vpop.f32.mrf.mxu0
          %v1874 = vadd.f32 0.0, %v1873
          %v1875 = vpop.f32.mrf.mxu0
          %v1876 = vadd.f32 0.0, %v1875
          %v1877 = vpop.f32.mrf.mxu0
          %v1878 = vpop.f32.mrf.mxu0
          %1879 = vdwg.mxu0
          %1880 = vmatprep.subr.bf16.mxu0 %v1350
          %1881 = vmatpush1.bf16.msra.mxu0 %v1349
          %1882 = vmatprep.subr.bf16.mxu0 %v1342
          %1883 = vmatpush1.bf16.msra.mxu0 %v1341
          %1884 = vmatprep.subr.bf16.mxu0 %v1334
          %1885 = vmatpush1.bf16.msra.mxu0 %v1333
          %1886 = vmatprep.subr.bf16.mxu0 %v1326
          %1887 = vmatpush1.bf16.msra.mxu0 %v1325
          %1888 = vmatprep.subr.bf16.mxu0 %v1318
          %1889 = vmatpush1.bf16.msra.mxu0 %v1317
          %1890 = vmatprep.subr.bf16.mxu0 %v1310
          %1891 = vmatpush1.bf16.msra.mxu0 %v1309
          %1892 = vmatprep.subr.bf16.mxu0 %v1302
          %1893 = vmatpush1.bf16.msra.mxu0 %v1301
          %1894 = vmatprep.subr.bf16.mxu0 %v1294
          %1895 = vmatpush1.bf16.msra.mxu0 %v1293
          %1896 = vmatprep.subr.bf16.mxu0 %v1414
          %1897 = vmatpush2.bf16.msra.mxu0 %v1413
          %1898 = vmatprep.subr.bf16.mxu0 %v1406
          %1899 = vmatpush2.bf16.msra.mxu0 %v1405
          %1900 = vmatprep.subr.bf16.mxu0 %v1398
          %1901 = vmatpush2.bf16.msra.mxu0 %v1397
          %1902 = vmatprep.subr.bf16.mxu0 %v1390
          %1903 = vmatpush2.bf16.msra.mxu0 %v1389
          %1904 = vmatprep.subr.bf16.mxu0 %v1382
          %1905 = vmatpush2.bf16.msra.mxu0 %v1381
          %1906 = vmatprep.subr.bf16.mxu0 %v1374
          %1907 = vmatpush2.bf16.msra.mxu0 %v1373
          %1908 = vmatprep.subr.bf16.mxu0 %v1366
          %1909 = vmatpush2.bf16.msra.mxu0 %v1365
          %1910 = vmatprep.subr.bf16.mxu0 %v1358
          %1911 = vmatpush2.bf16.msra.mxu0 %v1357
          %1912 = vmatprep.mubr.bf16.mxu0 %v902
          %1913 = vmatmul.mubr.bf16.gmra.mxu0 %v901
          %v1914 = vpop.f32.mrf.mxu0
          %v1915 = vadd.f32 %v1874, %v1914
          %v1916 = vpop.f32.mrf.mxu0
          %v1917 = vadd.f32 %v1876, %v1916
          %v1918 = vpop.f32.mrf.mxu0
          %v1919 = vpop.f32.mrf.mxu0
          %1920 = vdwg.mxu0
          %1921 = vmatprep.subr.bf16.mxu0 %v1478
          %1922 = vmatpush1.bf16.msra.mxu0 %v1477
          %1923 = vmatprep.subr.bf16.mxu0 %v1470
          %1924 = vmatpush1.bf16.msra.mxu0 %v1469
          %1925 = vmatprep.subr.bf16.mxu0 %v1462
          %1926 = vmatpush1.bf16.msra.mxu0 %v1461
          %1927 = vmatprep.subr.bf16.mxu0 %v1454
          %1928 = vmatpush1.bf16.msra.mxu0 %v1453
          %1929 = vmatprep.subr.bf16.mxu0 %v1446
          %1930 = vmatpush1.bf16.msra.mxu0 %v1445
          %1931 = vmatprep.subr.bf16.mxu0 %v1438
          %1932 = vmatpush1.bf16.msra.mxu0 %v1437
          %1933 = vmatprep.subr.bf16.mxu0 %v1430
          %1934 = vmatpush1.bf16.msra.mxu0 %v1429
          %1935 = vmatprep.subr.bf16.mxu0 %v1422
          %1936 = vmatpush1.bf16.msra.mxu0 %v1421
          %1937 = vmatprep.subr.bf16.mxu0 %v1542
          %1938 = vmatpush2.bf16.msra.mxu0 %v1541
          %1939 = vmatprep.subr.bf16.mxu0 %v1534
          %1940 = vmatpush2.bf16.msra.mxu0 %v1533
          %1941 = vmatprep.subr.bf16.mxu0 %v1526
          %1942 = vmatpush2.bf16.msra.mxu0 %v1525
          %1943 = vmatprep.subr.bf16.mxu0 %v1518
          %1944 = vmatpush2.bf16.msra.mxu0 %v1517
          %1945 = vmatprep.subr.bf16.mxu0 %v1510
          %1946 = vmatpush2.bf16.msra.mxu0 %v1509
          %1947 = vmatprep.subr.bf16.mxu0 %v1502
          %1948 = vmatpush2.bf16.msra.mxu0 %v1501
          %1949 = vmatprep.subr.bf16.mxu0 %v1494
          %1950 = vmatpush2.bf16.msra.mxu0 %v1493
          %1951 = vmatprep.subr.bf16.mxu0 %v1486
          %1952 = vmatpush2.bf16.msra.mxu0 %v1485
          %1953 = vmatprep.mubr.bf16.mxu0 %v904
          %1954 = vmatmul.mubr.bf16.gmra.mxu0 %v903
          %v1955 = vpop.f32.mrf.mxu0
          %v1956 = vadd.f32 %v1915, %v1955
          %v1957 = vpop.f32.mrf.mxu0
          %v1958 = vadd.f32 %v1917, %v1957
          %v1959 = vpop.f32.mrf.mxu0
          %v1960 = vpop.f32.mrf.mxu0
          %1961 = vdwg.mxu0
          %1962 = vmatprep.subr.bf16.mxu0 %v1606
          %1963 = vmatpush1.bf16.msra.mxu0 %v1605
          %1964 = vmatprep.subr.bf16.mxu0 %v1598
          %1965 = vmatpush1.bf16.msra.mxu0 %v1597
          %1966 = vmatprep.subr.bf16.mxu0 %v1590
          %1967 = vmatpush1.bf16.msra.mxu0 %v1589
          %1968 = vmatprep.subr.bf16.mxu0 %v1582
          %1969 = vmatpush1.bf16.msra.mxu0 %v1581
          %1970 = vmatprep.subr.bf16.mxu0 %v1574
          %1971 = vmatpush1.bf16.msra.mxu0 %v1573
          %1972 = vmatprep.subr.bf16.mxu0 %v1566
          %1973 = vmatpush1.bf16.msra.mxu0 %v1565
          %1974 = vmatprep.subr.bf16.mxu0 %v1558
          %1975 = vmatpush1.bf16.msra.mxu0 %v1557
          %1976 = vmatprep.subr.bf16.mxu0 %v1550
          %1977 = vmatpush1.bf16.msra.mxu0 %v1549
          %1978 = vmatprep.subr.bf16.mxu0 %v1670
          %1979 = vmatpush2.bf16.msra.mxu0 %v1669
          %1980 = vmatprep.subr.bf16.mxu0 %v1662
          %1981 = vmatpush2.bf16.msra.mxu0 %v1661
          %1982 = vmatprep.subr.bf16.mxu0 %v1654
          %1983 = vmatpush2.bf16.msra.mxu0 %v1653
          %1984 = vmatprep.subr.bf16.mxu0 %v1646
          %1985 = vmatpush2.bf16.msra.mxu0 %v1645
          %1986 = vmatprep.subr.bf16.mxu0 %v1638
          %1987 = vmatpush2.bf16.msra.mxu0 %v1637
          %1988 = vmatprep.subr.bf16.mxu0 %v1630
          %1989 = vmatpush2.bf16.msra.mxu0 %v1629
          %1990 = vmatprep.subr.bf16.mxu0 %v1622
          %1991 = vmatpush2.bf16.msra.mxu0 %v1621
          %1992 = vmatprep.subr.bf16.mxu0 %v1614
          %1993 = vmatpush2.bf16.msra.mxu0 %v1613
          %1994 = vmatprep.mubr.bf16.mxu0 %v906
          %1995 = vmatmul.mubr.bf16.gmra.mxu0 %v905
          %v1996 = vpop.f32.mrf.mxu0
          %v1997 = vadd.f32 %v1956, %v1996
          %v1998 = vpop.f32.mrf.mxu0
          %v1999 = vadd.f32 %v1958, %v1998
          %v2000 = vpop.f32.mrf.mxu0
          %v2001 = vpop.f32.mrf.mxu0
          %2002 = vdwg.mxu0
          %2003 = vmatprep.subr.bf16.mxu0 %v1224
          %2004 = vmatpush1.bf16.msra.mxu0 %v1223
          %2005 = vmatprep.subr.bf16.mxu0 %v1216
          %2006 = vmatpush1.bf16.msra.mxu0 %v1215
          %2007 = vmatprep.subr.bf16.mxu0 %v1208
          %2008 = vmatpush1.bf16.msra.mxu0 %v1207
          %2009 = vmatprep.subr.bf16.mxu0 %v1200
          %2010 = vmatpush1.bf16.msra.mxu0 %v1199
          %2011 = vmatprep.subr.bf16.mxu0 %v1192
          %2012 = vmatpush1.bf16.msra.mxu0 %v1191
          %2013 = vmatprep.subr.bf16.mxu0 %v1184
          %2014 = vmatpush1.bf16.msra.mxu0 %v1183
          %2015 = vmatprep.subr.bf16.mxu0 %v1176
          %2016 = vmatpush1.bf16.msra.mxu0 %v1175
          %2017 = vmatprep.subr.bf16.mxu0 %v1168
          %2018 = vmatpush1.bf16.msra.mxu0 %v1167
          %2019 = vmatprep.subr.bf16.mxu0 %v1288
          %2020 = vmatpush2.bf16.msra.mxu0 %v1287
          %2021 = vmatprep.subr.bf16.mxu0 %v1280
          %2022 = vmatpush2.bf16.msra.mxu0 %v1279
          %2023 = vmatprep.subr.bf16.mxu0 %v1272
          %2024 = vmatpush2.bf16.msra.mxu0 %v1271
          %2025 = vmatprep.subr.bf16.mxu0 %v1264
          %2026 = vmatpush2.bf16.msra.mxu0 %v1263
          %2027 = vmatprep.subr.bf16.mxu0 %v1256
          %2028 = vmatpush2.bf16.msra.mxu0 %v1255
          %2029 = vmatprep.subr.bf16.mxu0 %v1248
          %2030 = vmatpush2.bf16.msra.mxu0 %v1247
          %2031 = vmatprep.subr.bf16.mxu0 %v1240
          %2032 = vmatpush2.bf16.msra.mxu0 %v1239
          %2033 = vmatprep.subr.bf16.mxu0 %v1232
          %2034 = vmatpush2.bf16.msra.mxu0 %v1231
          %2035 = vmatprep.mubr.bf16.mxu0 %v900
          %2036 = vmatmul.mubr.bf16.gmra.mxu0 %v899
          %v2037 = vpop.f32.mrf.mxu0
          %v2038 = vadd.f32 0.0, %v2037
          %v2039 = vpop.f32.mrf.mxu0
          %v2040 = vadd.f32 0.0, %v2039
          %v2041 = vpop.f32.mrf.mxu0
          %v2042 = vpop.f32.mrf.mxu0
          %2043 = vdwg.mxu0
          %2044 = vmatprep.subr.bf16.mxu0 %v1352
          %2045 = vmatpush1.bf16.msra.mxu0 %v1351
          %2046 = vmatprep.subr.bf16.mxu0 %v1344
          %2047 = vmatpush1.bf16.msra.mxu0 %v1343
          %2048 = vmatprep.subr.bf16.mxu0 %v1336
          %2049 = vmatpush1.bf16.msra.mxu0 %v1335
          %2050 = vmatprep.subr.bf16.mxu0 %v1328
          %2051 = vmatpush1.bf16.msra.mxu0 %v1327
          %2052 = vmatprep.subr.bf16.mxu0 %v1320
          %2053 = vmatpush1.bf16.msra.mxu0 %v1319
          %2054 = vmatprep.subr.bf16.mxu0 %v1312
          %2055 = vmatpush1.bf16.msra.mxu0 %v1311
          %2056 = vmatprep.subr.bf16.mxu0 %v1304
          %2057 = vmatpush1.bf16.msra.mxu0 %v1303
          %2058 = vmatprep.subr.bf16.mxu0 %v1296
          %2059 = vmatpush1.bf16.msra.mxu0 %v1295
          %2060 = vmatprep.subr.bf16.mxu0 %v1416
          %2061 = vmatpush2.bf16.msra.mxu0 %v1415
          %2062 = vmatprep.subr.bf16.mxu0 %v1408
          %2063 = vmatpush2.bf16.msra.mxu0 %v1407
          %2064 = vmatprep.subr.bf16.mxu0 %v1400
          %2065 = vmatpush2.bf16.msra.mxu0 %v1399
          %2066 = vmatprep.subr.bf16.mxu0 %v1392
          %2067 = vmatpush2.bf16.msra.mxu0 %v1391
          %2068 = vmatprep.subr.bf16.mxu0 %v1384
          %2069 = vmatpush2.bf16.msra.mxu0 %v1383
          %2070 = vmatprep.subr.bf16.mxu0 %v1376
          %2071 = vmatpush2.bf16.msra.mxu0 %v1375
          %2072 = vmatprep.subr.bf16.mxu0 %v1368
          %2073 = vmatpush2.bf16.msra.mxu0 %v1367
          %2074 = vmatprep.subr.bf16.mxu0 %v1360
          %2075 = vmatpush2.bf16.msra.mxu0 %v1359
          %2076 = vmatprep.mubr.bf16.mxu0 %v902
          %2077 = vmatmul.mubr.bf16.gmra.mxu0 %v901
          %v2078 = vpop.f32.mrf.mxu0
          %v2079 = vadd.f32 %v2038, %v2078
          %v2080 = vpop.f32.mrf.mxu0
          %v2081 = vadd.f32 %v2040, %v2080
          %v2082 = vpop.f32.mrf.mxu0
          %v2083 = vpop.f32.mrf.mxu0
          %2084 = vdwg.mxu0
          %2085 = vmatprep.subr.bf16.mxu0 %v1480
          %2086 = vmatpush1.bf16.msra.mxu0 %v1479
          %2087 = vmatprep.subr.bf16.mxu0 %v1472
          %2088 = vmatpush1.bf16.msra.mxu0 %v1471
          %2089 = vmatprep.subr.bf16.mxu0 %v1464
          %2090 = vmatpush1.bf16.msra.mxu0 %v1463
          %2091 = vmatprep.subr.bf16.mxu0 %v1456
          %2092 = vmatpush1.bf16.msra.mxu0 %v1455
          %2093 = vmatprep.subr.bf16.mxu0 %v1448
          %2094 = vmatpush1.bf16.msra.mxu0 %v1447
          %2095 = vmatprep.subr.bf16.mxu0 %v1440
          %2096 = vmatpush1.bf16.msra.mxu0 %v1439
          %2097 = vmatprep.subr.bf16.mxu0 %v1432
          %2098 = vmatpush1.bf16.msra.mxu0 %v1431
          %2099 = vmatprep.subr.bf16.mxu0 %v1424
          %2100 = vmatpush1.bf16.msra.mxu0 %v1423
          %2101 = vmatprep.subr.bf16.mxu0 %v1544
          %2102 = vmatpush2.bf16.msra.mxu0 %v1543
          %2103 = vmatprep.subr.bf16.mxu0 %v1536
          %2104 = vmatpush2.bf16.msra.mxu0 %v1535
          %2105 = vmatprep.subr.bf16.mxu0 %v1528
          %2106 = vmatpush2.bf16.msra.mxu0 %v1527
          %2107 = vmatprep.subr.bf16.mxu0 %v1520
          %2108 = vmatpush2.bf16.msra.mxu0 %v1519
          %2109 = vmatprep.subr.bf16.mxu0 %v1512
          %2110 = vmatpush2.bf16.msra.mxu0 %v1511
          %2111 = vmatprep.subr.bf16.mxu0 %v1504
          %2112 = vmatpush2.bf16.msra.mxu0 %v1503
          %2113 = vmatprep.subr.bf16.mxu0 %v1496
          %2114 = vmatpush2.bf16.msra.mxu0 %v1495
          %2115 = vmatprep.subr.bf16.mxu0 %v1488
          %2116 = vmatpush2.bf16.msra.mxu0 %v1487
          %2117 = vmatprep.mubr.bf16.mxu0 %v904
          %2118 = vmatmul.mubr.bf16.gmra.mxu0 %v903
          %v2119 = vpop.f32.mrf.mxu0
          %v2120 = vadd.f32 %v2079, %v2119
          %v2121 = vpop.f32.mrf.mxu0
          %v2122 = vadd.f32 %v2081, %v2121
          %v2123 = vpop.f32.mrf.mxu0
          %v2124 = vpop.f32.mrf.mxu0
          %2125 = vdwg.mxu0
          %2126 = vmatprep.subr.bf16.mxu0 %v1608
          %2127 = vmatpush1.bf16.msra.mxu0 %v1607
          %2128 = vmatprep.subr.bf16.mxu0 %v1600
          %2129 = vmatpush1.bf16.msra.mxu0 %v1599
          %2130 = vmatprep.subr.bf16.mxu0 %v1592
          %2131 = vmatpush1.bf16.msra.mxu0 %v1591
          %2132 = vmatprep.subr.bf16.mxu0 %v1584
          %2133 = vmatpush1.bf16.msra.mxu0 %v1583
          %2134 = vmatprep.subr.bf16.mxu0 %v1576
          %2135 = vmatpush1.bf16.msra.mxu0 %v1575
          %2136 = vmatprep.subr.bf16.mxu0 %v1568
          %2137 = vmatpush1.bf16.msra.mxu0 %v1567
          %2138 = vmatprep.subr.bf16.mxu0 %v1560
          %2139 = vmatpush1.bf16.msra.mxu0 %v1559
          %2140 = vmatprep.subr.bf16.mxu0 %v1552
          %2141 = vmatpush1.bf16.msra.mxu0 %v1551
          %2142 = vmatprep.subr.bf16.mxu0 %v1672
          %2143 = vmatpush2.bf16.msra.mxu0 %v1671
          %2144 = vmatprep.subr.bf16.mxu0 %v1664
          %2145 = vmatpush2.bf16.msra.mxu0 %v1663
          %2146 = vmatprep.subr.bf16.mxu0 %v1656
          %2147 = vmatpush2.bf16.msra.mxu0 %v1655
          %2148 = vmatprep.subr.bf16.mxu0 %v1648
          %2149 = vmatpush2.bf16.msra.mxu0 %v1647
          %2150 = vmatprep.subr.bf16.mxu0 %v1640
          %2151 = vmatpush2.bf16.msra.mxu0 %v1639
          %2152 = vmatprep.subr.bf16.mxu0 %v1632
          %2153 = vmatpush2.bf16.msra.mxu0 %v1631
          %2154 = vmatprep.subr.bf16.mxu0 %v1624
          %2155 = vmatpush2.bf16.msra.mxu0 %v1623
          %2156 = vmatprep.subr.bf16.mxu0 %v1616
          %2157 = vmatpush2.bf16.msra.mxu0 %v1615
          %2158 = vmatprep.mubr.bf16.mxu0 %v906
          %2159 = vmatmul.mubr.bf16.gmra.mxu0 %v905
          %v2160 = vpop.f32.mrf.mxu0
          %v2161 = vadd.f32 %v2120, %v2160
          %v2162 = vpop.f32.mrf.mxu0
          %v2163 = vadd.f32 %v2122, %v2162
          %v2164 = vpop.f32.mrf.mxu0
          %v2165 = vpop.f32.mrf.mxu0
          %2166 = vdwg.mxu0
          %2167 = vmatprep.subr.bf16.mxu0 %v1226
          %2168 = vmatpush1.bf16.msra.mxu0 %v1225
          %2169 = vmatprep.subr.bf16.mxu0 %v1218
          %2170 = vmatpush1.bf16.msra.mxu0 %v1217
          %2171 = vmatprep.subr.bf16.mxu0 %v1210
          %2172 = vmatpush1.bf16.msra.mxu0 %v1209
          %2173 = vmatprep.subr.bf16.mxu0 %v1202
          %2174 = vmatpush1.bf16.msra.mxu0 %v1201
          %2175 = vmatprep.subr.bf16.mxu0 %v1194
          %2176 = vmatpush1.bf16.msra.mxu0 %v1193
          %2177 = vmatprep.subr.bf16.mxu0 %v1186
          %2178 = vmatpush1.bf16.msra.mxu0 %v1185
          %2179 = vmatprep.subr.bf16.mxu0 %v1178
          %2180 = vmatpush1.bf16.msra.mxu0 %v1177
          %2181 = vmatprep.subr.bf16.mxu0 %v1170
          %2182 = vmatpush1.bf16.msra.mxu0 %v1169
          %2183 = vmatprep.subr.bf16.mxu0 %v1290
          %2184 = vmatpush2.bf16.msra.mxu0 %v1289
          %2185 = vmatprep.subr.bf16.mxu0 %v1282
          %2186 = vmatpush2.bf16.msra.mxu0 %v1281
          %2187 = vmatprep.subr.bf16.mxu0 %v1274
          %2188 = vmatpush2.bf16.msra.mxu0 %v1273
          %2189 = vmatprep.subr.bf16.mxu0 %v1266
          %2190 = vmatpush2.bf16.msra.mxu0 %v1265
          %2191 = vmatprep.subr.bf16.mxu0 %v1258
          %2192 = vmatpush2.bf16.msra.mxu0 %v1257
          %2193 = vmatprep.subr.bf16.mxu0 %v1250
          %2194 = vmatpush2.bf16.msra.mxu0 %v1249
          %2195 = vmatprep.subr.bf16.mxu0 %v1242
          %2196 = vmatpush2.bf16.msra.mxu0 %v1241
          %2197 = vmatprep.subr.bf16.mxu0 %v1234
          %2198 = vmatpush2.bf16.msra.mxu0 %v1233
          %2199 = vmatprep.mubr.bf16.mxu0 %v900
          %2200 = vmatmul.mubr.bf16.gmra.mxu0 %v899
          %v2201 = vpop.f32.mrf.mxu0
          %v2202 = vadd.f32 0.0, %v2201
          %v2203 = vpop.f32.mrf.mxu0
          %v2204 = vadd.f32 0.0, %v2203
          %v2205 = vpop.f32.mrf.mxu0
          %v2206 = vpop.f32.mrf.mxu0
          %2207 = vdwg.mxu0
          %2208 = vmatprep.subr.bf16.mxu0 %v1354
          %2209 = vmatpush1.bf16.msra.mxu0 %v1353
          %2210 = vmatprep.subr.bf16.mxu0 %v1346
          %2211 = vmatpush1.bf16.msra.mxu0 %v1345
          %2212 = vmatprep.subr.bf16.mxu0 %v1338
          %2213 = vmatpush1.bf16.msra.mxu0 %v1337
          %2214 = vmatprep.subr.bf16.mxu0 %v1330
          %2215 = vmatpush1.bf16.msra.mxu0 %v1329
          %2216 = vmatprep.subr.bf16.mxu0 %v1322
          %2217 = vmatpush1.bf16.msra.mxu0 %v1321
          %2218 = vmatprep.subr.bf16.mxu0 %v1314
          %2219 = vmatpush1.bf16.msra.mxu0 %v1313
          %2220 = vmatprep.subr.bf16.mxu0 %v1306
          %2221 = vmatpush1.bf16.msra.mxu0 %v1305
          %2222 = vmatprep.subr.bf16.mxu0 %v1298
          %2223 = vmatpush1.bf16.msra.mxu0 %v1297
          %2224 = vmatprep.subr.bf16.mxu0 %v1418
          %2225 = vmatpush2.bf16.msra.mxu0 %v1417
          %2226 = vmatprep.subr.bf16.mxu0 %v1410
          %2227 = vmatpush2.bf16.msra.mxu0 %v1409
          %2228 = vmatprep.subr.bf16.mxu0 %v1402
          %2229 = vmatpush2.bf16.msra.mxu0 %v1401
          %2230 = vmatprep.subr.bf16.mxu0 %v1394
          %2231 = vmatpush2.bf16.msra.mxu0 %v1393
          %2232 = vmatprep.subr.bf16.mxu0 %v1386
          %2233 = vmatpush2.bf16.msra.mxu0 %v1385
          %2234 = vmatprep.subr.bf16.mxu0 %v1378
          %2235 = vmatpush2.bf16.msra.mxu0 %v1377
          %2236 = vmatprep.subr.bf16.mxu0 %v1370
          %2237 = vmatpush2.bf16.msra.mxu0 %v1369
          %2238 = vmatprep.subr.bf16.mxu0 %v1362
          %2239 = vmatpush2.bf16.msra.mxu0 %v1361
          %2240 = vmatprep.mubr.bf16.mxu0 %v902
          %2241 = vmatmul.mubr.bf16.gmra.mxu0 %v901
          %v2242 = vpop.f32.mrf.mxu0
          %v2243 = vadd.f32 %v2202, %v2242
          %v2244 = vpop.f32.mrf.mxu0
          %v2245 = vadd.f32 %v2204, %v2244
          %v2246 = vpop.f32.mrf.mxu0
          %v2247 = vpop.f32.mrf.mxu0
          %2248 = vdwg.mxu0
          %2249 = vmatprep.subr.bf16.mxu0 %v1482
          %2250 = vmatpush1.bf16.msra.mxu0 %v1481
          %2251 = vmatprep.subr.bf16.mxu0 %v1474
          %2252 = vmatpush1.bf16.msra.mxu0 %v1473
          %2253 = vmatprep.subr.bf16.mxu0 %v1466
          %2254 = vmatpush1.bf16.msra.mxu0 %v1465
          %2255 = vmatprep.subr.bf16.mxu0 %v1458
          %2256 = vmatpush1.bf16.msra.mxu0 %v1457
          %2257 = vmatprep.subr.bf16.mxu0 %v1450
          %2258 = vmatpush1.bf16.msra.mxu0 %v1449
          %2259 = vmatprep.subr.bf16.mxu0 %v1442
          %2260 = vmatpush1.bf16.msra.mxu0 %v1441
          %2261 = vmatprep.subr.bf16.mxu0 %v1434
          %2262 = vmatpush1.bf16.msra.mxu0 %v1433
          %2263 = vmatprep.subr.bf16.mxu0 %v1426
          %2264 = vmatpush1.bf16.msra.mxu0 %v1425
          %2265 = vmatprep.subr.bf16.mxu0 %v1546
          %2266 = vmatpush2.bf16.msra.mxu0 %v1545
          %2267 = vmatprep.subr.bf16.mxu0 %v1538
          %2268 = vmatpush2.bf16.msra.mxu0 %v1537
          %2269 = vmatprep.subr.bf16.mxu0 %v1530
          %2270 = vmatpush2.bf16.msra.mxu0 %v1529
          %2271 = vmatprep.subr.bf16.mxu0 %v1522
          %2272 = vmatpush2.bf16.msra.mxu0 %v1521
          %2273 = vmatprep.subr.bf16.mxu0 %v1514
          %2274 = vmatpush2.bf16.msra.mxu0 %v1513
          %2275 = vmatprep.subr.bf16.mxu0 %v1506
          %2276 = vmatpush2.bf16.msra.mxu0 %v1505
          %2277 = vmatprep.subr.bf16.mxu0 %v1498
          %2278 = vmatpush2.bf16.msra.mxu0 %v1497
          %2279 = vmatprep.subr.bf16.mxu0 %v1490
          %2280 = vmatpush2.bf16.msra.mxu0 %v1489
          %2281 = vmatprep.mubr.bf16.mxu0 %v904
          %2282 = vmatmul.mubr.bf16.gmra.mxu0 %v903
          %v2283 = vpop.f32.mrf.mxu0
          %v2284 = vadd.f32 %v2243, %v2283
          %v2285 = vpop.f32.mrf.mxu0
          %v2286 = vadd.f32 %v2245, %v2285
          %v2287 = vpop.f32.mrf.mxu0
          %v2288 = vpop.f32.mrf.mxu0
          %2289 = vdwg.mxu0
          %2290 = vmatprep.subr.bf16.mxu0 %v1610
          %2291 = vmatpush1.bf16.msra.mxu0 %v1609
          %2292 = vmatprep.subr.bf16.mxu0 %v1602
          %2293 = vmatpush1.bf16.msra.mxu0 %v1601
          %2294 = vmatprep.subr.bf16.mxu0 %v1594
          %2295 = vmatpush1.bf16.msra.mxu0 %v1593
          %2296 = vmatprep.subr.bf16.mxu0 %v1586
          %2297 = vmatpush1.bf16.msra.mxu0 %v1585
          %2298 = vmatprep.subr.bf16.mxu0 %v1578
          %2299 = vmatpush1.bf16.msra.mxu0 %v1577
          %2300 = vmatprep.subr.bf16.mxu0 %v1570
          %2301 = vmatpush1.bf16.msra.mxu0 %v1569
          %2302 = vmatprep.subr.bf16.mxu0 %v1562
          %2303 = vmatpush1.bf16.msra.mxu0 %v1561
          %2304 = vmatprep.subr.bf16.mxu0 %v1554
          %2305 = vmatpush1.bf16.msra.mxu0 %v1553
          %2306 = vmatprep.subr.bf16.mxu0 %v1674
          %2307 = vmatpush2.bf16.msra.mxu0 %v1673
          %2308 = vmatprep.subr.bf16.mxu0 %v1666
          %2309 = vmatpush2.bf16.msra.mxu0 %v1665
          %2310 = vmatprep.subr.bf16.mxu0 %v1658
          %2311 = vmatpush2.bf16.msra.mxu0 %v1657
          %2312 = vmatprep.subr.bf16.mxu0 %v1650
          %2313 = vmatpush2.bf16.msra.mxu0 %v1649
          %2314 = vmatprep.subr.bf16.mxu0 %v1642
          %2315 = vmatpush2.bf16.msra.mxu0 %v1641
          %2316 = vmatprep.subr.bf16.mxu0 %v1634
          %2317 = vmatpush2.bf16.msra.mxu0 %v1633
          %2318 = vmatprep.subr.bf16.mxu0 %v1626
          %2319 = vmatpush2.bf16.msra.mxu0 %v1625
          %2320 = vmatprep.subr.bf16.mxu0 %v1618
          %2321 = vmatpush2.bf16.msra.mxu0 %v1617
          %2322 = vmatprep.mubr.bf16.mxu0 %v906
          %2323 = vmatmul.mubr.bf16.gmra.mxu0 %v905
          %v2324 = vpop.f32.mrf.mxu0
          %v2325 = vadd.f32 %v2284, %v2324
          %v2326 = vpop.f32.mrf.mxu0
          %v2327 = vadd.f32 %v2286, %v2326
          %v2328 = vpop.f32.mrf.mxu0
          %v2329 = vpop.f32.mrf.mxu0
          %2330 = vdwg.mxu0
          %v2331 = vlaneseq
          %v2332 = vshrl.u32 %v2331, 7
          %v2333 = vsub.s32 2, %v2332
          %v2334 = vrot.slane %v795, %v2333
          %v2335 = vlaneseq
          %v2336 = vshrl.u32 %v2335, 7
          %v2337 = vsub.s32 2, %v2336
          %v2338 = vrot.slane %v796, %v2337
          %v2339 = vlaneseq
          %v2340 = vshrl.u32 %v2339, 7
          %v2341 = vsub.s32 2, %v2340
          %v2342 = vrot.slane %v797, %v2341
          %v2343 = vlaneseq
          %v2344 = vshrl.u32 %v2343, 7
          %v2345 = vsub.s32 2, %v2344
          %v2346 = vrot.slane %v798, %v2345
          %v2347 = vlaneseq
          %v2348 = vshrl.u32 %v2347, 7
          %v2349 = vsub.s32 2, %v2348
          %v2350 = vrot.slane %v799, %v2349
          %v2351 = vlaneseq
          %v2352 = vshrl.u32 %v2351, 7
          %v2353 = vsub.s32 2, %v2352
          %v2354 = vrot.slane %v800, %v2353
          %v2355 = vlaneseq
          %v2356 = vshrl.u32 %v2355, 7
          %v2357 = vsub.s32 2, %v2356
          %v2358 = vrot.slane %v801, %v2357
          %v2359 = vlaneseq
          %v2360 = vshrl.u32 %v2359, 7
          %v2361 = vsub.s32 2, %v2360
          %v2362 = vrot.slane %v802, %v2361
          %v2363 = vmul.f32 %v1833, %v2334
          %v2364 = vmul.f32 %v1835, %v2338
          %v2365 = vmul.f32 %v1997, %v2342
          %v2366 = vmul.f32 %v1999, %v2346
          %v2367 = vmul.f32 %v2161, %v2350
          %v2368 = vmul.f32 %v2163, %v2354
          %v2369 = vmul.f32 %v2325, %v2358
          %v2370 = vmul.f32 %v2327, %v2362
          %v2371 = vlaneseq
          %v2372 = vshrl.u32 %v2371, 7
          %v2373 = vsub.s32 3, %v2372
          %v2374 = vrot.slane %v795, %v2373
          %v2375 = vlaneseq
          %v2376 = vshrl.u32 %v2375, 7
          %v2377 = vsub.s32 3, %v2376
          %v2378 = vrot.slane %v796, %v2377
          %v2379 = vlaneseq
          %v2380 = vshrl.u32 %v2379, 7
          %v2381 = vsub.s32 3, %v2380
          %v2382 = vrot.slane %v797, %v2381
          %v2383 = vlaneseq
          %v2384 = vshrl.u32 %v2383, 7
          %v2385 = vsub.s32 3, %v2384
          %v2386 = vrot.slane %v798, %v2385
          %v2387 = vlaneseq
          %v2388 = vshrl.u32 %v2387, 7
          %v2389 = vsub.s32 3, %v2388
          %v2390 = vrot.slane %v799, %v2389
          %v2391 = vlaneseq
          %v2392 = vshrl.u32 %v2391, 7
          %v2393 = vsub.s32 3, %v2392
          %v2394 = vrot.slane %v800, %v2393
          %v2395 = vlaneseq
          %v2396 = vshrl.u32 %v2395, 7
          %v2397 = vsub.s32 3, %v2396
          %v2398 = vrot.slane %v801, %v2397
          %v2399 = vlaneseq
          %v2400 = vshrl.u32 %v2399, 7
          %v2401 = vsub.s32 3, %v2400
          %v2402 = vrot.slane %v802, %v2401
          %v2403 = vadd.f32 %v2363, %v2374
          %v2404 = vadd.f32 %v2364, %v2378
          %v2405 = vadd.f32 %v2365, %v2382
          %v2406 = vadd.f32 %v2366, %v2386
          %v2407 = vadd.f32 %v2367, %v2390
          %v2408 = vadd.f32 %v2368, %v2394
          %v2409 = vadd.f32 %v2369, %v2398
          %v2410 = vadd.f32 %v2370, %v2402
          %v2411 = vmax.f32 %v2403, 0.0
          %v2412 = vmax.f32 %v2404, 0.0
          %v2413 = vmax.f32 %v2405, 0.0
          %v2414 = vmax.f32 %v2406, 0.0
          %v2415 = vmax.f32 %v2407, 0.0
          %v2416 = vmax.f32 %v2408, 0.0
          %v2417 = vmax.f32 %v2409, 0.0
          %v2418 = vmax.f32 %v2410, 0.0
          %v2419 = vpack.c.bf16 %v2411, %v2411
          %v2420 = vpack.c.bf16 %v2412, %v2412
          %v2421 = vpack.c.bf16 %v2413, %v2413
          %v2422 = vpack.c.bf16 %v2414, %v2414
          %v2423 = vpack.c.bf16 %v2415, %v2415
          %v2424 = vpack.c.bf16 %v2416, %v2416
          %v2425 = vpack.c.bf16 %v2417, %v2417
          %v2426 = vpack.c.bf16 %v2418, %v2418
          %v2427 = vld [vmem:[%s339] sm:$0xff]
          %v2428 = vld [vmem:[%s339 + $0x8] sm:$0xff]
          %v2429 = vld [vmem:[%s339 + $0x10] sm:$0xff]
          %v2430 = vld [vmem:[%s339 + $0x18] sm:$0xff]
          %v2431 = vld [vmem:[%s339 + $0x20] sm:$0xff]
          %v2432 = vld [vmem:[%s339 + $0x28] sm:$0xff]
          %v2433 = vld [vmem:[%s339 + $0x30] sm:$0xff]
          %v2434 = vld [vmem:[%s339 + $0x38] sm:$0xff]
          %v2435 = vld [vmem:[%s339 + $0x40] sm:$0xff]
          %v2436 = vld [vmem:[%s339 + $0x48] sm:$0xff]
          %v2437 = vld [vmem:[%s339 + $0x50] sm:$0xff]
          %v2438 = vld [vmem:[%s339 + $0x58] sm:$0xff]
          %v2439 = vld [vmem:[%s339 + $0x60] sm:$0xff]
          %v2440 = vld [vmem:[%s339 + $0x68] sm:$0xff]
          %v2441 = vld [vmem:[%s339 + $0x70] sm:$0xff]
          %v2442 = vld [vmem:[%s339 + $0x78] sm:$0xff]
          %v2443 = vld [vmem:[%s339 + $0x80] sm:$0xff]
          %v2444 = vld [vmem:[%s339 + $0x88] sm:$0xff]
          %v2445 = vld [vmem:[%s339 + $0x90] sm:$0xff]
          %v2446 = vld [vmem:[%s339 + $0x98] sm:$0xff]
          %v2447 = vld [vmem:[%s339 + $0xa0] sm:$0xff]
          %v2448 = vld [vmem:[%s339 + $0xa8] sm:$0xff]
          %v2449 = vld [vmem:[%s339 + $0xb0] sm:$0xff]
          %v2450 = vld [vmem:[%s339 + $0xb8] sm:$0xff]
          %v2451 = vld [vmem:[%s339 + $0xc0] sm:$0xff]
          %v2452 = vld [vmem:[%s339 + $0xc8] sm:$0xff]
          %v2453 = vld [vmem:[%s339 + $0xd0] sm:$0xff]
          %v2454 = vld [vmem:[%s339 + $0xd8] sm:$0xff]
          %v2455 = vld [vmem:[%s339 + $0xe0] sm:$0xff]
          %v2456 = vld [vmem:[%s339 + $0xe8] sm:$0xff]
          %v2457 = vld [vmem:[%s339 + $0xf0] sm:$0xff]
          %v2458 = vld [vmem:[%s339 + $0xf8] sm:$0xff]
          %v2459 = vunpack.c.l.s8.bf16 %v2427
          %v2460 = vunpack.c.h.s8.bf16 %v2427
          %v2461 = vunpack.c.l.s8.bf16 %v2428
          %v2462 = vunpack.c.h.s8.bf16 %v2428
          %v2463 = vunpack.c.l.s8.bf16 %v2429
          %v2464 = vunpack.c.h.s8.bf16 %v2429
          %v2465 = vunpack.c.l.s8.bf16 %v2430
          %v2466 = vunpack.c.h.s8.bf16 %v2430
          %v2467 = vunpack.c.l.s8.bf16 %v2431
          %v2468 = vunpack.c.h.s8.bf16 %v2431
          %v2469 = vunpack.c.l.s8.bf16 %v2432
          %v2470 = vunpack.c.h.s8.bf16 %v2432
          %v2471 = vunpack.c.l.s8.bf16 %v2433
          %v2472 = vunpack.c.h.s8.bf16 %v2433
          %v2473 = vunpack.c.l.s8.bf16 %v2434
          %v2474 = vunpack.c.h.s8.bf16 %v2434
          %v2475 = vunpack.c.l.s8.bf16 %v2435
          %v2476 = vunpack.c.h.s8.bf16 %v2435
          %v2477 = vunpack.c.l.s8.bf16 %v2436
          %v2478 = vunpack.c.h.s8.bf16 %v2436
          %v2479 = vunpack.c.l.s8.bf16 %v2437
          %v2480 = vunpack.c.h.s8.bf16 %v2437
          %v2481 = vunpack.c.l.s8.bf16 %v2438
          %v2482 = vunpack.c.h.s8.bf16 %v2438
          %v2483 = vunpack.c.l.s8.bf16 %v2439
          %v2484 = vunpack.c.h.s8.bf16 %v2439
          %v2485 = vunpack.c.l.s8.bf16 %v2440
          %v2486 = vunpack.c.h.s8.bf16 %v2440
          %v2487 = vunpack.c.l.s8.bf16 %v2441
          %v2488 = vunpack.c.h.s8.bf16 %v2441
          %v2489 = vunpack.c.l.s8.bf16 %v2442
          %v2490 = vunpack.c.h.s8.bf16 %v2442
          %v2491 = vunpack.c.l.s8.bf16 %v2443
          %v2492 = vunpack.c.h.s8.bf16 %v2443
          %v2493 = vunpack.c.l.s8.bf16 %v2444
          %v2494 = vunpack.c.h.s8.bf16 %v2444
          %v2495 = vunpack.c.l.s8.bf16 %v2445
          %v2496 = vunpack.c.h.s8.bf16 %v2445
          %v2497 = vunpack.c.l.s8.bf16 %v2446
          %v2498 = vunpack.c.h.s8.bf16 %v2446
          %v2499 = vunpack.c.l.s8.bf16 %v2447
          %v2500 = vunpack.c.h.s8.bf16 %v2447
          %v2501 = vunpack.c.l.s8.bf16 %v2448
          %v2502 = vunpack.c.h.s8.bf16 %v2448
          %v2503 = vunpack.c.l.s8.bf16 %v2449
          %v2504 = vunpack.c.h.s8.bf16 %v2449
          %v2505 = vunpack.c.l.s8.bf16 %v2450
          %v2506 = vunpack.c.h.s8.bf16 %v2450
          %v2507 = vunpack.c.l.s8.bf16 %v2451
          %v2508 = vunpack.c.h.s8.bf16 %v2451
          %v2509 = vunpack.c.l.s8.bf16 %v2452
          %v2510 = vunpack.c.h.s8.bf16 %v2452
          %v2511 = vunpack.c.l.s8.bf16 %v2453
          %v2512 = vunpack.c.h.s8.bf16 %v2453
          %v2513 = vunpack.c.l.s8.bf16 %v2454
          %v2514 = vunpack.c.h.s8.bf16 %v2454
          %v2515 = vunpack.c.l.s8.bf16 %v2455
          %v2516 = vunpack.c.h.s8.bf16 %v2455
          %v2517 = vunpack.c.l.s8.bf16 %v2456
          %v2518 = vunpack.c.h.s8.bf16 %v2456
          %v2519 = vunpack.c.l.s8.bf16 %v2457
          %v2520 = vunpack.c.h.s8.bf16 %v2457
          %v2521 = vunpack.c.l.s8.bf16 %v2458
          %v2522 = vunpack.c.h.s8.bf16 %v2458
          %2523 = vmatprep.subr.bf16.mxu0 0
          %2524 = vmatpush1.bf16.msra.mxu0 %v2466
          %2525 = vmatprep.subr.bf16.mxu0 0
          %2526 = vmatpush1.bf16.msra.mxu0 %v2465
          %2527 = vmatprep.subr.bf16.mxu0 0
          %2528 = vmatpush1.bf16.msra.mxu0 %v2464
          %2529 = vmatprep.subr.bf16.mxu0 0
          %2530 = vmatpush1.bf16.msra.mxu0 %v2463
          %2531 = vmatprep.subr.bf16.mxu0 0
          %2532 = vmatpush1.bf16.msra.mxu0 %v2462
          %2533 = vmatprep.subr.bf16.mxu0 0
          %2534 = vmatpush1.bf16.msra.mxu0 %v2461
          %2535 = vmatprep.subr.bf16.mxu0 0
          %2536 = vmatpush1.bf16.msra.mxu0 %v2460
          %2537 = vmatprep.subr.bf16.mxu0 0
          %2538 = vmatpush1.bf16.msra.mxu0 %v2459
          %2539 = vmatprep.subr.bf16.mxu0 0
          %2540 = vmatpush2.bf16.msra.mxu0 %v2474
          %2541 = vmatprep.subr.bf16.mxu0 0
          %2542 = vmatpush2.bf16.msra.mxu0 %v2473
          %2543 = vmatprep.subr.bf16.mxu0 0
          %2544 = vmatpush2.bf16.msra.mxu0 %v2472
          %2545 = vmatprep.subr.bf16.mxu0 0
          %2546 = vmatpush2.bf16.msra.mxu0 %v2471
          %2547 = vmatprep.subr.bf16.mxu0 0
          %2548 = vmatpush2.bf16.msra.mxu0 %v2470
          %2549 = vmatprep.subr.bf16.mxu0 0
          %2550 = vmatpush2.bf16.msra.mxu0 %v2469
          %2551 = vmatprep.subr.bf16.mxu0 0
          %2552 = vmatpush2.bf16.msra.mxu0 %v2468
          %2553 = vmatprep.subr.bf16.mxu0 0
          %2554 = vmatpush2.bf16.msra.mxu0 %v2467
          %2555 = vmatprep.mubr.bf16.mxu0 %v2420
          %2556 = vmatmul.mubr.bf16.gmra.mxu0 %v2419
          %v2557 = vpop.f32.mrf.mxu0
          %v2558 = vadd.f32 0.0, %v2557
          %v2559 = vpop.f32.mrf.mxu0
          %v2560 = vpop.f32.mrf.mxu0
          %v2561 = vpop.f32.mrf.mxu0
          %2562 = vdwg.mxu0
          %2563 = vmatprep.subr.bf16.mxu0 0
          %2564 = vmatpush1.bf16.msra.mxu0 %v2482
          %2565 = vmatprep.subr.bf16.mxu0 0
          %2566 = vmatpush1.bf16.msra.mxu0 %v2481
          %2567 = vmatprep.subr.bf16.mxu0 0
          %2568 = vmatpush1.bf16.msra.mxu0 %v2480
          %2569 = vmatprep.subr.bf16.mxu0 0
          %2570 = vmatpush1.bf16.msra.mxu0 %v2479
          %2571 = vmatprep.subr.bf16.mxu0 0
          %2572 = vmatpush1.bf16.msra.mxu0 %v2478
          %2573 = vmatprep.subr.bf16.mxu0 0
          %2574 = vmatpush1.bf16.msra.mxu0 %v2477
          %2575 = vmatprep.subr.bf16.mxu0 0
          %2576 = vmatpush1.bf16.msra.mxu0 %v2476
          %2577 = vmatprep.subr.bf16.mxu0 0
          %2578 = vmatpush1.bf16.msra.mxu0 %v2475
          %2579 = vmatprep.subr.bf16.mxu0 0
          %2580 = vmatpush2.bf16.msra.mxu0 %v2490
          %2581 = vmatprep.subr.bf16.mxu0 0
          %2582 = vmatpush2.bf16.msra.mxu0 %v2489
          %2583 = vmatprep.subr.bf16.mxu0 0
          %2584 = vmatpush2.bf16.msra.mxu0 %v2488
          %2585 = vmatprep.subr.bf16.mxu0 0
          %2586 = vmatpush2.bf16.msra.mxu0 %v2487
          %2587 = vmatprep.subr.bf16.mxu0 0
          %2588 = vmatpush2.bf16.msra.mxu0 %v2486
          %2589 = vmatprep.subr.bf16.mxu0 0
          %2590 = vmatpush2.bf16.msra.mxu0 %v2485
          %2591 = vmatprep.subr.bf16.mxu0 0
          %2592 = vmatpush2.bf16.msra.mxu0 %v2484
          %2593 = vmatprep.subr.bf16.mxu0 0
          %2594 = vmatpush2.bf16.msra.mxu0 %v2483
          %2595 = vmatprep.mubr.bf16.mxu0 %v2422
          %2596 = vmatmul.mubr.bf16.gmra.mxu0 %v2421
          %v2597 = vpop.f32.mrf.mxu0
          %v2598 = vadd.f32 %v2558, %v2597
          %v2599 = vpop.f32.mrf.mxu0
          %v2600 = vpop.f32.mrf.mxu0
          %v2601 = vpop.f32.mrf.mxu0
          %2602 = vdwg.mxu0
          %2603 = vmatprep.subr.bf16.mxu0 0
          %2604 = vmatpush1.bf16.msra.mxu0 %v2498
          %2605 = vmatprep.subr.bf16.mxu0 0
          %2606 = vmatpush1.bf16.msra.mxu0 %v2497
          %2607 = vmatprep.subr.bf16.mxu0 0
          %2608 = vmatpush1.bf16.msra.mxu0 %v2496
          %2609 = vmatprep.subr.bf16.mxu0 0
          %2610 = vmatpush1.bf16.msra.mxu0 %v2495
          %2611 = vmatprep.subr.bf16.mxu0 0
          %2612 = vmatpush1.bf16.msra.mxu0 %v2494
          %2613 = vmatprep.subr.bf16.mxu0 0
          %2614 = vmatpush1.bf16.msra.mxu0 %v2493
          %2615 = vmatprep.subr.bf16.mxu0 0
          %2616 = vmatpush1.bf16.msra.mxu0 %v2492
          %2617 = vmatprep.subr.bf16.mxu0 0
          %2618 = vmatpush1.bf16.msra.mxu0 %v2491
          %2619 = vmatprep.subr.bf16.mxu0 0
          %2620 = vmatpush2.bf16.msra.mxu0 %v2506
          %2621 = vmatprep.subr.bf16.mxu0 0
          %2622 = vmatpush2.bf16.msra.mxu0 %v2505
          %2623 = vmatprep.subr.bf16.mxu0 0
          %2624 = vmatpush2.bf16.msra.mxu0 %v2504
          %2625 = vmatprep.subr.bf16.mxu0 0
          %2626 = vmatpush2.bf16.msra.mxu0 %v2503
          %2627 = vmatprep.subr.bf16.mxu0 0
          %2628 = vmatpush2.bf16.msra.mxu0 %v2502
          %2629 = vmatprep.subr.bf16.mxu0 0
          %2630 = vmatpush2.bf16.msra.mxu0 %v2501
          %2631 = vmatprep.subr.bf16.mxu0 0
          %2632 = vmatpush2.bf16.msra.mxu0 %v2500
          %2633 = vmatprep.subr.bf16.mxu0 0
          %2634 = vmatpush2.bf16.msra.mxu0 %v2499
          %2635 = vmatprep.mubr.bf16.mxu0 %v2424
          %2636 = vmatmul.mubr.bf16.gmra.mxu0 %v2423
          %v2637 = vpop.f32.mrf.mxu0
          %v2638 = vadd.f32 %v2598, %v2637
          %v2639 = vpop.f32.mrf.mxu0
          %v2640 = vpop.f32.mrf.mxu0
          %v2641 = vpop.f32.mrf.mxu0
          %2642 = vdwg.mxu0
          %2643 = vmatprep.subr.bf16.mxu0 0
          %2644 = vmatpush1.bf16.msra.mxu0 %v2514
          %2645 = vmatprep.subr.bf16.mxu0 0
          %2646 = vmatpush1.bf16.msra.mxu0 %v2513
          %2647 = vmatprep.subr.bf16.mxu0 0
          %2648 = vmatpush1.bf16.msra.mxu0 %v2512
          %2649 = vmatprep.subr.bf16.mxu0 0
          %2650 = vmatpush1.bf16.msra.mxu0 %v2511
          %2651 = vmatprep.subr.bf16.mxu0 0
          %2652 = vmatpush1.bf16.msra.mxu0 %v2510
          %2653 = vmatprep.subr.bf16.mxu0 0
          %2654 = vmatpush1.bf16.msra.mxu0 %v2509
          %2655 = vmatprep.subr.bf16.mxu0 0
          %2656 = vmatpush1.bf16.msra.mxu0 %v2508
          %2657 = vmatprep.subr.bf16.mxu0 0
          %2658 = vmatpush1.bf16.msra.mxu0 %v2507
          %2659 = vmatprep.subr.bf16.mxu0 0
          %2660 = vmatpush2.bf16.msra.mxu0 %v2522
          %2661 = vmatprep.subr.bf16.mxu0 0
          %2662 = vmatpush2.bf16.msra.mxu0 %v2521
          %2663 = vmatprep.subr.bf16.mxu0 0
          %2664 = vmatpush2.bf16.msra.mxu0 %v2520
          %2665 = vmatprep.subr.bf16.mxu0 0
          %2666 = vmatpush2.bf16.msra.mxu0 %v2519
          %2667 = vmatprep.subr.bf16.mxu0 0
          %2668 = vmatpush2.bf16.msra.mxu0 %v2518
          %2669 = vmatprep.subr.bf16.mxu0 0
          %2670 = vmatpush2.bf16.msra.mxu0 %v2517
          %2671 = vmatprep.subr.bf16.mxu0 0
          %2672 = vmatpush2.bf16.msra.mxu0 %v2516
          %2673 = vmatprep.subr.bf16.mxu0 0
          %2674 = vmatpush2.bf16.msra.mxu0 %v2515
          %2675 = vmatprep.mubr.bf16.mxu0 %v2426
          %2676 = vmatmul.mubr.bf16.gmra.mxu0 %v2425
          %v2677 = vpop.f32.mrf.mxu0
          %v2678 = vadd.f32 %v2638, %v2677
          %v2679 = vpop.f32.mrf.mxu0
          %v2680 = vpop.f32.mrf.mxu0
          %v2681 = vpop.f32.mrf.mxu0
          %2682 = vdwg.mxu0
          %v2683 = vlaneseq
          %v2684 = vshrl.u32 %v2683, 7
          %v2685 = vsub.s32 4, %v2684
          %v2686 = vrot.slane %v795, %v2685
          %v2687 = vmul.f32 %v2678, %v2686
          %v2688 = vlaneseq
          %v2689 = vshrl.u32 %v2688, 7
          %v2690 = vsub.s32 5, %v2689
          %v2691 = vrot.slane %v795, %v2690
          %v2692 = vadd.f32 %v2687, %v2691
          %2693 = vst [vmem:[%s394] sm:$0xff] %v2692
        $region68: #{classify_forward.1} parent=39 // pred_fallthru
          _
        %p2694 = scmp.lt.s32.totalorder %s27, 1
        %s2695 = scalar_select %p2694, %s27, 1
        %s2696 = smul.addr %s2695, 8
        %s2697 = scalar_lea.vmem %s5, %s2696
        // Predicated region
        $region69: #{classify_forward.1} parent=39 // pred_check
          %p2698 = pneg %p185
        $region70: #{classify_forward.1} parent=39 // pred_check_branch
          %2700 = sbr.rel (%p2698) target = $region72
        $region71: #{classify_forward.1} parent=39 // pred_region
          _
        $region72: #{classify_forward.1} parent=39 // pred_fallthru
          _
      $region40: #{classify_forward.1} parent=5 // pred_fallthru
        _
      %p2701 = scmp.le.s32.totalorder 2, %s18
      // Predicated region
      $region73: #{classify_forward.1} parent=5 // pred_check
        %p2702 = pneg %p2701
      $region74: #{classify_forward.1} parent=5 // pred_check_branch
        %2704 = sbr.rel (%p2702) target = $region76
      $region75: #{classify_forward.1} parent=5 // pred_region
        %s2705 = ssub.s32 %s18, 2
        // Predicated region
        $region77: #{classify_forward.1} parent=75 // pred_check
          %p2706 = pneg %p191
        $region78: #{classify_forward.1} parent=75 // pred_check_branch
          %2708 = sbr.rel (%p2706) target = $region80
        $region79: #{classify_forward.1} parent=75 // pred_region
          %p2709 = scmp.lt.s32.totalorder %s29, 1
          %s2710 = scalar_select %p2709, %s29, 1
          %s2711 = smul.addr %s2710, 8
          %s2712 = scalar_lea.vmem %s5, %s2711
        $region80: #{classify_forward.1} parent=75 // pred_fallthru
          _
      $region76: #{classify_forward.1} parent=5 // pred_fallthru
        _
    $region6: #{classify_forward.1} parent=1 // loop_footer
      %s22 = sadd.s32 1, %s18
    $region7: #{classify_forward.1} parent=1 // loop_footer_branch
      %17 = sbr.rel target = $region3
    $region8: #{classify_forward.1} parent=1 // loop_exit
      _
    %2713 = vsyncpa [#allocation4], 1
    %s2714 = scalar_lea.sflag [#allocation4], 1
    %2715 = vsyncpa %s2714, 1
    %2716 = vsyncpa [#allocation6], 1
    %s2717 = scalar_lea.sflag [#allocation6], 1
    %2718 = vsyncpa %s2717, 1
    %2719 = vsyncpa [#allocation9], 1
    %s2720 = scalar_lea.sflag [#allocation9], 1
    %2721 = vsyncpa %s2720, 1

</llo_original>
